<compile_context>
chip_gen: v5e
topology: v5e:2x2
jax: 0.10.0
libtpu: 0.0.40
codegen_flags: <defaults>
</compile_context>

<pallas_src>
import jax
import jax.numpy as jnp
from jax.experimental import pallas as pl
from jax.experimental.pallas import tpu as pltpu


def _round_up(x, m):
    return (x + m - 1) // m * m


def _make_kernel(H, W, Bblk, Cin, Cmid, Cout, C8in, C8mid):
    HW = H * W
    P = W + 1              # halo actually required per side of a flat image
    PAD = 128              # lane-dense halo strip (>= P), multiple of 128
    WTOT = PAD + HW + PAD  # zero-extended per-image flat width
    N = Bblk * HW          # matmul N (lanes) per grid step

    def conv3x3_bn_relu(src_ref, pat_ref, w_ref, s_ref, b_ref,
                        mask_l, mask_r, c8):
        """src_ref: (Bblk, c8, WTOT) f32 zero-extended inputs (row stride W).
        pat_ref: (>=9*c8, N) bf16 im2col scratch (fully overwritten here).
        w_ref:  (c_out, 9*c8) bf16 packed weights (pad K-columns are zero).
        s_ref/b_ref: (c_out, 1) f32 folded BN affine."""
        for dy in range(3):
            for dx in range(3):
                t = dy * 3 + dx
                start = PAD - P + dy * W + dx          # static lane offset
                for b in range(Bblk):
                    sl = src_ref[b, :, start:start + HW]     # (c8, HW) f32
                    # Emulate the left/right zero padding of the conv: the
                    # dx=0 (dx=2) tap is invalid at output column 0 (W-1).
                    if dx == 0:
                        sl = sl * mask_l
                    elif dx == 2:
                        sl = sl * mask_r
                    pat_ref[t * c8:(t + 1) * c8, b * HW:(b + 1) * HW] = (
                        sl.astype(jnp.bfloat16))
        # Single lane-dense bf16 matmul with f32 accumulation.
        acc = jnp.dot(w_ref[...], pat_ref[0:9 * c8, :],
                      preferred_element_type=jnp.float32)    # (c_out, N) f32
        # f32 epilogue: folded BN (scale, bias) + ReLU.
        return jnp.maximum(acc * s_ref[...] + b_ref[...], 0.0)

    def kernel(x_ref, cm_ref, w1_ref, s1_ref, b1_ref, w2_ref, s2_ref, b2_ref,
               o_ref, xp_ref, mp_ref, pat_ref):
        mask_l = cm_ref[0:1, :]   # (1, HW): 1.0 where output column x >= 1
        mask_r = cm_ref[1:2, :]   # (1, HW): 1.0 where output column x <= W-2

        # ---------------- conv1 (3x3, pad=1) + folded BN + ReLU --------------
        # Zero the channel pad rows (so the bf16 pat never holds garbage) and
        # the 128-lane halo strips; then drop the images into the interior.
        if C8in > Cin:
            xp_ref[:, Cin:C8in, :] = jnp.zeros(
                (Bblk, C8in - Cin, WTOT), jnp.float32)
        xp_ref[:, :, 0:PAD] = jnp.zeros((Bblk, C8in, PAD), jnp.float32)
        xp_ref[:, :, PAD + HW:WTOT] = jnp.zeros((Bblk, C8in, PAD), jnp.float32)
        xp_ref[:, 0:Cin, PAD:PAD + HW] = x_ref[...].astype(jnp.float32)

        y1 = conv3x3_bn_relu(xp_ref, pat_ref, w1_ref, s1_ref, b1_ref,
                             mask_l, mask_r, C8in)           # (Cmid, N) f32

        # ---------------- conv2 (3x3, pad=1) + folded BN + ReLU --------------
        if C8mid > Cmid:
            mp_ref[:, Cmid:C8mid, :] = jnp.zeros(
                (Bblk, C8mid - Cmid, WTOT), jnp.float32)
        mp_ref[:, :, 0:PAD] = jnp.zeros((Bblk, C8mid, PAD), jnp.float32)
        mp_ref[:, :, PAD + HW:WTOT] = jnp.zeros((Bblk, C8mid, PAD), jnp.float32)
        for b in range(Bblk):
            mp_ref[b, 0:Cmid, PAD:PAD + HW] = y1[:, b * HW:(b + 1) * HW]

        y2 = conv3x3_bn_relu(mp_ref, pat_ref, w2_ref, s2_ref, b2_ref,
                             mask_l, mask_r, C8mid)          # (Cout, N) f32

        for b in range(Bblk):
            o_ref[b, :, :] = y2[:, b * HW:(b + 1) * HW].astype(o_ref.dtype)

    return kernel, WTOT


def _pack_weights(w_hwio, c_in, c8_in, c_out):
    """HWIO (3,3,c_in,c_out) -> bf16 (c_out, 9*c8_in); contraction index
    k = (dy*3+dx)*c8_in + ci, with zero columns for ci >= c_in."""
    w = w_hwio.astype(jnp.float32).reshape(9, c_in, c_out)
    if c8_in > c_in:
        w = jnp.pad(w, ((0, 0), (0, c8_in - c_in), (0, 0)))
    return w.reshape(9 * c8_in, c_out).T.astype(jnp.bfloat16)


def double_conv_pallas(x_nchw, w1_hwio, w2_hwio, scale1, bias1, scale2, bias2,
                       *, block_b=4):
    """x_nchw: (B, Cin, H, W) f32.  w1_hwio: (3,3,Cin,Cmid), w2_hwio: (3,3,Cmid,Cout).
    scale/bias: per-channel folded (eval-mode BN + conv-bias) affine terms."""
    B, Cin, H, W = x_nchw.shape
    Cmid = w1_hwio.shape[-1]
    Cout = w2_hwio.shape[-1]
    HW = H * W
    C8in = _round_up(Cin, 8)
    C8mid = _round_up(Cmid, 8)

    Bblk = max(1, min(block_b, B))
    Bpad = _round_up(B, Bblk)

    # Free (bitcast) reshape: NCHW is row-major, flattening (H,W) moves no data.
    x_flat = x_nchw.reshape(B, Cin, HW).astype(jnp.float32)
    if Bpad != B:
        x_flat = jnp.concatenate(
            [x_flat, jnp.zeros((Bpad - B, Cin, HW), jnp.float32)], axis=0)

    w1_k = _pack_weights(w1_hwio, Cin, C8in, Cmid)    # (Cmid, 9*C8in) bf16
    w2_k = _pack_weights(w2_hwio, Cmid, C8mid, Cout)  # (Cout, 9*C8mid) bf16

    s1 = scale1.reshape(Cmid, 1).astype(jnp.float32)
    b1 = bias1.reshape(Cmid, 1).astype(jnp.float32)
    s2 = scale2.reshape(Cout, 1).astype(jnp.float32)
    b2 = bias2.reshape(Cout, 1).astype(jnp.float32)

    # Per-output-column validity masks for the dx=0 / dx=2 taps (SAME padding),
    # broadcast across sublanes inside the kernel. f32 on purpose (v5e VPU).
    col = jnp.arange(HW, dtype=jnp.int32) % W
    colmask = jnp.stack([(col != 0).astype(jnp.float32),
                         (col != (W - 1)).astype(jnp.float32)], axis=0)

    kernel, WTOT = _make_kernel(H, W, Bblk, Cin, Cmid, Cout, C8in, C8mid)
    C8max = max(C8in, C8mid)

    out_flat = pl.pallas_call(
        kernel,
        out_shape=jax.ShapeDtypeStruct((Bpad, Cout, HW), jnp.float32),
        grid_spec=pltpu.PrefetchScalarGridSpec(
            num_scalar_prefetch=0,
            grid=(Bpad // Bblk,),
            in_specs=[
                pl.BlockSpec((Bblk, Cin, HW), lambda i: (i, 0, 0)),
                pl.BlockSpec((2, HW), lambda i: (0, 0)),
                pl.BlockSpec((Cmid, 9 * C8in), lambda i: (0, 0)),
                pl.BlockSpec((Cmid, 1), lambda i: (0, 0)),
                pl.BlockSpec((Cmid, 1), lambda i: (0, 0)),
                pl.BlockSpec((Cout, 9 * C8mid), lambda i: (0, 0)),
                pl.BlockSpec((Cout, 1), lambda i: (0, 0)),
                pl.BlockSpec((Cout, 1), lambda i: (0, 0)),
            ],
            out_specs=pl.BlockSpec((Bblk, Cout, HW), lambda i: (i, 0, 0)),
            scratch_shapes=[
                pltpu.VMEM((Bblk, C8in, WTOT), jnp.float32),    # zero-ext x
                pltpu.VMEM((Bblk, C8mid, WTOT), jnp.float32),   # zero-ext mid
                pltpu.VMEM((9 * C8max, Bblk * HW), jnp.bfloat16),  # im2col (reused)
            ],
        ),
        compiler_params=pltpu.CompilerParams(
            dimension_semantics=("parallel",),
            # Working set is well under 1 MiB at these sizes; explicit limit is
            # safely below physical VMEM on v5e/v6e (128 MiB) and v7x (64 MiB).
            vmem_limit_bytes=32 * 1024 * 1024,
        ),
    )(x_flat, colmask, w1_k, s1, b1, w2_k, s2, b2)

    # Drop batch padding and bitcast-reshape back to NCHW.
    return out_flat[:B].reshape(B, Cout, H, W)


def _fold_bn(conv_bias, gamma, beta, running_mean, running_var, eps=1e-5):
    scale = gamma / jnp.sqrt(running_var + eps)
    bias = (conv_bias - running_mean) * scale + beta
    return scale, bias


def _reference(x_nchw, w1_oihw, cb1, g1, be1, m1, v1,
               w2_oihw, cb2, g2, be2, m2, v2, eps=1e-5):
    def block(x, w, cb, g, be, m, v):
        y = jax.lax.conv_general_dilated(
            x, w, window_strides=(1, 1), padding="SAME",
            dimension_numbers=("NCHW", "OIHW", "NCHW"))
        y = y + cb[None, :, None, None]
        y = g[None, :, None, None] * (y - m[None, :, None, None]) / \
            jnp.sqrt(v[None, :, None, None] + eps) + be[None, :, None, None]
        return jnp.maximum(y, 0.0)

    y = block(x_nchw, w1_oihw, cb1, g1, be1, m1, v1)
    return block(y, w2_oihw, cb2, g2, be2, m2, v2)


if __name__ == "__main__":
    # double_conv(in_ch=4, out_ch=8); small batch, 4 images per grid step
    # (N = 4*16*16 = 1024 lanes per MXU matmul, 2 grid steps).
    B, Cin, H, W = 8, 4, 16, 16
    Cmid = Cout = 8

    key = jax.random.PRNGKey(0)
    ks = jax.random.split(key, 13)

    x = jax.random.normal(ks[0], (B, Cin, H, W), jnp.float32)

    # Deterministic synthetic parameters (PyTorch shapes: OIHW conv weights).
    w1_oihw = 0.1 * jax.random.normal(ks[1], (Cmid, Cin, 3, 3), jnp.float32)
    cb1 = 0.1 * jax.random.normal(ks[2], (Cmid,), jnp.float32)
    g1 = 1.0 + 0.1 * jax.random.normal(ks[3], (Cmid,), jnp.float32)
    be1 = 0.1 * jax.random.normal(ks[4], (Cmid,), jnp.float32)
    m1 = 0.1 * jax.random.normal(ks[5], (Cmid,), jnp.float32)
    v1 = 0.5 + jnp.abs(jax.random.normal(ks[6], (Cmid,), jnp.float32))

    w2_oihw = 0.1 * jax.random.normal(ks[7], (Cout, Cmid, 3, 3), jnp.float32)
    cb2 = 0.1 * jax.random.normal(ks[8], (Cout,), jnp.float32)
    g2 = 1.0 + 0.1 * jax.random.normal(ks[9], (Cout,), jnp.float32)
    be2 = 0.1 * jax.random.normal(ks[10], (Cout,), jnp.float32)
    m2 = 0.1 * jax.random.normal(ks[11], (Cout,), jnp.float32)
    v2 = 0.5 + jnp.abs(jax.random.normal(ks[12], (Cout,), jnp.float32))

    # OIHW -> HWIO for the kernel, and fold BN (eval mode) + conv bias.
    w1_hwio = jnp.transpose(w1_oihw, (2, 3, 1, 0))
    w2_hwio = jnp.transpose(w2_oihw, (2, 3, 1, 0))
    s1, b1 = _fold_bn(cb1, g1, be1, m1, v1)
    s2, b2 = _fold_bn(cb2, g2, be2, m2, v2)

    out = double_conv_pallas(x, w1_hwio, w2_hwio, s1, b1, s2, b2, block_b=4)
    out = jax.block_until_ready(out)

    ref = _reference(x, w1_oihw, cb1, g1, be1, m1, v1,
                     w2_oihw, cb2, g2, be2, m2, v2)
    ref = jax.block_until_ready(ref)

    assert out.shape == (B, Cout, H, W), out.shape
    # Tolerance accounts for bf16 MXU operands (f32 accumulation + epilogue).
    assert jnp.allclose(out, ref, rtol=2e-2, atol=2e-2), \
        float(jnp.max(jnp.abs(out - ref)))

    print("KERNEL_OK")
</pallas_src>

<mosaic_0001>
module attributes {stable_mosaic.version = 11 : i64} {
  func.func @kernel(%arg0: i32, %arg1: memref<4x4x256xf32, #tpu.memory_space<vmem>>, %arg2: memref<2x256xf32, #tpu.memory_space<vmem>>, %arg3: memref<8x72xbf16, #tpu.memory_space<vmem>>, %arg4: memref<8x1xf32, #tpu.memory_space<vmem>>, %arg5: memref<8x1xf32, #tpu.memory_space<vmem>>, %arg6: memref<8x72xbf16, #tpu.memory_space<vmem>>, %arg7: memref<8x1xf32, #tpu.memory_space<vmem>>, %arg8: memref<8x1xf32, #tpu.memory_space<vmem>>, %arg9: memref<4x8x256xf32, #tpu.memory_space<vmem>>, %arg10: memref<4x8x512xf32, #tpu.memory_space<vmem>>, %arg11: memref<4x8x512xf32, #tpu.memory_space<vmem>>, %arg12: memref<72x1024xbf16, #tpu.memory_space<vmem>>) attributes {dimension_semantics = [#tpu.dimension_semantics<parallel>], iteration_bounds = array<i64: 2>, scalar_prefetch = 0 : i64, scratch_operands = 3 : i64, tpu.core_type = #tpu.core_type<tc>, window_params = [{transform_indices = @transform_0, window_bounds = array<i64: 4, 4, 256>}, {pipeline_mode = #tpu.pipeline_mode<synchronous>, transform_indices = @transform_1, window_bounds = array<i64: 2, 256>}, {pipeline_mode = #tpu.pipeline_mode<synchronous>, transform_indices = @transform_2, window_bounds = array<i64: 8, 72>}, {pipeline_mode = #tpu.pipeline_mode<synchronous>, transform_indices = @transform_3, window_bounds = array<i64: 8, 1>}, {pipeline_mode = #tpu.pipeline_mode<synchronous>, transform_indices = @transform_4, window_bounds = array<i64: 8, 1>}, {pipeline_mode = #tpu.pipeline_mode<synchronous>, transform_indices = @transform_5, window_bounds = array<i64: 8, 72>}, {pipeline_mode = #tpu.pipeline_mode<synchronous>, transform_indices = @transform_6, window_bounds = array<i64: 8, 1>}, {pipeline_mode = #tpu.pipeline_mode<synchronous>, transform_indices = @transform_7, window_bounds = array<i64: 8, 1>}, {transform_indices = @transform_8, window_bounds = array<i64: 4, 8, 256>}]} {
    %c0 = arith.constant 0 : index
    %c0_0 = arith.constant 0 : index
    %0 = vector.load %arg2[%c0, %c0_0] : memref<2x256xf32, #tpu.memory_space<vmem>>, vector<1x256xf32>
    %c1 = arith.constant 1 : index
    %c0_1 = arith.constant 0 : index
    %1 = vector.load %arg2[%c1, %c0_1] : memref<2x256xf32, #tpu.memory_space<vmem>>, vector<1x256xf32>
    %cst = arith.constant 0.000000e+00 : f32
    %2 = vector.broadcast %cst : f32 to vector<4x4x512xf32>
    %c0_2 = arith.constant 0 : index
    %c4 = arith.constant 4 : index
    %c0_3 = arith.constant 0 : index
    %3 = vector.load %arg10[%c0_2, %c4, %c0_3] : memref<4x8x512xf32, #tpu.memory_space<vmem>>, vector<4x4x512xf32>
    tpu.vector_store %arg10[%c0_2, %c4, %c0_3], %2 {strides = array<i32>} : memref<4x8x512xf32, #tpu.memory_space<vmem>>, vector<4x4x512xf32>,
    %cst_4 = arith.constant 0.000000e+00 : f32
    %4 = vector.broadcast %cst_4 : f32 to vector<4x8x128xf32>
    %c0_5 = arith.constant 0 : index
    %c0_6 = arith.constant 0 : index
    %c0_7 = arith.constant 0 : index
    %5 = vector.load %arg10[%c0_5, %c0_6, %c0_7] : memref<4x8x512xf32, #tpu.memory_space<vmem>>, vector<4x8x128xf32>
    tpu.vector_store %arg10[%c0_5, %c0_6, %c0_7], %4 {strides = array<i32>} : memref<4x8x512xf32, #tpu.memory_space<vmem>>, vector<4x8x128xf32>,
    %cst_8 = arith.constant 0.000000e+00 : f32
    %6 = vector.broadcast %cst_8 : f32 to vector<4x8x128xf32>
    %c0_9 = arith.constant 0 : index
    %c0_10 = arith.constant 0 : index
    %c384 = arith.constant 384 : index
    %7 = vector.load %arg10[%c0_9, %c0_10, %c384] : memref<4x8x512xf32, #tpu.memory_space<vmem>>, vector<4x8x128xf32>
    tpu.vector_store %arg10[%c0_9, %c0_10, %c384], %6 {strides = array<i32>} : memref<4x8x512xf32, #tpu.memory_space<vmem>>, vector<4x8x128xf32>,
    %c0_11 = arith.constant 0 : index
    %c0_12 = arith.constant 0 : index
    %c0_13 = arith.constant 0 : index
    %8 = vector.load %arg1[%c0_11, %c0_12, %c0_13] : memref<4x4x256xf32, #tpu.memory_space<vmem>>, vector<4x4x256xf32>
    %c0_14 = arith.constant 0 : index
    %c0_15 = arith.constant 0 : index
    %c128 = arith.constant 128 : index
    %9 = vector.load %arg10[%c0_14, %c0_15, %c128] : memref<4x8x512xf32, #tpu.memory_space<vmem>>, vector<4x4x256xf32>
    tpu.vector_store %arg10[%c0_14, %c0_15, %c128], %8 {strides = array<i32>} : memref<4x8x512xf32, #tpu.memory_space<vmem>>, vector<4x4x256xf32>,
    %c0_16 = arith.constant 0 : index
    %c0_17 = arith.constant 0 : index
    %c111 = arith.constant 111 : index
    %10 = vector.load %arg10[%c0_16, %c0_17, %c111] : memref<4x8x512xf32, #tpu.memory_space<vmem>>, vector<1x8x256xf32>
    %11 = vector.shape_cast %10 : vector<1x8x256xf32> to vector<8x256xf32>
    %12 = vector.broadcast %0 : vector<1x256xf32> to vector<8x256xf32>
    %13 = arith.mulf %11, %12 : vector<8x256xf32>
    %14 = arith.truncf %13 : vector<8x256xf32> to vector<8x256xbf16>
    %c0_18 = arith.constant 0 : index
    %c0_19 = arith.constant 0 : index
    %15 = vector.load %arg12[%c0_18, %c0_19] : memref<72x1024xbf16, #tpu.memory_space<vmem>>, vector<8x256xbf16>
    tpu.vector_store %arg12[%c0_18, %c0_19], %14 {strides = array<i32>} : memref<72x1024xbf16, #tpu.memory_space<vmem>>, vector<8x256xbf16>,
    %c1_20 = arith.constant 1 : index
    %c0_21 = arith.constant 0 : index
    %c111_22 = arith.constant 111 : index
    %16 = vector.load %arg10[%c1_20, %c0_21, %c111_22] : memref<4x8x512xf32, #tpu.memory_space<vmem>>, vector<1x8x256xf32>
    %17 = vector.shape_cast %16 : vector<1x8x256xf32> to vector<8x256xf32>
    %18 = vector.broadcast %0 : vector<1x256xf32> to vector<8x256xf32>
    %19 = arith.mulf %17, %18 : vector<8x256xf32>
    %20 = arith.truncf %19 : vector<8x256xf32> to vector<8x256xbf16>
    %c0_23 = arith.constant 0 : index
    %c256 = arith.constant 256 : index
    %21 = vector.load %arg12[%c0_23, %c256] : memref<72x1024xbf16, #tpu.memory_space<vmem>>, vector<8x256xbf16>
    tpu.vector_store %arg12[%c0_23, %c256], %20 {strides = array<i32>} : memref<72x1024xbf16, #tpu.memory_space<vmem>>, vector<8x256xbf16>,
    %c2 = arith.constant 2 : index
    %c0_24 = arith.constant 0 : index
    %c111_25 = arith.constant 111 : index
    %22 = vector.load %arg10[%c2, %c0_24, %c111_25] : memref<4x8x512xf32, #tpu.memory_space<vmem>>, vector<1x8x256xf32>
    %23 = vector.shape_cast %22 : vector<1x8x256xf32> to vector<8x256xf32>
    %24 = vector.broadcast %0 : vector<1x256xf32> to vector<8x256xf32>
    %25 = arith.mulf %23, %24 : vector<8x256xf32>
    %26 = arith.truncf %25 : vector<8x256xf32> to vector<8x256xbf16>
    %c0_26 = arith.constant 0 : index
    %c512 = arith.constant 512 : index
    %27 = vector.load %arg12[%c0_26, %c512] : memref<72x1024xbf16, #tpu.memory_space<vmem>>, vector<8x256xbf16>
    tpu.vector_store %arg12[%c0_26, %c512], %26 {strides = array<i32>} : memref<72x1024xbf16, #tpu.memory_space<vmem>>, vector<8x256xbf16>,
    %c3 = arith.constant 3 : index
    %c0_27 = arith.constant 0 : index
    %c111_28 = arith.constant 111 : index
    %28 = vector.load %arg10[%c3, %c0_27, %c111_28] : memref<4x8x512xf32, #tpu.memory_space<vmem>>, vector<1x8x256xf32>
    %29 = vector.shape_cast %28 : vector<1x8x256xf32> to vector<8x256xf32>
    %30 = vector.broadcast %0 : vector<1x256xf32> to vector<8x256xf32>
    %31 = arith.mulf %29, %30 : vector<8x256xf32>
    %32 = arith.truncf %31 : vector<8x256xf32> to vector<8x256xbf16>
    %c0_29 = arith.constant 0 : index
    %c768 = arith.constant 768 : index
    %33 = vector.load %arg12[%c0_29, %c768] : memref<72x1024xbf16, #tpu.memory_space<vmem>>, vector<8x256xbf16>
    tpu.vector_store %arg12[%c0_29, %c768], %32 {strides = array<i32>} : memref<72x1024xbf16, #tpu.memory_space<vmem>>, vector<8x256xbf16>,
    %c0_30 = arith.constant 0 : index
    %c0_31 = arith.constant 0 : index
    %c112 = arith.constant 112 : index
    %34 = vector.load %arg10[%c0_30, %c0_31, %c112] : memref<4x8x512xf32, #tpu.memory_space<vmem>>, vector<1x8x256xf32>
    %35 = vector.shape_cast %34 : vector<1x8x256xf32> to vector<8x256xf32>
    %36 = arith.truncf %35 : vector<8x256xf32> to vector<8x256xbf16>
    %c8 = arith.constant 8 : index
    %c0_32 = arith.constant 0 : index
    %37 = vector.load %arg12[%c8, %c0_32] : memref<72x1024xbf16, #tpu.memory_space<vmem>>, vector<8x256xbf16>
    tpu.vector_store %arg12[%c8, %c0_32], %36 {strides = array<i32>} : memref<72x1024xbf16, #tpu.memory_space<vmem>>, vector<8x256xbf16>,
    %c1_33 = arith.constant 1 : index
    %c0_34 = arith.constant 0 : index
    %c112_35 = arith.constant 112 : index
    %38 = vector.load %arg10[%c1_33, %c0_34, %c112_35] : memref<4x8x512xf32, #tpu.memory_space<vmem>>, vector<1x8x256xf32>
    %39 = vector.shape_cast %38 : vector<1x8x256xf32> to vector<8x256xf32>
    %40 = arith.truncf %39 : vector<8x256xf32> to vector<8x256xbf16>
    %c8_36 = arith.constant 8 : index
    %c256_37 = arith.constant 256 : index
    %41 = vector.load %arg12[%c8_36, %c256_37] : memref<72x1024xbf16, #tpu.memory_space<vmem>>, vector<8x256xbf16>
    tpu.vector_store %arg12[%c8_36, %c256_37], %40 {strides = array<i32>} : memref<72x1024xbf16, #tpu.memory_space<vmem>>, vector<8x256xbf16>,
    %c2_38 = arith.constant 2 : index
    %c0_39 = arith.constant 0 : index
    %c112_40 = arith.constant 112 : index
    %42 = vector.load %arg10[%c2_38, %c0_39, %c112_40] : memref<4x8x512xf32, #tpu.memory_space<vmem>>, vector<1x8x256xf32>
    %43 = vector.shape_cast %42 : vector<1x8x256xf32> to vector<8x256xf32>
    %44 = arith.truncf %43 : vector<8x256xf32> to vector<8x256xbf16>
    %c8_41 = arith.constant 8 : index
    %c512_42 = arith.constant 512 : index
    %45 = vector.load %arg12[%c8_41, %c512_42] : memref<72x1024xbf16, #tpu.memory_space<vmem>>, vector<8x256xbf16>
    tpu.vector_store %arg12[%c8_41, %c512_42], %44 {strides = array<i32>} : memref<72x1024xbf16, #tpu.memory_space<vmem>>, vector<8x256xbf16>,
    %c3_43 = arith.constant 3 : index
    %c0_44 = arith.constant 0 : index
    %c112_45 = arith.constant 112 : index
    %46 = vector.load %arg10[%c3_43, %c0_44, %c112_45] : memref<4x8x512xf32, #tpu.memory_space<vmem>>, vector<1x8x256xf32>
    %47 = vector.shape_cast %46 : vector<1x8x256xf32> to vector<8x256xf32>
    %48 = arith.truncf %47 : vector<8x256xf32> to vector<8x256xbf16>
    %c8_46 = arith.constant 8 : index
    %c768_47 = arith.constant 768 : index
    %49 = vector.load %arg12[%c8_46, %c768_47] : memref<72x1024xbf16, #tpu.memory_space<vmem>>, vector<8x256xbf16>
    tpu.vector_store %arg12[%c8_46, %c768_47], %48 {strides = array<i32>} : memref<72x1024xbf16, #tpu.memory_space<vmem>>, vector<8x256xbf16>,
    %c0_48 = arith.constant 0 : index
    %c0_49 = arith.constant 0 : index
    %c113 = arith.constant 113 : index
    %50 = vector.load %arg10[%c0_48, %c0_49, %c113] : memref<4x8x512xf32, #tpu.memory_space<vmem>>, vector<1x8x256xf32>
    %51 = vector.shape_cast %50 : vector<1x8x256xf32> to vector<8x256xf32>
    %52 = vector.broadcast %1 : vector<1x256xf32> to vector<8x256xf32>
    %53 = arith.mulf %51, %52 : vector<8x256xf32>
    %54 = arith.truncf %53 : vector<8x256xf32> to vector<8x256xbf16>
    %c16 = arith.constant 16 : index
    %c0_50 = arith.constant 0 : index
    %55 = vector.load %arg12[%c16, %c0_50] : memref<72x1024xbf16, #tpu.memory_space<vmem>>, vector<8x256xbf16>
    tpu.vector_store %arg12[%c16, %c0_50], %54 {strides = array<i32>} : memref<72x1024xbf16, #tpu.memory_space<vmem>>, vector<8x256xbf16>,
    %c1_51 = arith.constant 1 : index
    %c0_52 = arith.constant 0 : index
    %c113_53 = arith.constant 113 : index
    %56 = vector.load %arg10[%c1_51, %c0_52, %c113_53] : memref<4x8x512xf32, #tpu.memory_space<vmem>>, vector<1x8x256xf32>
    %57 = vector.shape_cast %56 : vector<1x8x256xf32> to vector<8x256xf32>
    %58 = vector.broadcast %1 : vector<1x256xf32> to vector<8x256xf32>
    %59 = arith.mulf %57, %58 : vector<8x256xf32>
    %60 = arith.truncf %59 : vector<8x256xf32> to vector<8x256xbf16>
    %c16_54 = arith.constant 16 : index
    %c256_55 = arith.constant 256 : index
    %61 = vector.load %arg12[%c16_54, %c256_55] : memref<72x1024xbf16, #tpu.memory_space<vmem>>, vector<8x256xbf16>
    tpu.vector_store %arg12[%c16_54, %c256_55], %60 {strides = array<i32>} : memref<72x1024xbf16, #tpu.memory_space<vmem>>, vector<8x256xbf16>,
    %c2_56 = arith.constant 2 : index
    %c0_57 = arith.constant 0 : index
    %c113_58 = arith.constant 113 : index
    %62 = vector.load %arg10[%c2_56, %c0_57, %c113_58] : memref<4x8x512xf32, #tpu.memory_space<vmem>>, vector<1x8x256xf32>
    %63 = vector.shape_cast %62 : vector<1x8x256xf32> to vector<8x256xf32>
    %64 = vector.broadcast %1 : vector<1x256xf32> to vector<8x256xf32>
    %65 = arith.mulf %63, %64 : vector<8x256xf32>
    %66 = arith.truncf %65 : vector<8x256xf32> to vector<8x256xbf16>
    %c16_59 = arith.constant 16 : index
    %c512_60 = arith.constant 512 : index
    %67 = vector.load %arg12[%c16_59, %c512_60] : memref<72x1024xbf16, #tpu.memory_space<vmem>>, vector<8x256xbf16>
    tpu.vector_store %arg12[%c16_59, %c512_60], %66 {strides = array<i32>} : memref<72x1024xbf16, #tpu.memory_space<vmem>>, vector<8x256xbf16>,
    %c3_61 = arith.constant 3 : index
    %c0_62 = arith.constant 0 : index
    %c113_63 = arith.constant 113 : index
    %68 = vector.load %arg10[%c3_61, %c0_62, %c113_63] : memref<4x8x512xf32, #tpu.memory_space<vmem>>, vector<1x8x256xf32>
    %69 = vector.shape_cast %68 : vector<1x8x256xf32> to vector<8x256xf32>
    %70 = vector.broadcast %1 : vector<1x256xf32> to vector<8x256xf32>
    %71 = arith.mulf %69, %70 : vector<8x256xf32>
    %72 = arith.truncf %71 : vector<8x256xf32> to vector<8x256xbf16>
    %c16_64 = arith.constant 16 : index
    %c768_65 = arith.constant 768 : index
    %73 = vector.load %arg12[%c16_64, %c768_65] : memref<72x1024xbf16, #tpu.memory_space<vmem>>, vector<8x256xbf16>
    tpu.vector_store %arg12[%c16_64, %c768_65], %72 {strides = array<i32>} : memref<72x1024xbf16, #tpu.memory_space<vmem>>, vector<8x256xbf16>,
    %c0_66 = arith.constant 0 : index
    %c0_67 = arith.constant 0 : index
    %c127 = arith.constant 127 : index
    %74 = vector.load %arg10[%c0_66, %c0_67, %c127] : memref<4x8x512xf32, #tpu.memory_space<vmem>>, vector<1x8x256xf32>
    %75 = vector.shape_cast %74 : vector<1x8x256xf32> to vector<8x256xf32>
    %76 = vector.broadcast %0 : vector<1x256xf32> to vector<8x256xf32>
    %77 = arith.mulf %75, %76 : vector<8x256xf32>
    %78 = arith.truncf %77 : vector<8x256xf32> to vector<8x256xbf16>
    %c24 = arith.constant 24 : index
    %c0_68 = arith.constant 0 : index
    %79 = vector.load %arg12[%c24, %c0_68] : memref<72x1024xbf16, #tpu.memory_space<vmem>>, vector<8x256xbf16>
    tpu.vector_store %arg12[%c24, %c0_68], %78 {strides = array<i32>} : memref<72x1024xbf16, #tpu.memory_space<vmem>>, vector<8x256xbf16>,
    %c1_69 = arith.constant 1 : index
    %c0_70 = arith.constant 0 : index
    %c127_71 = arith.constant 127 : index
    %80 = vector.load %arg10[%c1_69, %c0_70, %c127_71] : memref<4x8x512xf32, #tpu.memory_space<vmem>>, vector<1x8x256xf32>
    %81 = vector.shape_cast %80 : vector<1x8x256xf32> to vector<8x256xf32>
    %82 = vector.broadcast %0 : vector<1x256xf32> to vector<8x256xf32>
    %83 = arith.mulf %81, %82 : vector<8x256xf32>
    %84 = arith.truncf %83 : vector<8x256xf32> to vector<8x256xbf16>
    %c24_72 = arith.constant 24 : index
    %c256_73 = arith.constant 256 : index
    %85 = vector.load %arg12[%c24_72, %c256_73] : memref<72x1024xbf16, #tpu.memory_space<vmem>>, vector<8x256xbf16>
    tpu.vector_store %arg12[%c24_72, %c256_73], %84 {strides = array<i32>} : memref<72x1024xbf16, #tpu.memory_space<vmem>>, vector<8x256xbf16>,
    %c2_74 = arith.constant 2 : index
    %c0_75 = arith.constant 0 : index
    %c127_76 = arith.constant 127 : index
    %86 = vector.load %arg10[%c2_74, %c0_75, %c127_76] : memref<4x8x512xf32, #tpu.memory_space<vmem>>, vector<1x8x256xf32>
    %87 = vector.shape_cast %86 : vector<1x8x256xf32> to vector<8x256xf32>
    %88 = vector.broadcast %0 : vector<1x256xf32> to vector<8x256xf32>
    %89 = arith.mulf %87, %88 : vector<8x256xf32>
    %90 = arith.truncf %89 : vector<8x256xf32> to vector<8x256xbf16>
    %c24_77 = arith.constant 24 : index
    %c512_78 = arith.constant 512 : index
    %91 = vector.load %arg12[%c24_77, %c512_78] : memref<72x1024xbf16, #tpu.memory_space<vmem>>, vector<8x256xbf16>
    tpu.vector_store %arg12[%c24_77, %c512_78], %90 {strides = array<i32>} : memref<72x1024xbf16, #tpu.memory_space<vmem>>, vector<8x256xbf16>,
    %c3_79 = arith.constant 3 : index
    %c0_80 = arith.constant 0 : index
    %c127_81 = arith.constant 127 : index
    %92 = vector.load %arg10[%c3_79, %c0_80, %c127_81] : memref<4x8x512xf32, #tpu.memory_space<vmem>>, vector<1x8x256xf32>
    %93 = vector.shape_cast %92 : vector<1x8x256xf32> to vector<8x256xf32>
    %94 = vector.broadcast %0 : vector<1x256xf32> to vector<8x256xf32>
    %95 = arith.mulf %93, %94 : vector<8x256xf32>
    %96 = arith.truncf %95 : vector<8x256xf32> to vector<8x256xbf16>
    %c24_82 = arith.constant 24 : index
    %c768_83 = arith.constant 768 : index
    %97 = vector.load %arg12[%c24_82, %c768_83] : memref<72x1024xbf16, #tpu.memory_space<vmem>>, vector<8x256xbf16>
    tpu.vector_store %arg12[%c24_82, %c768_83], %96 {strides = array<i32>} : memref<72x1024xbf16, #tpu.memory_space<vmem>>, vector<8x256xbf16>,
    %c0_84 = arith.constant 0 : index
    %c0_85 = arith.constant 0 : index
    %c128_86 = arith.constant 128 : index
    %98 = vector.load %arg10[%c0_84, %c0_85, %c128_86] : memref<4x8x512xf32, #tpu.memory_space<vmem>>, vector<1x8x256xf32>
    %99 = vector.shape_cast %98 : vector<1x8x256xf32> to vector<8x256xf32>
    %100 = arith.truncf %99 : vector<8x256xf32> to vector<8x256xbf16>
    %c32 = arith.constant 32 : index
    %c0_87 = arith.constant 0 : index
    %101 = vector.load %arg12[%c32, %c0_87] : memref<72x1024xbf16, #tpu.memory_space<vmem>>, vector<8x256xbf16>
    tpu.vector_store %arg12[%c32, %c0_87], %100 {strides = array<i32>} : memref<72x1024xbf16, #tpu.memory_space<vmem>>, vector<8x256xbf16>,
    %c1_88 = arith.constant 1 : index
    %c0_89 = arith.constant 0 : index
    %c128_90 = arith.constant 128 : index
    %102 = vector.load %arg10[%c1_88, %c0_89, %c128_90] : memref<4x8x512xf32, #tpu.memory_space<vmem>>, vector<1x8x256xf32>
    %103 = vector.shape_cast %102 : vector<1x8x256xf32> to vector<8x256xf32>
    %104 = arith.truncf %103 : vector<8x256xf32> to vector<8x256xbf16>
    %c32_91 = arith.constant 32 : index
    %c256_92 = arith.constant 256 : index
    %105 = vector.load %arg12[%c32_91, %c256_92] : memref<72x1024xbf16, #tpu.memory_space<vmem>>, vector<8x256xbf16>
    tpu.vector_store %arg12[%c32_91, %c256_92], %104 {strides = array<i32>} : memref<72x1024xbf16, #tpu.memory_space<vmem>>, vector<8x256xbf16>,
    %c2_93 = arith.constant 2 : index
    %c0_94 = arith.constant 0 : index
    %c128_95 = arith.constant 128 : index
    %106 = vector.load %arg10[%c2_93, %c0_94, %c128_95] : memref<4x8x512xf32, #tpu.memory_space<vmem>>, vector<1x8x256xf32>
    %107 = vector.shape_cast %106 : vector<1x8x256xf32> to vector<8x256xf32>
    %108 = arith.truncf %107 : vector<8x256xf32> to vector<8x256xbf16>
    %c32_96 = arith.constant 32 : index
    %c512_97 = arith.constant 512 : index
    %109 = vector.load %arg12[%c32_96, %c512_97] : memref<72x1024xbf16, #tpu.memory_space<vmem>>, vector<8x256xbf16>
    tpu.vector_store %arg12[%c32_96, %c512_97], %108 {strides = array<i32>} : memref<72x1024xbf16, #tpu.memory_space<vmem>>, vector<8x256xbf16>,
    %c3_98 = arith.constant 3 : index
    %c0_99 = arith.constant 0 : index
    %c128_100 = arith.constant 128 : index
    %110 = vector.load %arg10[%c3_98, %c0_99, %c128_100] : memref<4x8x512xf32, #tpu.memory_space<vmem>>, vector<1x8x256xf32>
    %111 = vector.shape_cast %110 : vector<1x8x256xf32> to vector<8x256xf32>
    %112 = arith.truncf %111 : vector<8x256xf32> to vector<8x256xbf16>
    %c32_101 = arith.constant 32 : index
    %c768_102 = arith.constant 768 : index
    %113 = vector.load %arg12[%c32_101, %c768_102] : memref<72x1024xbf16, #tpu.memory_space<vmem>>, vector<8x256xbf16>
    tpu.vector_store %arg12[%c32_101, %c768_102], %112 {strides = array<i32>} : memref<72x1024xbf16, #tpu.memory_space<vmem>>, vector<8x256xbf16>,
    %c0_103 = arith.constant 0 : index
    %c0_104 = arith.constant 0 : index
    %c129 = arith.constant 129 : index
    %114 = vector.load %arg10[%c0_103, %c0_104, %c129] : memref<4x8x512xf32, #tpu.memory_space<vmem>>, vector<1x8x256xf32>
    %115 = vector.shape_cast %114 : vector<1x8x256xf32> to vector<8x256xf32>
    %116 = vector.broadcast %1 : vector<1x256xf32> to vector<8x256xf32>
    %117 = arith.mulf %115, %116 : vector<8x256xf32>
    %118 = arith.truncf %117 : vector<8x256xf32> to vector<8x256xbf16>
    %c40 = arith.constant 40 : index
    %c0_105 = arith.constant 0 : index
    %119 = vector.load %arg12[%c40, %c0_105] : memref<72x1024xbf16, #tpu.memory_space<vmem>>, vector<8x256xbf16>
    tpu.vector_store %arg12[%c40, %c0_105], %118 {strides = array<i32>} : memref<72x1024xbf16, #tpu.memory_space<vmem>>, vector<8x256xbf16>,
    %c1_106 = arith.constant 1 : index
    %c0_107 = arith.constant 0 : index
    %c129_108 = arith.constant 129 : index
    %120 = vector.load %arg10[%c1_106, %c0_107, %c129_108] : memref<4x8x512xf32, #tpu.memory_space<vmem>>, vector<1x8x256xf32>
    %121 = vector.shape_cast %120 : vector<1x8x256xf32> to vector<8x256xf32>
    %122 = vector.broadcast %1 : vector<1x256xf32> to vector<8x256xf32>
    %123 = arith.mulf %121, %122 : vector<8x256xf32>
    %124 = arith.truncf %123 : vector<8x256xf32> to vector<8x256xbf16>
    %c40_109 = arith.constant 40 : index
    %c256_110 = arith.constant 256 : index
    %125 = vector.load %arg12[%c40_109, %c256_110] : memref<72x1024xbf16, #tpu.memory_space<vmem>>, vector<8x256xbf16>
    tpu.vector_store %arg12[%c40_109, %c256_110], %124 {strides = array<i32>} : memref<72x1024xbf16, #tpu.memory_space<vmem>>, vector<8x256xbf16>,
    %c2_111 = arith.constant 2 : index
    %c0_112 = arith.constant 0 : index
    %c129_113 = arith.constant 129 : index
    %126 = vector.load %arg10[%c2_111, %c0_112, %c129_113] : memref<4x8x512xf32, #tpu.memory_space<vmem>>, vector<1x8x256xf32>
    %127 = vector.shape_cast %126 : vector<1x8x256xf32> to vector<8x256xf32>
    %128 = vector.broadcast %1 : vector<1x256xf32> to vector<8x256xf32>
    %129 = arith.mulf %127, %128 : vector<8x256xf32>
    %130 = arith.truncf %129 : vector<8x256xf32> to vector<8x256xbf16>
    %c40_114 = arith.constant 40 : index
    %c512_115 = arith.constant 512 : index
    %131 = vector.load %arg12[%c40_114, %c512_115] : memref<72x1024xbf16, #tpu.memory_space<vmem>>, vector<8x256xbf16>
    tpu.vector_store %arg12[%c40_114, %c512_115], %130 {strides = array<i32>} : memref<72x1024xbf16, #tpu.memory_space<vmem>>, vector<8x256xbf16>,
    %c3_116 = arith.constant 3 : index
    %c0_117 = arith.constant 0 : index
    %c129_118 = arith.constant 129 : index
    %132 = vector.load %arg10[%c3_116, %c0_117, %c129_118] : memref<4x8x512xf32, #tpu.memory_space<vmem>>, vector<1x8x256xf32>
    %133 = vector.shape_cast %132 : vector<1x8x256xf32> to vector<8x256xf32>
    %134 = vector.broadcast %1 : vector<1x256xf32> to vector<8x256xf32>
    %135 = arith.mulf %133, %134 : vector<8x256xf32>
    %136 = arith.truncf %135 : vector<8x256xf32> to vector<8x256xbf16>
    %c40_119 = arith.constant 40 : index
    %c768_120 = arith.constant 768 : index
    %137 = vector.load %arg12[%c40_119, %c768_120] : memref<72x1024xbf16, #tpu.memory_space<vmem>>, vector<8x256xbf16>
    tpu.vector_store %arg12[%c40_119, %c768_120], %136 {strides = array<i32>} : memref<72x1024xbf16, #tpu.memory_space<vmem>>, vector<8x256xbf16>,
    %c0_121 = arith.constant 0 : index
    %c0_122 = arith.constant 0 : index
    %c143 = arith.constant 143 : index
    %138 = vector.load %arg10[%c0_121, %c0_122, %c143] : memref<4x8x512xf32, #tpu.memory_space<vmem>>, vector<1x8x256xf32>
    %139 = vector.shape_cast %138 : vector<1x8x256xf32> to vector<8x256xf32>
    %140 = vector.broadcast %0 : vector<1x256xf32> to vector<8x256xf32>
    %141 = arith.mulf %139, %140 : vector<8x256xf32>
    %142 = arith.truncf %141 : vector<8x256xf32> to vector<8x256xbf16>
    %c48 = arith.constant 48 : index
    %c0_123 = arith.constant 0 : index
    %143 = vector.load %arg12[%c48, %c0_123] : memref<72x1024xbf16, #tpu.memory_space<vmem>>, vector<8x256xbf16>
    tpu.vector_store %arg12[%c48, %c0_123], %142 {strides = array<i32>} : memref<72x1024xbf16, #tpu.memory_space<vmem>>, vector<8x256xbf16>,
    %c1_124 = arith.constant 1 : index
    %c0_125 = arith.constant 0 : index
    %c143_126 = arith.constant 143 : index
    %144 = vector.load %arg10[%c1_124, %c0_125, %c143_126] : memref<4x8x512xf32, #tpu.memory_space<vmem>>, vector<1x8x256xf32>
    %145 = vector.shape_cast %144 : vector<1x8x256xf32> to vector<8x256xf32>
    %146 = vector.broadcast %0 : vector<1x256xf32> to vector<8x256xf32>
    %147 = arith.mulf %145, %146 : vector<8x256xf32>
    %148 = arith.truncf %147 : vector<8x256xf32> to vector<8x256xbf16>
    %c48_127 = arith.constant 48 : index
    %c256_128 = arith.constant 256 : index
    %149 = vector.load %arg12[%c48_127, %c256_128] : memref<72x1024xbf16, #tpu.memory_space<vmem>>, vector<8x256xbf16>
    tpu.vector_store %arg12[%c48_127, %c256_128], %148 {strides = array<i32>} : memref<72x1024xbf16, #tpu.memory_space<vmem>>, vector<8x256xbf16>,
    %c2_129 = arith.constant 2 : index
    %c0_130 = arith.constant 0 : index
    %c143_131 = arith.constant 143 : index
    %150 = vector.load %arg10[%c2_129, %c0_130, %c143_131] : memref<4x8x512xf32, #tpu.memory_space<vmem>>, vector<1x8x256xf32>
    %151 = vector.shape_cast %150 : vector<1x8x256xf32> to vector<8x256xf32>
    %152 = vector.broadcast %0 : vector<1x256xf32> to vector<8x256xf32>
    %153 = arith.mulf %151, %152 : vector<8x256xf32>
    %154 = arith.truncf %153 : vector<8x256xf32> to vector<8x256xbf16>
    %c48_132 = arith.constant 48 : index
    %c512_133 = arith.constant 512 : index
    %155 = vector.load %arg12[%c48_132, %c512_133] : memref<72x1024xbf16, #tpu.memory_space<vmem>>, vector<8x256xbf16>
    tpu.vector_store %arg12[%c48_132, %c512_133], %154 {strides = array<i32>} : memref<72x1024xbf16, #tpu.memory_space<vmem>>, vector<8x256xbf16>,
    %c3_134 = arith.constant 3 : index
    %c0_135 = arith.constant 0 : index
    %c143_136 = arith.constant 143 : index
    %156 = vector.load %arg10[%c3_134, %c0_135, %c143_136] : memref<4x8x512xf32, #tpu.memory_space<vmem>>, vector<1x8x256xf32>
    %157 = vector.shape_cast %156 : vector<1x8x256xf32> to vector<8x256xf32>
    %158 = vector.broadcast %0 : vector<1x256xf32> to vector<8x256xf32>
    %159 = arith.mulf %157, %158 : vector<8x256xf32>
    %160 = arith.truncf %159 : vector<8x256xf32> to vector<8x256xbf16>
    %c48_137 = arith.constant 48 : index
    %c768_138 = arith.constant 768 : index
    %161 = vector.load %arg12[%c48_137, %c768_138] : memref<72x1024xbf16, #tpu.memory_space<vmem>>, vector<8x256xbf16>
    tpu.vector_store %arg12[%c48_137, %c768_138], %160 {strides = array<i32>} : memref<72x1024xbf16, #tpu.memory_space<vmem>>, vector<8x256xbf16>,
    %c0_139 = arith.constant 0 : index
    %c0_140 = arith.constant 0 : index
    %c144 = arith.constant 144 : index
    %162 = vector.load %arg10[%c0_139, %c0_140, %c144] : memref<4x8x512xf32, #tpu.memory_space<vmem>>, vector<1x8x256xf32>
    %163 = vector.shape_cast %162 : vector<1x8x256xf32> to vector<8x256xf32>
    %164 = arith.truncf %163 : vector<8x256xf32> to vector<8x256xbf16>
    %c56 = arith.constant 56 : index
    %c0_141 = arith.constant 0 : index
    %165 = vector.load %arg12[%c56, %c0_141] : memref<72x1024xbf16, #tpu.memory_space<vmem>>, vector<8x256xbf16>
    tpu.vector_store %arg12[%c56, %c0_141], %164 {strides = array<i32>} : memref<72x1024xbf16, #tpu.memory_space<vmem>>, vector<8x256xbf16>,
    %c1_142 = arith.constant 1 : index
    %c0_143 = arith.constant 0 : index
    %c144_144 = arith.constant 144 : index
    %166 = vector.load %arg10[%c1_142, %c0_143, %c144_144] : memref<4x8x512xf32, #tpu.memory_space<vmem>>, vector<1x8x256xf32>
    %167 = vector.shape_cast %166 : vector<1x8x256xf32> to vector<8x256xf32>
    %168 = arith.truncf %167 : vector<8x256xf32> to vector<8x256xbf16>
    %c56_145 = arith.constant 56 : index
    %c256_146 = arith.constant 256 : index
    %169 = vector.load %arg12[%c56_145, %c256_146] : memref<72x1024xbf16, #tpu.memory_space<vmem>>, vector<8x256xbf16>
    tpu.vector_store %arg12[%c56_145, %c256_146], %168 {strides = array<i32>} : memref<72x1024xbf16, #tpu.memory_space<vmem>>, vector<8x256xbf16>,
    %c2_147 = arith.constant 2 : index
    %c0_148 = arith.constant 0 : index
    %c144_149 = arith.constant 144 : index
    %170 = vector.load %arg10[%c2_147, %c0_148, %c144_149] : memref<4x8x512xf32, #tpu.memory_space<vmem>>, vector<1x8x256xf32>
    %171 = vector.shape_cast %170 : vector<1x8x256xf32> to vector<8x256xf32>
    %172 = arith.truncf %171 : vector<8x256xf32> to vector<8x256xbf16>
    %c56_150 = arith.constant 56 : index
    %c512_151 = arith.constant 512 : index
    %173 = vector.load %arg12[%c56_150, %c512_151] : memref<72x1024xbf16, #tpu.memory_space<vmem>>, vector<8x256xbf16>
    tpu.vector_store %arg12[%c56_150, %c512_151], %172 {strides = array<i32>} : memref<72x1024xbf16, #tpu.memory_space<vmem>>, vector<8x256xbf16>,
    %c3_152 = arith.constant 3 : index
    %c0_153 = arith.constant 0 : index
    %c144_154 = arith.constant 144 : index
    %174 = vector.load %arg10[%c3_152, %c0_153, %c144_154] : memref<4x8x512xf32, #tpu.memory_space<vmem>>, vector<1x8x256xf32>
    %175 = vector.shape_cast %174 : vector<1x8x256xf32> to vector<8x256xf32>
    %176 = arith.truncf %175 : vector<8x256xf32> to vector<8x256xbf16>
    %c56_155 = arith.constant 56 : index
    %c768_156 = arith.constant 768 : index
    %177 = vector.load %arg12[%c56_155, %c768_156] : memref<72x1024xbf16, #tpu.memory_space<vmem>>, vector<8x256xbf16>
    tpu.vector_store %arg12[%c56_155, %c768_156], %176 {strides = array<i32>} : memref<72x1024xbf16, #tpu.memory_space<vmem>>, vector<8x256xbf16>,
    %c0_157 = arith.constant 0 : index
    %c0_158 = arith.constant 0 : index
    %c145 = arith.constant 145 : index
    %178 = vector.load %arg10[%c0_157, %c0_158, %c145] : memref<4x8x512xf32, #tpu.memory_space<vmem>>, vector<1x8x256xf32>
    %179 = vector.shape_cast %178 : vector<1x8x256xf32> to vector<8x256xf32>
    %180 = vector.broadcast %1 : vector<1x256xf32> to vector<8x256xf32>
    %181 = arith.mulf %179, %180 : vector<8x256xf32>
    %182 = arith.truncf %181 : vector<8x256xf32> to vector<8x256xbf16>
    %c64 = arith.constant 64 : index
    %c0_159 = arith.constant 0 : index
    %183 = vector.load %arg12[%c64, %c0_159] : memref<72x1024xbf16, #tpu.memory_space<vmem>>, vector<8x256xbf16>
    tpu.vector_store %arg12[%c64, %c0_159], %182 {strides = array<i32>} : memref<72x1024xbf16, #tpu.memory_space<vmem>>, vector<8x256xbf16>,
    %c1_160 = arith.constant 1 : index
    %c0_161 = arith.constant 0 : index
    %c145_162 = arith.constant 145 : index
    %184 = vector.load %arg10[%c1_160, %c0_161, %c145_162] : memref<4x8x512xf32, #tpu.memory_space<vmem>>, vector<1x8x256xf32>
    %185 = vector.shape_cast %184 : vector<1x8x256xf32> to vector<8x256xf32>
    %186 = vector.broadcast %1 : vector<1x256xf32> to vector<8x256xf32>
    %187 = arith.mulf %185, %186 : vector<8x256xf32>
    %188 = arith.truncf %187 : vector<8x256xf32> to vector<8x256xbf16>
    %c64_163 = arith.constant 64 : index
    %c256_164 = arith.constant 256 : index
    %189 = vector.load %arg12[%c64_163, %c256_164] : memref<72x1024xbf16, #tpu.memory_space<vmem>>, vector<8x256xbf16>
    tpu.vector_store %arg12[%c64_163, %c256_164], %188 {strides = array<i32>} : memref<72x1024xbf16, #tpu.memory_space<vmem>>, vector<8x256xbf16>,
    %c2_165 = arith.constant 2 : index
    %c0_166 = arith.constant 0 : index
    %c145_167 = arith.constant 145 : index
    %190 = vector.load %arg10[%c2_165, %c0_166, %c145_167] : memref<4x8x512xf32, #tpu.memory_space<vmem>>, vector<1x8x256xf32>
    %191 = vector.shape_cast %190 : vector<1x8x256xf32> to vector<8x256xf32>
    %192 = vector.broadcast %1 : vector<1x256xf32> to vector<8x256xf32>
    %193 = arith.mulf %191, %192 : vector<8x256xf32>
    %194 = arith.truncf %193 : vector<8x256xf32> to vector<8x256xbf16>
    %c64_168 = arith.constant 64 : index
    %c512_169 = arith.constant 512 : index
    %195 = vector.load %arg12[%c64_168, %c512_169] : memref<72x1024xbf16, #tpu.memory_space<vmem>>, vector<8x256xbf16>
    tpu.vector_store %arg12[%c64_168, %c512_169], %194 {strides = array<i32>} : memref<72x1024xbf16, #tpu.memory_space<vmem>>, vector<8x256xbf16>,
    %c3_170 = arith.constant 3 : index
    %c0_171 = arith.constant 0 : index
    %c145_172 = arith.constant 145 : index
    %196 = vector.load %arg10[%c3_170, %c0_171, %c145_172] : memref<4x8x512xf32, #tpu.memory_space<vmem>>, vector<1x8x256xf32>
    %197 = vector.shape_cast %196 : vector<1x8x256xf32> to vector<8x256xf32>
    %198 = vector.broadcast %1 : vector<1x256xf32> to vector<8x256xf32>
    %199 = arith.mulf %197, %198 : vector<8x256xf32>
    %200 = arith.truncf %199 : vector<8x256xf32> to vector<8x256xbf16>
    %c64_173 = arith.constant 64 : index
    %c768_174 = arith.constant 768 : index
    %201 = vector.load %arg12[%c64_173, %c768_174] : memref<72x1024xbf16, #tpu.memory_space<vmem>>, vector<8x256xbf16>
    tpu.vector_store %arg12[%c64_173, %c768_174], %200 {strides = array<i32>} : memref<72x1024xbf16, #tpu.memory_space<vmem>>, vector<8x256xbf16>,
    %c0_175 = arith.constant 0 : index
    %c0_176 = arith.constant 0 : index
    %202 = vector.load %arg3[%c0_175, %c0_176] : memref<8x72xbf16, #tpu.memory_space<vmem>>, vector<8x72xbf16>
    %c0_177 = arith.constant 0 : index
    %c0_178 = arith.constant 0 : index
    %203 = vector.load %arg12[%c0_177, %c0_178] : memref<72x1024xbf16, #tpu.memory_space<vmem>>, vector<72x1024xbf16>
    %cst_179 = arith.constant dense<0.000000e+00> : vector<8x1024xf32>
    %204 = tpu.matmul %202, %203, %cst_179 {dimension_numbers = #tpu.dot_dimension_numbers<[1], [0], [0], [1], [0, 0, 1, 1], [], []>} : vector<8x72xbf16>, vector<72x1024xbf16>, vector<8x1024xf32> -> vector<8x1024xf32>
    %c0_180 = arith.constant 0 : index
    %c0_181 = arith.constant 0 : index
    %205 = vector.load %arg4[%c0_180, %c0_181] : memref<8x1xf32, #tpu.memory_space<vmem>>, vector<8x1xf32>
    %206 = vector.broadcast %205 : vector<8x1xf32> to vector<8x1024xf32>
    %207 = arith.mulf %204, %206 : vector<8x1024xf32>
    %c0_182 = arith.constant 0 : index
    %c0_183 = arith.constant 0 : index
    %208 = vector.load %arg5[%c0_182, %c0_183] : memref<8x1xf32, #tpu.memory_space<vmem>>, vector<8x1xf32>
    %209 = vector.broadcast %208 : vector<8x1xf32> to vector<8x1024xf32>
    %210 = arith.addf %207, %209 : vector<8x1024xf32>
    %cst_184 = arith.constant 0.000000e+00 : f32
    %211 = vector.broadcast %cst_184 : f32 to vector<8x1024xf32>
    %212 = arith.maximumf %210, %211 : vector<8x1024xf32>
    %cst_185 = arith.constant 0.000000e+00 : f32
    %213 = vector.broadcast %cst_185 : f32 to vector<4x8x128xf32>
    %c0_186 = arith.constant 0 : index
    %c0_187 = arith.constant 0 : index
    %c0_188 = arith.constant 0 : index
    %214 = vector.load %arg11[%c0_186, %c0_187, %c0_188] : memref<4x8x512xf32, #tpu.memory_space<vmem>>, vector<4x8x128xf32>
    tpu.vector_store %arg11[%c0_186, %c0_187, %c0_188], %213 {strides = array<i32>} : memref<4x8x512xf32, #tpu.memory_space<vmem>>, vector<4x8x128xf32>,
    %cst_189 = arith.constant 0.000000e+00 : f32
    %215 = vector.broadcast %cst_189 : f32 to vector<4x8x128xf32>
    %c0_190 = arith.constant 0 : index
    %c0_191 = arith.constant 0 : index
    %c384_192 = arith.constant 384 : index
    %216 = vector.load %arg11[%c0_190, %c0_191, %c384_192] : memref<4x8x512xf32, #tpu.memory_space<vmem>>, vector<4x8x128xf32>
    tpu.vector_store %arg11[%c0_190, %c0_191, %c384_192], %215 {strides = array<i32>} : memref<4x8x512xf32, #tpu.memory_space<vmem>>, vector<4x8x128xf32>,
    %217 = vector.extract_strided_slice %212 {offsets = [0, 0], sizes = [8, 256], strides = [1, 1]} : vector<8x1024xf32> to vector<8x256xf32>
    %c0_193 = arith.constant 0 : index
    %c0_194 = arith.constant 0 : index
    %c128_195 = arith.constant 128 : index
    %218 = vector.load %arg11[%c0_193, %c0_194, %c128_195] : memref<4x8x512xf32, #tpu.memory_space<vmem>>, vector<1x8x256xf32>
    %219 = vector.shape_cast %218 : vector<1x8x256xf32> to vector<8x256xf32>
    %220 = vector.shape_cast %217 : vector<8x256xf32> to vector<1x8x256xf32>
    tpu.vector_store %arg11[%c0_193, %c0_194, %c128_195], %220 {strides = array<i32>} : memref<4x8x512xf32, #tpu.memory_space<vmem>>, vector<1x8x256xf32>,
    %221 = vector.extract_strided_slice %212 {offsets = [0, 256], sizes = [8, 256], strides = [1, 1]} : vector<8x1024xf32> to vector<8x256xf32>
    %c1_196 = arith.constant 1 : index
    %c0_197 = arith.constant 0 : index
    %c128_198 = arith.constant 128 : index
    %222 = vector.load %arg11[%c1_196, %c0_197, %c128_198] : memref<4x8x512xf32, #tpu.memory_space<vmem>>, vector<1x8x256xf32>
    %223 = vector.shape_cast %222 : vector<1x8x256xf32> to vector<8x256xf32>
    %224 = vector.shape_cast %221 : vector<8x256xf32> to vector<1x8x256xf32>
    tpu.vector_store %arg11[%c1_196, %c0_197, %c128_198], %224 {strides = array<i32>} : memref<4x8x512xf32, #tpu.memory_space<vmem>>, vector<1x8x256xf32>,
    %225 = vector.extract_strided_slice %212 {offsets = [0, 512], sizes = [8, 256], strides = [1, 1]} : vector<8x1024xf32> to vector<8x256xf32>
    %c2_199 = arith.constant 2 : index
    %c0_200 = arith.constant 0 : index
    %c128_201 = arith.constant 128 : index
    %226 = vector.load %arg11[%c2_199, %c0_200, %c128_201] : memref<4x8x512xf32, #tpu.memory_space<vmem>>, vector<1x8x256xf32>
    %227 = vector.shape_cast %226 : vector<1x8x256xf32> to vector<8x256xf32>
    %228 = vector.shape_cast %225 : vector<8x256xf32> to vector<1x8x256xf32>
    tpu.vector_store %arg11[%c2_199, %c0_200, %c128_201], %228 {strides = array<i32>} : memref<4x8x512xf32, #tpu.memory_space<vmem>>, vector<1x8x256xf32>,
    %229 = vector.extract_strided_slice %212 {offsets = [0, 768], sizes = [8, 256], strides = [1, 1]} : vector<8x1024xf32> to vector<8x256xf32>
    %c3_202 = arith.constant 3 : index
    %c0_203 = arith.constant 0 : index
    %c128_204 = arith.constant 128 : index
    %230 = vector.load %arg11[%c3_202, %c0_203, %c128_204] : memref<4x8x512xf32, #tpu.memory_space<vmem>>, vector<1x8x256xf32>
    %231 = vector.shape_cast %230 : vector<1x8x256xf32> to vector<8x256xf32>
    %232 = vector.shape_cast %229 : vector<8x256xf32> to vector<1x8x256xf32>
    tpu.vector_store %arg11[%c3_202, %c0_203, %c128_204], %232 {strides = array<i32>} : memref<4x8x512xf32, #tpu.memory_space<vmem>>, vector<1x8x256xf32>,
    %c0_205 = arith.constant 0 : index
    %c0_206 = arith.constant 0 : index
    %c111_207 = arith.constant 111 : index
    %233 = vector.load %arg11[%c0_205, %c0_206, %c111_207] : memref<4x8x512xf32, #tpu.memory_space<vmem>>, vector<1x8x256xf32>
    %234 = vector.shape_cast %233 : vector<1x8x256xf32> to vector<8x256xf32>
    %235 = vector.broadcast %0 : vector<1x256xf32> to vector<8x256xf32>
    %236 = arith.mulf %234, %235 : vector<8x256xf32>
    %237 = arith.truncf %236 : vector<8x256xf32> to vector<8x256xbf16>
    %c0_208 = arith.constant 0 : index
    %c0_209 = arith.constant 0 : index
    %238 = vector.load %arg12[%c0_208, %c0_209] : memref<72x1024xbf16, #tpu.memory_space<vmem>>, vector<8x256xbf16>
    tpu.vector_store %arg12[%c0_208, %c0_209], %237 {strides = array<i32>} : memref<72x1024xbf16, #tpu.memory_space<vmem>>, vector<8x256xbf16>,
    %c1_210 = arith.constant 1 : index
    %c0_211 = arith.constant 0 : index
    %c111_212 = arith.constant 111 : index
    %239 = vector.load %arg11[%c1_210, %c0_211, %c111_212] : memref<4x8x512xf32, #tpu.memory_space<vmem>>, vector<1x8x256xf32>
    %240 = vector.shape_cast %239 : vector<1x8x256xf32> to vector<8x256xf32>
    %241 = vector.broadcast %0 : vector<1x256xf32> to vector<8x256xf32>
    %242 = arith.mulf %240, %241 : vector<8x256xf32>
    %243 = arith.truncf %242 : vector<8x256xf32> to vector<8x256xbf16>
    %c0_213 = arith.constant 0 : index
    %c256_214 = arith.constant 256 : index
    %244 = vector.load %arg12[%c0_213, %c256_214] : memref<72x1024xbf16, #tpu.memory_space<vmem>>, vector<8x256xbf16>
    tpu.vector_store %arg12[%c0_213, %c256_214], %243 {strides = array<i32>} : memref<72x1024xbf16, #tpu.memory_space<vmem>>, vector<8x256xbf16>,
    %c2_215 = arith.constant 2 : index
    %c0_216 = arith.constant 0 : index
    %c111_217 = arith.constant 111 : index
    %245 = vector.load %arg11[%c2_215, %c0_216, %c111_217] : memref<4x8x512xf32, #tpu.memory_space<vmem>>, vector<1x8x256xf32>
    %246 = vector.shape_cast %245 : vector<1x8x256xf32> to vector<8x256xf32>
    %247 = vector.broadcast %0 : vector<1x256xf32> to vector<8x256xf32>
    %248 = arith.mulf %246, %247 : vector<8x256xf32>
    %249 = arith.truncf %248 : vector<8x256xf32> to vector<8x256xbf16>
    %c0_218 = arith.constant 0 : index
    %c512_219 = arith.constant 512 : index
    %250 = vector.load %arg12[%c0_218, %c512_219] : memref<72x1024xbf16, #tpu.memory_space<vmem>>, vector<8x256xbf16>
    tpu.vector_store %arg12[%c0_218, %c512_219], %249 {strides = array<i32>} : memref<72x1024xbf16, #tpu.memory_space<vmem>>, vector<8x256xbf16>,
    %c3_220 = arith.constant 3 : index
    %c0_221 = arith.constant 0 : index
    %c111_222 = arith.constant 111 : index
    %251 = vector.load %arg11[%c3_220, %c0_221, %c111_222] : memref<4x8x512xf32, #tpu.memory_space<vmem>>, vector<1x8x256xf32>
    %252 = vector.shape_cast %251 : vector<1x8x256xf32> to vector<8x256xf32>
    %253 = vector.broadcast %0 : vector<1x256xf32> to vector<8x256xf32>
    %254 = arith.mulf %252, %253 : vector<8x256xf32>
    %255 = arith.truncf %254 : vector<8x256xf32> to vector<8x256xbf16>
    %c0_223 = arith.constant 0 : index
    %c768_224 = arith.constant 768 : index
    %256 = vector.load %arg12[%c0_223, %c768_224] : memref<72x1024xbf16, #tpu.memory_space<vmem>>, vector<8x256xbf16>
    tpu.vector_store %arg12[%c0_223, %c768_224], %255 {strides = array<i32>} : memref<72x1024xbf16, #tpu.memory_space<vmem>>, vector<8x256xbf16>,
    %c0_225 = arith.constant 0 : index
    %c0_226 = arith.constant 0 : index
    %c112_227 = arith.constant 112 : index
    %257 = vector.load %arg11[%c0_225, %c0_226, %c112_227] : memref<4x8x512xf32, #tpu.memory_space<vmem>>, vector<1x8x256xf32>
    %258 = vector.shape_cast %257 : vector<1x8x256xf32> to vector<8x256xf32>
    %259 = arith.truncf %258 : vector<8x256xf32> to vector<8x256xbf16>
    %c8_228 = arith.constant 8 : index
    %c0_229 = arith.constant 0 : index
    %260 = vector.load %arg12[%c8_228, %c0_229] : memref<72x1024xbf16, #tpu.memory_space<vmem>>, vector<8x256xbf16>
    tpu.vector_store %arg12[%c8_228, %c0_229], %259 {strides = array<i32>} : memref<72x1024xbf16, #tpu.memory_space<vmem>>, vector<8x256xbf16>,
    %c1_230 = arith.constant 1 : index
    %c0_231 = arith.constant 0 : index
    %c112_232 = arith.constant 112 : index
    %261 = vector.load %arg11[%c1_230, %c0_231, %c112_232] : memref<4x8x512xf32, #tpu.memory_space<vmem>>, vector<1x8x256xf32>
    %262 = vector.shape_cast %261 : vector<1x8x256xf32> to vector<8x256xf32>
    %263 = arith.truncf %262 : vector<8x256xf32> to vector<8x256xbf16>
    %c8_233 = arith.constant 8 : index
    %c256_234 = arith.constant 256 : index
    %264 = vector.load %arg12[%c8_233, %c256_234] : memref<72x1024xbf16, #tpu.memory_space<vmem>>, vector<8x256xbf16>
    tpu.vector_store %arg12[%c8_233, %c256_234], %263 {strides = array<i32>} : memref<72x1024xbf16, #tpu.memory_space<vmem>>, vector<8x256xbf16>,
    %c2_235 = arith.constant 2 : index
    %c0_236 = arith.constant 0 : index
    %c112_237 = arith.constant 112 : index
    %265 = vector.load %arg11[%c2_235, %c0_236, %c112_237] : memref<4x8x512xf32, #tpu.memory_space<vmem>>, vector<1x8x256xf32>
    %266 = vector.shape_cast %265 : vector<1x8x256xf32> to vector<8x256xf32>
    %267 = arith.truncf %266 : vector<8x256xf32> to vector<8x256xbf16>
    %c8_238 = arith.constant 8 : index
    %c512_239 = arith.constant 512 : index
    %268 = vector.load %arg12[%c8_238, %c512_239] : memref<72x1024xbf16, #tpu.memory_space<vmem>>, vector<8x256xbf16>
    tpu.vector_store %arg12[%c8_238, %c512_239], %267 {strides = array<i32>} : memref<72x1024xbf16, #tpu.memory_space<vmem>>, vector<8x256xbf16>,
    %c3_240 = arith.constant 3 : index
    %c0_241 = arith.constant 0 : index
    %c112_242 = arith.constant 112 : index
    %269 = vector.load %arg11[%c3_240, %c0_241, %c112_242] : memref<4x8x512xf32, #tpu.memory_space<vmem>>, vector<1x8x256xf32>
    %270 = vector.shape_cast %269 : vector<1x8x256xf32> to vector<8x256xf32>
    %271 = arith.truncf %270 : vector<8x256xf32> to vector<8x256xbf16>
    %c8_243 = arith.constant 8 : index
    %c768_244 = arith.constant 768 : index
    %272 = vector.load %arg12[%c8_243, %c768_244] : memref<72x1024xbf16, #tpu.memory_space<vmem>>, vector<8x256xbf16>
    tpu.vector_store %arg12[%c8_243, %c768_244], %271 {strides = array<i32>} : memref<72x1024xbf16, #tpu.memory_space<vmem>>, vector<8x256xbf16>,
    %c0_245 = arith.constant 0 : index
    %c0_246 = arith.constant 0 : index
    %c113_247 = arith.constant 113 : index
    %273 = vector.load %arg11[%c0_245, %c0_246, %c113_247] : memref<4x8x512xf32, #tpu.memory_space<vmem>>, vector<1x8x256xf32>
    %274 = vector.shape_cast %273 : vector<1x8x256xf32> to vector<8x256xf32>
    %275 = vector.broadcast %1 : vector<1x256xf32> to vector<8x256xf32>
    %276 = arith.mulf %274, %275 : vector<8x256xf32>
    %277 = arith.truncf %276 : vector<8x256xf32> to vector<8x256xbf16>
    %c16_248 = arith.constant 16 : index
    %c0_249 = arith.constant 0 : index
    %278 = vector.load %arg12[%c16_248, %c0_249] : memref<72x1024xbf16, #tpu.memory_space<vmem>>, vector<8x256xbf16>
    tpu.vector_store %arg12[%c16_248, %c0_249], %277 {strides = array<i32>} : memref<72x1024xbf16, #tpu.memory_space<vmem>>, vector<8x256xbf16>,
    %c1_250 = arith.constant 1 : index
    %c0_251 = arith.constant 0 : index
    %c113_252 = arith.constant 113 : index
    %279 = vector.load %arg11[%c1_250, %c0_251, %c113_252] : memref<4x8x512xf32, #tpu.memory_space<vmem>>, vector<1x8x256xf32>
    %280 = vector.shape_cast %279 : vector<1x8x256xf32> to vector<8x256xf32>
    %281 = vector.broadcast %1 : vector<1x256xf32> to vector<8x256xf32>
    %282 = arith.mulf %280, %281 : vector<8x256xf32>
    %283 = arith.truncf %282 : vector<8x256xf32> to vector<8x256xbf16>
    %c16_253 = arith.constant 16 : index
    %c256_254 = arith.constant 256 : index
    %284 = vector.load %arg12[%c16_253, %c256_254] : memref<72x1024xbf16, #tpu.memory_space<vmem>>, vector<8x256xbf16>
    tpu.vector_store %arg12[%c16_253, %c256_254], %283 {strides = array<i32>} : memref<72x1024xbf16, #tpu.memory_space<vmem>>, vector<8x256xbf16>,
    %c2_255 = arith.constant 2 : index
    %c0_256 = arith.constant 0 : index
    %c113_257 = arith.constant 113 : index
    %285 = vector.load %arg11[%c2_255, %c0_256, %c113_257] : memref<4x8x512xf32, #tpu.memory_space<vmem>>, vector<1x8x256xf32>
    %286 = vector.shape_cast %285 : vector<1x8x256xf32> to vector<8x256xf32>
    %287 = vector.broadcast %1 : vector<1x256xf32> to vector<8x256xf32>
    %288 = arith.mulf %286, %287 : vector<8x256xf32>
    %289 = arith.truncf %288 : vector<8x256xf32> to vector<8x256xbf16>
    %c16_258 = arith.constant 16 : index
    %c512_259 = arith.constant 512 : index
    %290 = vector.load %arg12[%c16_258, %c512_259] : memref<72x1024xbf16, #tpu.memory_space<vmem>>, vector<8x256xbf16>
    tpu.vector_store %arg12[%c16_258, %c512_259], %289 {strides = array<i32>} : memref<72x1024xbf16, #tpu.memory_space<vmem>>, vector<8x256xbf16>,
    %c3_260 = arith.constant 3 : index
    %c0_261 = arith.constant 0 : index
    %c113_262 = arith.constant 113 : index
    %291 = vector.load %arg11[%c3_260, %c0_261, %c113_262] : memref<4x8x512xf32, #tpu.memory_space<vmem>>, vector<1x8x256xf32>
    %292 = vector.shape_cast %291 : vector<1x8x256xf32> to vector<8x256xf32>
    %293 = vector.broadcast %1 : vector<1x256xf32> to vector<8x256xf32>
    %294 = arith.mulf %292, %293 : vector<8x256xf32>
    %295 = arith.truncf %294 : vector<8x256xf32> to vector<8x256xbf16>
    %c16_263 = arith.constant 16 : index
    %c768_264 = arith.constant 768 : index
    %296 = vector.load %arg12[%c16_263, %c768_264] : memref<72x1024xbf16, #tpu.memory_space<vmem>>, vector<8x256xbf16>
    tpu.vector_store %arg12[%c16_263, %c768_264], %295 {strides = array<i32>} : memref<72x1024xbf16, #tpu.memory_space<vmem>>, vector<8x256xbf16>,
    %c0_265 = arith.constant 0 : index
    %c0_266 = arith.constant 0 : index
    %c127_267 = arith.constant 127 : index
    %297 = vector.load %arg11[%c0_265, %c0_266, %c127_267] : memref<4x8x512xf32, #tpu.memory_space<vmem>>, vector<1x8x256xf32>
    %298 = vector.shape_cast %297 : vector<1x8x256xf32> to vector<8x256xf32>
    %299 = vector.broadcast %0 : vector<1x256xf32> to vector<8x256xf32>
    %300 = arith.mulf %298, %299 : vector<8x256xf32>
    %301 = arith.truncf %300 : vector<8x256xf32> to vector<8x256xbf16>
    %c24_268 = arith.constant 24 : index
    %c0_269 = arith.constant 0 : index
    %302 = vector.load %arg12[%c24_268, %c0_269] : memref<72x1024xbf16, #tpu.memory_space<vmem>>, vector<8x256xbf16>
    tpu.vector_store %arg12[%c24_268, %c0_269], %301 {strides = array<i32>} : memref<72x1024xbf16, #tpu.memory_space<vmem>>, vector<8x256xbf16>,
    %c1_270 = arith.constant 1 : index
    %c0_271 = arith.constant 0 : index
    %c127_272 = arith.constant 127 : index
    %303 = vector.load %arg11[%c1_270, %c0_271, %c127_272] : memref<4x8x512xf32, #tpu.memory_space<vmem>>, vector<1x8x256xf32>
    %304 = vector.shape_cast %303 : vector<1x8x256xf32> to vector<8x256xf32>
    %305 = vector.broadcast %0 : vector<1x256xf32> to vector<8x256xf32>
    %306 = arith.mulf %304, %305 : vector<8x256xf32>
    %307 = arith.truncf %306 : vector<8x256xf32> to vector<8x256xbf16>
    %c24_273 = arith.constant 24 : index
    %c256_274 = arith.constant 256 : index
    %308 = vector.load %arg12[%c24_273, %c256_274] : memref<72x1024xbf16, #tpu.memory_space<vmem>>, vector<8x256xbf16>
    tpu.vector_store %arg12[%c24_273, %c256_274], %307 {strides = array<i32>} : memref<72x1024xbf16, #tpu.memory_space<vmem>>, vector<8x256xbf16>,
    %c2_275 = arith.constant 2 : index
    %c0_276 = arith.constant 0 : index
    %c127_277 = arith.constant 127 : index
    %309 = vector.load %arg11[%c2_275, %c0_276, %c127_277] : memref<4x8x512xf32, #tpu.memory_space<vmem>>, vector<1x8x256xf32>
    %310 = vector.shape_cast %309 : vector<1x8x256xf32> to vector<8x256xf32>
    %311 = vector.broadcast %0 : vector<1x256xf32> to vector<8x256xf32>
    %312 = arith.mulf %310, %311 : vector<8x256xf32>
    %313 = arith.truncf %312 : vector<8x256xf32> to vector<8x256xbf16>
    %c24_278 = arith.constant 24 : index
    %c512_279 = arith.constant 512 : index
    %314 = vector.load %arg12[%c24_278, %c512_279] : memref<72x1024xbf16, #tpu.memory_space<vmem>>, vector<8x256xbf16>
    tpu.vector_store %arg12[%c24_278, %c512_279], %313 {strides = array<i32>} : memref<72x1024xbf16, #tpu.memory_space<vmem>>, vector<8x256xbf16>,
    %c3_280 = arith.constant 3 : index
    %c0_281 = arith.constant 0 : index
    %c127_282 = arith.constant 127 : index
    %315 = vector.load %arg11[%c3_280, %c0_281, %c127_282] : memref<4x8x512xf32, #tpu.memory_space<vmem>>, vector<1x8x256xf32>
    %316 = vector.shape_cast %315 : vector<1x8x256xf32> to vector<8x256xf32>
    %317 = vector.broadcast %0 : vector<1x256xf32> to vector<8x256xf32>
    %318 = arith.mulf %316, %317 : vector<8x256xf32>
    %319 = arith.truncf %318 : vector<8x256xf32> to vector<8x256xbf16>
    %c24_283 = arith.constant 24 : index
    %c768_284 = arith.constant 768 : index
    %320 = vector.load %arg12[%c24_283, %c768_284] : memref<72x1024xbf16, #tpu.memory_space<vmem>>, vector<8x256xbf16>
    tpu.vector_store %arg12[%c24_283, %c768_284], %319 {strides = array<i32>} : memref<72x1024xbf16, #tpu.memory_space<vmem>>, vector<8x256xbf16>,
    %c0_285 = arith.constant 0 : index
    %c0_286 = arith.constant 0 : index
    %c128_287 = arith.constant 128 : index
    %321 = vector.load %arg11[%c0_285, %c0_286, %c128_287] : memref<4x8x512xf32, #tpu.memory_space<vmem>>, vector<1x8x256xf32>
    %322 = vector.shape_cast %321 : vector<1x8x256xf32> to vector<8x256xf32>
    %323 = arith.truncf %322 : vector<8x256xf32> to vector<8x256xbf16>
    %c32_288 = arith.constant 32 : index
    %c0_289 = arith.constant 0 : index
    %324 = vector.load %arg12[%c32_288, %c0_289] : memref<72x1024xbf16, #tpu.memory_space<vmem>>, vector<8x256xbf16>
    tpu.vector_store %arg12[%c32_288, %c0_289], %323 {strides = array<i32>} : memref<72x1024xbf16, #tpu.memory_space<vmem>>, vector<8x256xbf16>,
    %c1_290 = arith.constant 1 : index
    %c0_291 = arith.constant 0 : index
    %c128_292 = arith.constant 128 : index
    %325 = vector.load %arg11[%c1_290, %c0_291, %c128_292] : memref<4x8x512xf32, #tpu.memory_space<vmem>>, vector<1x8x256xf32>
    %326 = vector.shape_cast %325 : vector<1x8x256xf32> to vector<8x256xf32>
    %327 = arith.truncf %326 : vector<8x256xf32> to vector<8x256xbf16>
    %c32_293 = arith.constant 32 : index
    %c256_294 = arith.constant 256 : index
    %328 = vector.load %arg12[%c32_293, %c256_294] : memref<72x1024xbf16, #tpu.memory_space<vmem>>, vector<8x256xbf16>
    tpu.vector_store %arg12[%c32_293, %c256_294], %327 {strides = array<i32>} : memref<72x1024xbf16, #tpu.memory_space<vmem>>, vector<8x256xbf16>,
    %c2_295 = arith.constant 2 : index
    %c0_296 = arith.constant 0 : index
    %c128_297 = arith.constant 128 : index
    %329 = vector.load %arg11[%c2_295, %c0_296, %c128_297] : memref<4x8x512xf32, #tpu.memory_space<vmem>>, vector<1x8x256xf32>
    %330 = vector.shape_cast %329 : vector<1x8x256xf32> to vector<8x256xf32>
    %331 = arith.truncf %330 : vector<8x256xf32> to vector<8x256xbf16>
    %c32_298 = arith.constant 32 : index
    %c512_299 = arith.constant 512 : index
    %332 = vector.load %arg12[%c32_298, %c512_299] : memref<72x1024xbf16, #tpu.memory_space<vmem>>, vector<8x256xbf16>
    tpu.vector_store %arg12[%c32_298, %c512_299], %331 {strides = array<i32>} : memref<72x1024xbf16, #tpu.memory_space<vmem>>, vector<8x256xbf16>,
    %c3_300 = arith.constant 3 : index
    %c0_301 = arith.constant 0 : index
    %c128_302 = arith.constant 128 : index
    %333 = vector.load %arg11[%c3_300, %c0_301, %c128_302] : memref<4x8x512xf32, #tpu.memory_space<vmem>>, vector<1x8x256xf32>
    %334 = vector.shape_cast %333 : vector<1x8x256xf32> to vector<8x256xf32>
    %335 = arith.truncf %334 : vector<8x256xf32> to vector<8x256xbf16>
    %c32_303 = arith.constant 32 : index
    %c768_304 = arith.constant 768 : index
    %336 = vector.load %arg12[%c32_303, %c768_304] : memref<72x1024xbf16, #tpu.memory_space<vmem>>, vector<8x256xbf16>
    tpu.vector_store %arg12[%c32_303, %c768_304], %335 {strides = array<i32>} : memref<72x1024xbf16, #tpu.memory_space<vmem>>, vector<8x256xbf16>,
    %c0_305 = arith.constant 0 : index
    %c0_306 = arith.constant 0 : index
    %c129_307 = arith.constant 129 : index
    %337 = vector.load %arg11[%c0_305, %c0_306, %c129_307] : memref<4x8x512xf32, #tpu.memory_space<vmem>>, vector<1x8x256xf32>
    %338 = vector.shape_cast %337 : vector<1x8x256xf32> to vector<8x256xf32>
    %339 = vector.broadcast %1 : vector<1x256xf32> to vector<8x256xf32>
    %340 = arith.mulf %338, %339 : vector<8x256xf32>
    %341 = arith.truncf %340 : vector<8x256xf32> to vector<8x256xbf16>
    %c40_308 = arith.constant 40 : index
    %c0_309 = arith.constant 0 : index
    %342 = vector.load %arg12[%c40_308, %c0_309] : memref<72x1024xbf16, #tpu.memory_space<vmem>>, vector<8x256xbf16>
    tpu.vector_store %arg12[%c40_308, %c0_309], %341 {strides = array<i32>} : memref<72x1024xbf16, #tpu.memory_space<vmem>>, vector<8x256xbf16>,
    %c1_310 = arith.constant 1 : index
    %c0_311 = arith.constant 0 : index
    %c129_312 = arith.constant 129 : index
    %343 = vector.load %arg11[%c1_310, %c0_311, %c129_312] : memref<4x8x512xf32, #tpu.memory_space<vmem>>, vector<1x8x256xf32>
    %344 = vector.shape_cast %343 : vector<1x8x256xf32> to vector<8x256xf32>
    %345 = vector.broadcast %1 : vector<1x256xf32> to vector<8x256xf32>
    %346 = arith.mulf %344, %345 : vector<8x256xf32>
    %347 = arith.truncf %346 : vector<8x256xf32> to vector<8x256xbf16>
    %c40_313 = arith.constant 40 : index
    %c256_314 = arith.constant 256 : index
    %348 = vector.load %arg12[%c40_313, %c256_314] : memref<72x1024xbf16, #tpu.memory_space<vmem>>, vector<8x256xbf16>
    tpu.vector_store %arg12[%c40_313, %c256_314], %347 {strides = array<i32>} : memref<72x1024xbf16, #tpu.memory_space<vmem>>, vector<8x256xbf16>,
    %c2_315 = arith.constant 2 : index
    %c0_316 = arith.constant 0 : index
    %c129_317 = arith.constant 129 : index
    %349 = vector.load %arg11[%c2_315, %c0_316, %c129_317] : memref<4x8x512xf32, #tpu.memory_space<vmem>>, vector<1x8x256xf32>
    %350 = vector.shape_cast %349 : vector<1x8x256xf32> to vector<8x256xf32>
    %351 = vector.broadcast %1 : vector<1x256xf32> to vector<8x256xf32>
    %352 = arith.mulf %350, %351 : vector<8x256xf32>
    %353 = arith.truncf %352 : vector<8x256xf32> to vector<8x256xbf16>
    %c40_318 = arith.constant 40 : index
    %c512_319 = arith.constant 512 : index
    %354 = vector.load %arg12[%c40_318, %c512_319] : memref<72x1024xbf16, #tpu.memory_space<vmem>>, vector<8x256xbf16>
    tpu.vector_store %arg12[%c40_318, %c512_319], %353 {strides = array<i32>} : memref<72x1024xbf16, #tpu.memory_space<vmem>>, vector<8x256xbf16>,
    %c3_320 = arith.constant 3 : index
    %c0_321 = arith.constant 0 : index
    %c129_322 = arith.constant 129 : index
    %355 = vector.load %arg11[%c3_320, %c0_321, %c129_322] : memref<4x8x512xf32, #tpu.memory_space<vmem>>, vector<1x8x256xf32>
    %356 = vector.shape_cast %355 : vector<1x8x256xf32> to vector<8x256xf32>
    %357 = vector.broadcast %1 : vector<1x256xf32> to vector<8x256xf32>
    %358 = arith.mulf %356, %357 : vector<8x256xf32>
    %359 = arith.truncf %358 : vector<8x256xf32> to vector<8x256xbf16>
    %c40_323 = arith.constant 40 : index
    %c768_324 = arith.constant 768 : index
    %360 = vector.load %arg12[%c40_323, %c768_324] : memref<72x1024xbf16, #tpu.memory_space<vmem>>, vector<8x256xbf16>
    tpu.vector_store %arg12[%c40_323, %c768_324], %359 {strides = array<i32>} : memref<72x1024xbf16, #tpu.memory_space<vmem>>, vector<8x256xbf16>,
    %c0_325 = arith.constant 0 : index
    %c0_326 = arith.constant 0 : index
    %c143_327 = arith.constant 143 : index
    %361 = vector.load %arg11[%c0_325, %c0_326, %c143_327] : memref<4x8x512xf32, #tpu.memory_space<vmem>>, vector<1x8x256xf32>
    %362 = vector.shape_cast %361 : vector<1x8x256xf32> to vector<8x256xf32>
    %363 = vector.broadcast %0 : vector<1x256xf32> to vector<8x256xf32>
    %364 = arith.mulf %362, %363 : vector<8x256xf32>
    %365 = arith.truncf %364 : vector<8x256xf32> to vector<8x256xbf16>
    %c48_328 = arith.constant 48 : index
    %c0_329 = arith.constant 0 : index
    %366 = vector.load %arg12[%c48_328, %c0_329] : memref<72x1024xbf16, #tpu.memory_space<vmem>>, vector<8x256xbf16>
    tpu.vector_store %arg12[%c48_328, %c0_329], %365 {strides = array<i32>} : memref<72x1024xbf16, #tpu.memory_space<vmem>>, vector<8x256xbf16>,
    %c1_330 = arith.constant 1 : index
    %c0_331 = arith.constant 0 : index
    %c143_332 = arith.constant 143 : index
    %367 = vector.load %arg11[%c1_330, %c0_331, %c143_332] : memref<4x8x512xf32, #tpu.memory_space<vmem>>, vector<1x8x256xf32>
    %368 = vector.shape_cast %367 : vector<1x8x256xf32> to vector<8x256xf32>
    %369 = vector.broadcast %0 : vector<1x256xf32> to vector<8x256xf32>
    %370 = arith.mulf %368, %369 : vector<8x256xf32>
    %371 = arith.truncf %370 : vector<8x256xf32> to vector<8x256xbf16>
    %c48_333 = arith.constant 48 : index
    %c256_334 = arith.constant 256 : index
    %372 = vector.load %arg12[%c48_333, %c256_334] : memref<72x1024xbf16, #tpu.memory_space<vmem>>, vector<8x256xbf16>
    tpu.vector_store %arg12[%c48_333, %c256_334], %371 {strides = array<i32>} : memref<72x1024xbf16, #tpu.memory_space<vmem>>, vector<8x256xbf16>,
    %c2_335 = arith.constant 2 : index
    %c0_336 = arith.constant 0 : index
    %c143_337 = arith.constant 143 : index
    %373 = vector.load %arg11[%c2_335, %c0_336, %c143_337] : memref<4x8x512xf32, #tpu.memory_space<vmem>>, vector<1x8x256xf32>
    %374 = vector.shape_cast %373 : vector<1x8x256xf32> to vector<8x256xf32>
    %375 = vector.broadcast %0 : vector<1x256xf32> to vector<8x256xf32>
    %376 = arith.mulf %374, %375 : vector<8x256xf32>
    %377 = arith.truncf %376 : vector<8x256xf32> to vector<8x256xbf16>
    %c48_338 = arith.constant 48 : index
    %c512_339 = arith.constant 512 : index
    %378 = vector.load %arg12[%c48_338, %c512_339] : memref<72x1024xbf16, #tpu.memory_space<vmem>>, vector<8x256xbf16>
    tpu.vector_store %arg12[%c48_338, %c512_339], %377 {strides = array<i32>} : memref<72x1024xbf16, #tpu.memory_space<vmem>>, vector<8x256xbf16>,
    %c3_340 = arith.constant 3 : index
    %c0_341 = arith.constant 0 : index
    %c143_342 = arith.constant 143 : index
    %379 = vector.load %arg11[%c3_340, %c0_341, %c143_342] : memref<4x8x512xf32, #tpu.memory_space<vmem>>, vector<1x8x256xf32>
    %380 = vector.shape_cast %379 : vector<1x8x256xf32> to vector<8x256xf32>
    %381 = vector.broadcast %0 : vector<1x256xf32> to vector<8x256xf32>
    %382 = arith.mulf %380, %381 : vector<8x256xf32>
    %383 = arith.truncf %382 : vector<8x256xf32> to vector<8x256xbf16>
    %c48_343 = arith.constant 48 : index
    %c768_344 = arith.constant 768 : index
    %384 = vector.load %arg12[%c48_343, %c768_344] : memref<72x1024xbf16, #tpu.memory_space<vmem>>, vector<8x256xbf16>
    tpu.vector_store %arg12[%c48_343, %c768_344], %383 {strides = array<i32>} : memref<72x1024xbf16, #tpu.memory_space<vmem>>, vector<8x256xbf16>,
    %c0_345 = arith.constant 0 : index
    %c0_346 = arith.constant 0 : index
    %c144_347 = arith.constant 144 : index
    %385 = vector.load %arg11[%c0_345, %c0_346, %c144_347] : memref<4x8x512xf32, #tpu.memory_space<vmem>>, vector<1x8x256xf32>
    %386 = vector.shape_cast %385 : vector<1x8x256xf32> to vector<8x256xf32>
    %387 = arith.truncf %386 : vector<8x256xf32> to vector<8x256xbf16>
    %c56_348 = arith.constant 56 : index
    %c0_349 = arith.constant 0 : index
    %388 = vector.load %arg12[%c56_348, %c0_349] : memref<72x1024xbf16, #tpu.memory_space<vmem>>, vector<8x256xbf16>
    tpu.vector_store %arg12[%c56_348, %c0_349], %387 {strides = array<i32>} : memref<72x1024xbf16, #tpu.memory_space<vmem>>, vector<8x256xbf16>,
    %c1_350 = arith.constant 1 : index
    %c0_351 = arith.constant 0 : index
    %c144_352 = arith.constant 144 : index
    %389 = vector.load %arg11[%c1_350, %c0_351, %c144_352] : memref<4x8x512xf32, #tpu.memory_space<vmem>>, vector<1x8x256xf32>
    %390 = vector.shape_cast %389 : vector<1x8x256xf32> to vector<8x256xf32>
    %391 = arith.truncf %390 : vector<8x256xf32> to vector<8x256xbf16>
    %c56_353 = arith.constant 56 : index
    %c256_354 = arith.constant 256 : index
    %392 = vector.load %arg12[%c56_353, %c256_354] : memref<72x1024xbf16, #tpu.memory_space<vmem>>, vector<8x256xbf16>
    tpu.vector_store %arg12[%c56_353, %c256_354], %391 {strides = array<i32>} : memref<72x1024xbf16, #tpu.memory_space<vmem>>, vector<8x256xbf16>,
    %c2_355 = arith.constant 2 : index
    %c0_356 = arith.constant 0 : index
    %c144_357 = arith.constant 144 : index
    %393 = vector.load %arg11[%c2_355, %c0_356, %c144_357] : memref<4x8x512xf32, #tpu.memory_space<vmem>>, vector<1x8x256xf32>
    %394 = vector.shape_cast %393 : vector<1x8x256xf32> to vector<8x256xf32>
    %395 = arith.truncf %394 : vector<8x256xf32> to vector<8x256xbf16>
    %c56_358 = arith.constant 56 : index
    %c512_359 = arith.constant 512 : index
    %396 = vector.load %arg12[%c56_358, %c512_359] : memref<72x1024xbf16, #tpu.memory_space<vmem>>, vector<8x256xbf16>
    tpu.vector_store %arg12[%c56_358, %c512_359], %395 {strides = array<i32>} : memref<72x1024xbf16, #tpu.memory_space<vmem>>, vector<8x256xbf16>,
    %c3_360 = arith.constant 3 : index
    %c0_361 = arith.constant 0 : index
    %c144_362 = arith.constant 144 : index
    %397 = vector.load %arg11[%c3_360, %c0_361, %c144_362] : memref<4x8x512xf32, #tpu.memory_space<vmem>>, vector<1x8x256xf32>
    %398 = vector.shape_cast %397 : vector<1x8x256xf32> to vector<8x256xf32>
    %399 = arith.truncf %398 : vector<8x256xf32> to vector<8x256xbf16>
    %c56_363 = arith.constant 56 : index
    %c768_364 = arith.constant 768 : index
    %400 = vector.load %arg12[%c56_363, %c768_364] : memref<72x1024xbf16, #tpu.memory_space<vmem>>, vector<8x256xbf16>
    tpu.vector_store %arg12[%c56_363, %c768_364], %399 {strides = array<i32>} : memref<72x1024xbf16, #tpu.memory_space<vmem>>, vector<8x256xbf16>,
    %c0_365 = arith.constant 0 : index
    %c0_366 = arith.constant 0 : index
    %c145_367 = arith.constant 145 : index
    %401 = vector.load %arg11[%c0_365, %c0_366, %c145_367] : memref<4x8x512xf32, #tpu.memory_space<vmem>>, vector<1x8x256xf32>
    %402 = vector.shape_cast %401 : vector<1x8x256xf32> to vector<8x256xf32>
    %403 = vector.broadcast %1 : vector<1x256xf32> to vector<8x256xf32>
    %404 = arith.mulf %402, %403 : vector<8x256xf32>
    %405 = arith.truncf %404 : vector<8x256xf32> to vector<8x256xbf16>
    %c64_368 = arith.constant 64 : index
    %c0_369 = arith.constant 0 : index
    %406 = vector.load %arg12[%c64_368, %c0_369] : memref<72x1024xbf16, #tpu.memory_space<vmem>>, vector<8x256xbf16>
    tpu.vector_store %arg12[%c64_368, %c0_369], %405 {strides = array<i32>} : memref<72x1024xbf16, #tpu.memory_space<vmem>>, vector<8x256xbf16>,
    %c1_370 = arith.constant 1 : index
    %c0_371 = arith.constant 0 : index
    %c145_372 = arith.constant 145 : index
    %407 = vector.load %arg11[%c1_370, %c0_371, %c145_372] : memref<4x8x512xf32, #tpu.memory_space<vmem>>, vector<1x8x256xf32>
    %408 = vector.shape_cast %407 : vector<1x8x256xf32> to vector<8x256xf32>
    %409 = vector.broadcast %1 : vector<1x256xf32> to vector<8x256xf32>
    %410 = arith.mulf %408, %409 : vector<8x256xf32>
    %411 = arith.truncf %410 : vector<8x256xf32> to vector<8x256xbf16>
    %c64_373 = arith.constant 64 : index
    %c256_374 = arith.constant 256 : index
    %412 = vector.load %arg12[%c64_373, %c256_374] : memref<72x1024xbf16, #tpu.memory_space<vmem>>, vector<8x256xbf16>
    tpu.vector_store %arg12[%c64_373, %c256_374], %411 {strides = array<i32>} : memref<72x1024xbf16, #tpu.memory_space<vmem>>, vector<8x256xbf16>,
    %c2_375 = arith.constant 2 : index
    %c0_376 = arith.constant 0 : index
    %c145_377 = arith.constant 145 : index
    %413 = vector.load %arg11[%c2_375, %c0_376, %c145_377] : memref<4x8x512xf32, #tpu.memory_space<vmem>>, vector<1x8x256xf32>
    %414 = vector.shape_cast %413 : vector<1x8x256xf32> to vector<8x256xf32>
    %415 = vector.broadcast %1 : vector<1x256xf32> to vector<8x256xf32>
    %416 = arith.mulf %414, %415 : vector<8x256xf32>
    %417 = arith.truncf %416 : vector<8x256xf32> to vector<8x256xbf16>
    %c64_378 = arith.constant 64 : index
    %c512_379 = arith.constant 512 : index
    %418 = vector.load %arg12[%c64_378, %c512_379] : memref<72x1024xbf16, #tpu.memory_space<vmem>>, vector<8x256xbf16>
    tpu.vector_store %arg12[%c64_378, %c512_379], %417 {strides = array<i32>} : memref<72x1024xbf16, #tpu.memory_space<vmem>>, vector<8x256xbf16>,
    %c3_380 = arith.constant 3 : index
    %c0_381 = arith.constant 0 : index
    %c145_382 = arith.constant 145 : index
    %419 = vector.load %arg11[%c3_380, %c0_381, %c145_382] : memref<4x8x512xf32, #tpu.memory_space<vmem>>, vector<1x8x256xf32>
    %420 = vector.shape_cast %419 : vector<1x8x256xf32> to vector<8x256xf32>
    %421 = vector.broadcast %1 : vector<1x256xf32> to vector<8x256xf32>
    %422 = arith.mulf %420, %421 : vector<8x256xf32>
    %423 = arith.truncf %422 : vector<8x256xf32> to vector<8x256xbf16>
    %c64_383 = arith.constant 64 : index
    %c768_384 = arith.constant 768 : index
    %424 = vector.load %arg12[%c64_383, %c768_384] : memref<72x1024xbf16, #tpu.memory_space<vmem>>, vector<8x256xbf16>
    tpu.vector_store %arg12[%c64_383, %c768_384], %423 {strides = array<i32>} : memref<72x1024xbf16, #tpu.memory_space<vmem>>, vector<8x256xbf16>,
    %c0_385 = arith.constant 0 : index
    %c0_386 = arith.constant 0 : index
    %425 = vector.load %arg6[%c0_385, %c0_386] : memref<8x72xbf16, #tpu.memory_space<vmem>>, vector<8x72xbf16>
    %c0_387 = arith.constant 0 : index
    %c0_388 = arith.constant 0 : index
    %426 = vector.load %arg12[%c0_387, %c0_388] : memref<72x1024xbf16, #tpu.memory_space<vmem>>, vector<72x1024xbf16>
    %cst_389 = arith.constant dense<0.000000e+00> : vector<8x1024xf32>
    %427 = tpu.matmul %425, %426, %cst_389 {dimension_numbers = #tpu.dot_dimension_numbers<[1], [0], [0], [1], [0, 0, 1, 1], [], []>} : vector<8x72xbf16>, vector<72x1024xbf16>, vector<8x1024xf32> -> vector<8x1024xf32>
    %c0_390 = arith.constant 0 : index
    %c0_391 = arith.constant 0 : index
    %428 = vector.load %arg7[%c0_390, %c0_391] : memref<8x1xf32, #tpu.memory_space<vmem>>, vector<8x1xf32>
    %429 = vector.broadcast %428 : vector<8x1xf32> to vector<8x1024xf32>
    %430 = arith.mulf %427, %429 : vector<8x1024xf32>
    %c0_392 = arith.constant 0 : index
    %c0_393 = arith.constant 0 : index
    %431 = vector.load %arg8[%c0_392, %c0_393] : memref<8x1xf32, #tpu.memory_space<vmem>>, vector<8x1xf32>
    %432 = vector.broadcast %431 : vector<8x1xf32> to vector<8x1024xf32>
    %433 = arith.addf %430, %432 : vector<8x1024xf32>
    %cst_394 = arith.constant 0.000000e+00 : f32
    %434 = vector.broadcast %cst_394 : f32 to vector<8x1024xf32>
    %435 = arith.maximumf %433, %434 : vector<8x1024xf32>
    %436 = vector.extract_strided_slice %435 {offsets = [0, 0], sizes = [8, 256], strides = [1, 1]} : vector<8x1024xf32> to vector<8x256xf32>
    %c0_395 = arith.constant 0 : index
    %c0_396 = arith.constant 0 : index
    %c0_397 = arith.constant 0 : index
    %437 = vector.load %arg9[%c0_395, %c0_396, %c0_397] : memref<4x8x256xf32, #tpu.memory_space<vmem>>, vector<1x8x256xf32>
    %438 = vector.shape_cast %437 : vector<1x8x256xf32> to vector<8x256xf32>
    %439 = vector.shape_cast %436 : vector<8x256xf32> to vector<1x8x256xf32>
    tpu.vector_store %arg9[%c0_395, %c0_396, %c0_397], %439 {strides = array<i32>} : memref<4x8x256xf32, #tpu.memory_space<vmem>>, vector<1x8x256xf32>,
    %440 = vector.extract_strided_slice %435 {offsets = [0, 256], sizes = [8, 256], strides = [1, 1]} : vector<8x1024xf32> to vector<8x256xf32>
    %c1_398 = arith.constant 1 : index
    %c0_399 = arith.constant 0 : index
    %c0_400 = arith.constant 0 : index
    %441 = vector.load %arg9[%c1_398, %c0_399, %c0_400] : memref<4x8x256xf32, #tpu.memory_space<vmem>>, vector<1x8x256xf32>
    %442 = vector.shape_cast %441 : vector<1x8x256xf32> to vector<8x256xf32>
    %443 = vector.shape_cast %440 : vector<8x256xf32> to vector<1x8x256xf32>
    tpu.vector_store %arg9[%c1_398, %c0_399, %c0_400], %443 {strides = array<i32>} : memref<4x8x256xf32, #tpu.memory_space<vmem>>, vector<1x8x256xf32>,
    %444 = vector.extract_strided_slice %435 {offsets = [0, 512], sizes = [8, 256], strides = [1, 1]} : vector<8x1024xf32> to vector<8x256xf32>
    %c2_401 = arith.constant 2 : index
    %c0_402 = arith.constant 0 : index
    %c0_403 = arith.constant 0 : index
    %445 = vector.load %arg9[%c2_401, %c0_402, %c0_403] : memref<4x8x256xf32, #tpu.memory_space<vmem>>, vector<1x8x256xf32>
    %446 = vector.shape_cast %445 : vector<1x8x256xf32> to vector<8x256xf32>
    %447 = vector.shape_cast %444 : vector<8x256xf32> to vector<1x8x256xf32>
    tpu.vector_store %arg9[%c2_401, %c0_402, %c0_403], %447 {strides = array<i32>} : memref<4x8x256xf32, #tpu.memory_space<vmem>>, vector<1x8x256xf32>,
    %448 = vector.extract_strided_slice %435 {offsets = [0, 768], sizes = [8, 256], strides = [1, 1]} : vector<8x1024xf32> to vector<8x256xf32>
    %c3_404 = arith.constant 3 : index
    %c0_405 = arith.constant 0 : index
    %c0_406 = arith.constant 0 : index
    %449 = vector.load %arg9[%c3_404, %c0_405, %c0_406] : memref<4x8x256xf32, #tpu.memory_space<vmem>>, vector<1x8x256xf32>
    %450 = vector.shape_cast %449 : vector<1x8x256xf32> to vector<8x256xf32>
    %451 = vector.shape_cast %448 : vector<8x256xf32> to vector<1x8x256xf32>
    tpu.vector_store %arg9[%c3_404, %c0_405, %c0_406], %451 {strides = array<i32>} : memref<4x8x256xf32, #tpu.memory_space<vmem>>, vector<1x8x256xf32>,
    return
  }
  func.func @transform_0(%arg0: i32) -> (i32, i32, i32) {
    %c0_i32 = arith.constant 0 : i32
    %c0_i32_0 = arith.constant 0 : i32
    %c0_i32_1 = arith.constant 0 : i32
    return %arg0, %c0_i32, %c0_i32_0 : i32, i32, i32
  }
  func.func @transform_1(%arg0: i32) -> (i32, i32) {
    %c0_i32 = arith.constant 0 : i32
    %c0_i32_0 = arith.constant 0 : i32
    %c0_i32_1 = arith.constant 0 : i32
    return %c0_i32, %c0_i32_0 : i32, i32
  }
  func.func @transform_2(%arg0: i32) -> (i32, i32) {
    %c0_i32 = arith.constant 0 : i32
    %c0_i32_0 = arith.constant 0 : i32
    %c0_i32_1 = arith.constant 0 : i32
    return %c0_i32, %c0_i32_0 : i32, i32
  }
  func.func @transform_3(%arg0: i32) -> (i32, i32) {
    %c0_i32 = arith.constant 0 : i32
    %c0_i32_0 = arith.constant 0 : i32
    %c0_i32_1 = arith.constant 0 : i32
    return %c0_i32, %c0_i32_0 : i32, i32
  }
  func.func @transform_4(%arg0: i32) -> (i32, i32) {
    %c0_i32 = arith.constant 0 : i32
    %c0_i32_0 = arith.constant 0 : i32
    %c0_i32_1 = arith.constant 0 : i32
    return %c0_i32, %c0_i32_0 : i32, i32
  }
  func.func @transform_5(%arg0: i32) -> (i32, i32) {
    %c0_i32 = arith.constant 0 : i32
    %c0_i32_0 = arith.constant 0 : i32
    %c0_i32_1 = arith.constant 0 : i32
    return %c0_i32, %c0_i32_0 : i32, i32
  }
  func.func @transform_6(%arg0: i32) -> (i32, i32) {
    %c0_i32 = arith.constant 0 : i32
    %c0_i32_0 = arith.constant 0 : i32
    %c0_i32_1 = arith.constant 0 : i32
    return %c0_i32, %c0_i32_0 : i32, i32
  }
  func.func @transform_7(%arg0: i32) -> (i32, i32) {
    %c0_i32 = arith.constant 0 : i32
    %c0_i32_0 = arith.constant 0 : i32
    %c0_i32_1 = arith.constant 0 : i32
    return %c0_i32, %c0_i32_0 : i32, i32
  }
  func.func @transform_8(%arg0: i32) -> (i32, i32, i32) {
    %c0_i32 = arith.constant 0 : i32
    %c0_i32_0 = arith.constant 0 : i32
    %c0_i32_1 = arith.constant 0 : i32
    return %arg0, %c0_i32, %c0_i32_0 : i32, i32, i32
  }
}

</mosaic_0001>

<llo_original>
// kernel: tpu_custom_call.1
$region0: #{tpu_custom_call.1}
  #allocation0 [shape = 'u32[]', space=smem, size = 0x4, offset = 0x4, fixed_abs, tag = 'smem constant byte address 0x4 - core index']
  #allocation1 [shape = 'u32[72,128]{1,0:T(1,128)}', space=vmem, size = 0x9000, scoped, tag = 'internal scratch']
  #allocation2 [shape = 'f32[4,8,512]{2,1,0:T(8,128)}', space=vmem, size = 0x10000, scoped, tag = 'scratch operand']
  #allocation3 [shape = 'f32[4,8,512]{2,1,0:T(8,128)}', space=vmem, size = 0x10000, scoped, tag = 'scratch operand']
  #allocation4 [shape = 'bf16[72,1024]{1,0:T(8,128)(2,1)}', space=vmem, size = 0x24000, scoped, tag = 'scratch operand']
  %s0 = inlined_call_operand.hbm [shape: f32[8,4,256], index: 0, kind: input, shape index: {}]
  %s1 = inlined_call_operand.vmem [shape: f32[2,256], index: 1, kind: input, shape index: {}]
  %s2 = inlined_call_operand.vmem [shape: bf16[8,72], index: 2, kind: input, shape index: {}]
  %s3 = inlined_call_operand.vmem [shape: f32[8,1], index: 3, kind: input, shape index: {}]
  %s4 = inlined_call_operand.vmem [shape: f32[8,1], index: 4, kind: input, shape index: {}]
  %s5 = inlined_call_operand.vmem [shape: bf16[8,72], index: 5, kind: input, shape index: {}]
  %s6 = inlined_call_operand.vmem [shape: f32[8,1], index: 6, kind: input, shape index: {}]
  %s7 = inlined_call_operand.vmem [shape: f32[8,1], index: 7, kind: input, shape index: {}]
  %s8 = inlined_call_operand.hbm [shape: f32[8,8,256], index: 8, kind: output, shape index: {}]
  %s9 = sld [smem:[#allocation0]]
  $region69: #{tpu_custom_call.1} parent=0
    _
  %s11 = ssub.s32 1, %s9
  %s12 = scalar_select 0, %s11, %s9
  $region1: #{tpu_custom_call.1} parent=0
    #allocation5 [shape = 'u8[32768]{0}', space=vmem, size = 0x8000, scoped, tag = 'input window, operand 0']
    #allocation6 [shape = 's32[2]{0}', space=sflag, size = 0x8, scoped, tag = 'scoped memory for tpu_custom_call.1']
    #allocation7 [shape = 's32[2]{0}', space=sflag, size = 0x8, scoped, tag = 'scoped memory for tpu_custom_call.1']
    #allocation8 [shape = 'u8[65536]{0}', space=vmem, size = 0x10000, scoped, tag = 'output window, operand 0']
    %13 = vsyncpa [#allocation6], 0
    %s14 = scalar_lea.sflag [#allocation6], 1
    %15 = vsyncpa %s14, 0
    %16 = vsyncpa [#allocation7], 0
    %s17 = scalar_lea.sflag [#allocation7], 1
    %18 = vsyncpa %s17, 0
    loop: start=0, step=1, limit=4
    $region2: #{tpu_custom_call.1} parent=1 // loop_pre_header
      _
    $region3: #{tpu_custom_call.1} parent=1 // loop_header
      %s20 = sphi 0, %s24
      %p21 = scmp.ge.s32.totalorder %s20, 4
      %s30 = sphi 0, %s32
      %s33 = sphi 0, %s30
      %s34 = sphi 0, %s33
      %s50 = sphi 0, %s34
      %s54 = sphi 0, %s54
      %s56 = sphi 0, %s54
      %s57 = sphi 0, %s56
      %s71 = sphi 0, %s57
      %s75 = sphi 0, %s75
      %s77 = sphi 0, %s75
      %s78 = sphi 0, %s77
      %s92 = sphi 0, %s78
      %s96 = sphi 0, %s96
      %s98 = sphi 0, %s96
      %s99 = sphi 0, %s98
      %s113 = sphi 0, %s99
      %s117 = sphi 0, %s117
      %s119 = sphi 0, %s117
      %s120 = sphi 0, %s119
      %s134 = sphi 0, %s120
      %s138 = sphi 0, %s138
      %s140 = sphi 0, %s138
      %s141 = sphi 0, %s140
      %s155 = sphi 0, %s141
      %s159 = sphi 0, %s159
      %s161 = sphi 0, %s159
      %s162 = sphi 0, %s161
      %s176 = sphi 0, %s162
      %s180 = sphi 0, %s180
      %s182 = sphi 0, %s180
      %s183 = sphi 0, %s182
      %s197 = sphi 0, %s183
      %s203 = sphi 0, %s205
      %s206 = sphi 0, %s203
      %s207 = sphi 0, %s206
      %s223 = sphi 0, %s207
    $region4: #{tpu_custom_call.1} parent=1 // loop_header_branch
      %23 = sbr.rel (%p21) target = $region8
    $region5: #{tpu_custom_call.1} parent=1 // loop_body
      %s25 = ssub.s32 %s20, 1
      %s26 = ssub.s32 %s20, 2
      %s27 = sadd.s32 %s20, 1
      %s28 = ssub.s32 %s20, %s27
      %p29 = scmp.eq.s32.totalorder %s28, 0
      %s31 = sadd.s32 %s30, 1
      %s32 = scalar_select %p29, %s30, %s31
      %p35 = pneg %p29
      %p36 = scmp.eq.s32.totalorder %s20, 1
      %p37 = por %p35, %p36
      %p38 = scmp.ne.s32.totalorder %s30, %s33
      %p39 = scmp.eq.s32.totalorder %s20, 0
      %p40 = por %p38, %p39
      %p41 = scmp.ne.s32.totalorder %s30, %s33
      %p42 = scmp.eq.s32.totalorder %s25, 1
      %p43 = por %p41, %p42
      %p44 = scmp.ne.s32.totalorder %s33, %s34
      %p45 = scmp.eq.s32.totalorder %s25, 0
      %p46 = por %p44, %p45
      %p47 = scmp.ne.s32.totalorder %s33, %s34
      %p48 = scmp.eq.s32.totalorder %s26, 1
      %p49 = por %p47, %p48
      %p51 = scmp.ne.s32.totalorder %s34, %s50
      %p52 = scmp.eq.s32.totalorder %s26, 0
      %p53 = por %p51, %p52
      %s55 = sadd.s32 %s54, 1
      %p58 = scmp.eq.s32.totalorder %s20, 1
      %p59 = scmp.ne.s32.totalorder %s54, %s56
      %p60 = scmp.eq.s32.totalorder %s20, 0
      %p61 = por %p59, %p60
      %p62 = scmp.ne.s32.totalorder %s54, %s56
      %p63 = scmp.eq.s32.totalorder %s25, 1
      %p64 = por %p62, %p63
      %p65 = scmp.ne.s32.totalorder %s56, %s57
      %p66 = scmp.eq.s32.totalorder %s25, 0
      %p67 = por %p65, %p66
      %p68 = scmp.ne.s32.totalorder %s56, %s57
      %p69 = scmp.eq.s32.totalorder %s26, 1
      %p70 = por %p68, %p69
      %p72 = scmp.ne.s32.totalorder %s57, %s71
      %p73 = scmp.eq.s32.totalorder %s26, 0
      %p74 = por %p72, %p73
      %s76 = sadd.s32 %s75, 1
      %p79 = scmp.eq.s32.totalorder %s20, 1
      %p80 = scmp.ne.s32.totalorder %s75, %s77
      %p81 = scmp.eq.s32.totalorder %s20, 0
      %p82 = por %p80, %p81
      %p83 = scmp.ne.s32.totalorder %s75, %s77
      %p84 = scmp.eq.s32.totalorder %s25, 1
      %p85 = por %p83, %p84
      %p86 = scmp.ne.s32.totalorder %s77, %s78
      %p87 = scmp.eq.s32.totalorder %s25, 0
      %p88 = por %p86, %p87
      %p89 = scmp.ne.s32.totalorder %s77, %s78
      %p90 = scmp.eq.s32.totalorder %s26, 1
      %p91 = por %p89, %p90
      %p93 = scmp.ne.s32.totalorder %s78, %s92
      %p94 = scmp.eq.s32.totalorder %s26, 0
      %p95 = por %p93, %p94
      %s97 = sadd.s32 %s96, 1
      %p100 = scmp.eq.s32.totalorder %s20, 1
      %p101 = scmp.ne.s32.totalorder %s96, %s98
      %p102 = scmp.eq.s32.totalorder %s20, 0
      %p103 = por %p101, %p102
      %p104 = scmp.ne.s32.totalorder %s96, %s98
      %p105 = scmp.eq.s32.totalorder %s25, 1
      %p106 = por %p104, %p105
      %p107 = scmp.ne.s32.totalorder %s98, %s99
      %p108 = scmp.eq.s32.totalorder %s25, 0
      %p109 = por %p107, %p108
      %p110 = scmp.ne.s32.totalorder %s98, %s99
      %p111 = scmp.eq.s32.totalorder %s26, 1
      %p112 = por %p110, %p111
      %p114 = scmp.ne.s32.totalorder %s99, %s113
      %p115 = scmp.eq.s32.totalorder %s26, 0
      %p116 = por %p114, %p115
      %s118 = sadd.s32 %s117, 1
      %p121 = scmp.eq.s32.totalorder %s20, 1
      %p122 = scmp.ne.s32.totalorder %s117, %s119
      %p123 = scmp.eq.s32.totalorder %s20, 0
      %p124 = por %p122, %p123
      %p125 = scmp.ne.s32.totalorder %s117, %s119
      %p126 = scmp.eq.s32.totalorder %s25, 1
      %p127 = por %p125, %p126
      %p128 = scmp.ne.s32.totalorder %s119, %s120
      %p129 = scmp.eq.s32.totalorder %s25, 0
      %p130 = por %p128, %p129
      %p131 = scmp.ne.s32.totalorder %s119, %s120
      %p132 = scmp.eq.s32.totalorder %s26, 1
      %p133 = por %p131, %p132
      %p135 = scmp.ne.s32.totalorder %s120, %s134
      %p136 = scmp.eq.s32.totalorder %s26, 0
      %p137 = por %p135, %p136
      %s139 = sadd.s32 %s138, 1
      %p142 = scmp.eq.s32.totalorder %s20, 1
      %p143 = scmp.ne.s32.totalorder %s138, %s140
      %p144 = scmp.eq.s32.totalorder %s20, 0
      %p145 = por %p143, %p144
      %p146 = scmp.ne.s32.totalorder %s138, %s140
      %p147 = scmp.eq.s32.totalorder %s25, 1
      %p148 = por %p146, %p147
      %p149 = scmp.ne.s32.totalorder %s140, %s141
      %p150 = scmp.eq.s32.totalorder %s25, 0
      %p151 = por %p149, %p150
      %p152 = scmp.ne.s32.totalorder %s140, %s141
      %p153 = scmp.eq.s32.totalorder %s26, 1
      %p154 = por %p152, %p153
      %p156 = scmp.ne.s32.totalorder %s141, %s155
      %p157 = scmp.eq.s32.totalorder %s26, 0
      %p158 = por %p156, %p157
      %s160 = sadd.s32 %s159, 1
      %p163 = scmp.eq.s32.totalorder %s20, 1
      %p164 = scmp.ne.s32.totalorder %s159, %s161
      %p165 = scmp.eq.s32.totalorder %s20, 0
      %p166 = por %p164, %p165
      %p167 = scmp.ne.s32.totalorder %s159, %s161
      %p168 = scmp.eq.s32.totalorder %s25, 1
      %p169 = por %p167, %p168
      %p170 = scmp.ne.s32.totalorder %s161, %s162
      %p171 = scmp.eq.s32.totalorder %s25, 0
      %p172 = por %p170, %p171
      %p173 = scmp.ne.s32.totalorder %s161, %s162
      %p174 = scmp.eq.s32.totalorder %s26, 1
      %p175 = por %p173, %p174
      %p177 = scmp.ne.s32.totalorder %s162, %s176
      %p178 = scmp.eq.s32.totalorder %s26, 0
      %p179 = por %p177, %p178
      %s181 = sadd.s32 %s180, 1
      %p184 = scmp.eq.s32.totalorder %s20, 1
      %p185 = scmp.ne.s32.totalorder %s180, %s182
      %p186 = scmp.eq.s32.totalorder %s20, 0
      %p187 = por %p185, %p186
      %p188 = scmp.ne.s32.totalorder %s180, %s182
      %p189 = scmp.eq.s32.totalorder %s25, 1
      %p190 = por %p188, %p189
      %p191 = scmp.ne.s32.totalorder %s182, %s183
      %p192 = scmp.eq.s32.totalorder %s25, 0
      %p193 = por %p191, %p192
      %p194 = scmp.ne.s32.totalorder %s182, %s183
      %p195 = scmp.eq.s32.totalorder %s26, 1
      %p196 = por %p194, %p195
      %p198 = scmp.ne.s32.totalorder %s183, %s197
      %p199 = scmp.eq.s32.totalorder %s26, 0
      %p200 = por %p198, %p199
      %s201 = ssub.s32 %s20, %s27
      %p202 = scmp.eq.s32.totalorder %s201, 0
      %s204 = sadd.s32 %s203, 1
      %s205 = scalar_select %p202, %s203, %s204
      %p208 = pneg %p202
      %p209 = scmp.eq.s32.totalorder %s20, 1
      %p210 = por %p208, %p209
      %p211 = scmp.ne.s32.totalorder %s203, %s206
      %p212 = scmp.eq.s32.totalorder %s20, 0
      %p213 = por %p211, %p212
      %p214 = scmp.ne.s32.totalorder %s203, %s206
      %p215 = scmp.eq.s32.totalorder %s25, 1
      %p216 = por %p214, %p215
      %p217 = scmp.ne.s32.totalorder %s206, %s207
      %p218 = scmp.eq.s32.totalorder %s25, 0
      %p219 = por %p217, %p218
      %p220 = scmp.ne.s32.totalorder %s206, %s207
      %p221 = scmp.eq.s32.totalorder %s26, 1
      %p222 = por %p220, %p221
      %p224 = scmp.ne.s32.totalorder %s207, %s223
      %p225 = scmp.eq.s32.totalorder %s26, 0
      %p226 = por %p224, %p225
      %p227 = scmp.le.s32.totalorder 1, %s20
      %p228 = scmp.lt.s32.totalorder %s20, 3
      %p229 = pnand %p227, %p228
      %p230 = pneg %p229
      // Predicated region
      $region9: #{tpu_custom_call.1} parent=5 // pred_check
        _
      $region10: #{tpu_custom_call.1} parent=5 // pred_check_branch
        %232 = sbr.rel (%p229) target = $region12
      $region11: #{tpu_custom_call.1} parent=5 // pred_region
        %s233 = ssub.s32 %s20, 1
        // Predicated region
        $region13: #{tpu_custom_call.1} parent=11 // pred_check
          %p234 = pneg %p67
        $region14: #{tpu_custom_call.1} parent=11 // pred_check_branch
          %236 = sbr.rel (%p234) target = $region16
        $region15: #{tpu_custom_call.1} parent=11 // pred_region
          _
        $region16: #{tpu_custom_call.1} parent=11 // pred_fallthru
          _
        // Predicated region
        $region17: #{tpu_custom_call.1} parent=11 // pred_check
          %p237 = pneg %p88
        $region18: #{tpu_custom_call.1} parent=11 // pred_check_branch
          %239 = sbr.rel (%p237) target = $region20
        $region19: #{tpu_custom_call.1} parent=11 // pred_region
          _
        $region20: #{tpu_custom_call.1} parent=11 // pred_fallthru
          _
        // Predicated region
        $region21: #{tpu_custom_call.1} parent=11 // pred_check
          %p240 = pneg %p109
        $region22: #{tpu_custom_call.1} parent=11 // pred_check_branch
          %242 = sbr.rel (%p240) target = $region24
        $region23: #{tpu_custom_call.1} parent=11 // pred_region
          _
        $region24: #{tpu_custom_call.1} parent=11 // pred_fallthru
          _
        // Predicated region
        $region25: #{tpu_custom_call.1} parent=11 // pred_check
          %p243 = pneg %p130
        $region26: #{tpu_custom_call.1} parent=11 // pred_check_branch
          %245 = sbr.rel (%p243) target = $region28
        $region27: #{tpu_custom_call.1} parent=11 // pred_region
          _
        $region28: #{tpu_custom_call.1} parent=11 // pred_fallthru
          _
        // Predicated region
        $region29: #{tpu_custom_call.1} parent=11 // pred_check
          %p246 = pneg %p151
        $region30: #{tpu_custom_call.1} parent=11 // pred_check_branch
          %248 = sbr.rel (%p246) target = $region32
        $region31: #{tpu_custom_call.1} parent=11 // pred_region
          _
        $region32: #{tpu_custom_call.1} parent=11 // pred_fallthru
          _
        // Predicated region
        $region33: #{tpu_custom_call.1} parent=11 // pred_check
          %p249 = pneg %p172
        $region34: #{tpu_custom_call.1} parent=11 // pred_check_branch
          %251 = sbr.rel (%p249) target = $region36
        $region35: #{tpu_custom_call.1} parent=11 // pred_region
          _
        $region36: #{tpu_custom_call.1} parent=11 // pred_fallthru
          _
        // Predicated region
        $region37: #{tpu_custom_call.1} parent=11 // pred_check
          %p252 = pneg %p193
        $region38: #{tpu_custom_call.1} parent=11 // pred_check_branch
          %254 = sbr.rel (%p252) target = $region40
        $region39: #{tpu_custom_call.1} parent=11 // pred_region
          _
        $region40: #{tpu_custom_call.1} parent=11 // pred_fallthru
          _
      $region12: #{tpu_custom_call.1} parent=5 // pred_fallthru
        _
      %p255 = scmp.lt.s32.totalorder %s20, 2
      // Predicated region
      $region41: #{tpu_custom_call.1} parent=5 // pred_check
        %p256 = pneg %p255
      $region42: #{tpu_custom_call.1} parent=5 // pred_check_branch
        %258 = sbr.rel (%p256) target = $region44
      $region43: #{tpu_custom_call.1} parent=5 // pred_region
        // Predicated region
        $region45: #{tpu_custom_call.1} parent=43 // pred_check
          %p259 = pneg %p40
        $region46: #{tpu_custom_call.1} parent=43 // pred_check_branch
          %261 = sbr.rel (%p259) target = $region48
        $region47: #{tpu_custom_call.1} parent=43 // pred_region
          %s262 = sand.u32 %s30, 1
          %s263 = scalar_lea.sflag [#allocation6], %s262
          %s264 = sand.u32 %s30, 1
          %s265 = smul.addr %s264, 32
          %s266 = scalar_lea.vmem [#allocation5], %s265
          %s267 = smul.u32 4, %s20
          %269 = vsyncadd %s263, 0
          %s270 = smul.addr %s267, 2
          %s271 = smul.addr %s270, 4
          %s272 = scalar_lea.hbm %s0, %s271
          %s273 = sshll.u32 %s272, 4
          %s274 = int_to_ptr.hbm [resolvable:$true] %s273
          %s275 = sshll.u32 %s266, 4
          %s276 = int_to_ptr.vmem [resolvable:$true] %s275
          %281 = dma.hbm_to_vmem [thread:$0]  %s274, 512, %s276, %s263, 128, 128, 8
        $region48: #{tpu_custom_call.1} parent=43 // pred_fallthru
          _
      $region44: #{tpu_custom_call.1} parent=5 // pred_fallthru
        _
      %p282 = scmp.le.s32.totalorder 1, %s20
      %p283 = scmp.lt.s32.totalorder %s20, 3
      %p284 = pnand %p282, %p283
      %p285 = pneg %p284
      // Predicated region
      $region49: #{tpu_custom_call.1} parent=5 // pred_check
        _
      $region50: #{tpu_custom_call.1} parent=5 // pred_check_branch
        %287 = sbr.rel (%p284) target = $region52
      $region51: #{tpu_custom_call.1} parent=5 // pred_region
        %s288 = ssub.s32 %s20, 1
        %s289 = sand.u32 %s33, 1
        %s290 = scalar_lea.sflag [#allocation6], %s289
        %s291 = sand.u32 %s33, 1
        %s292 = smul.addr %s291, 32
        %s293 = scalar_lea.vmem [#allocation5], %s292
        // Predicated region
        $region53: #{tpu_custom_call.1} parent=51 // pred_check
          %p294 = pneg %p46
        $region54: #{tpu_custom_call.1} parent=51 // pred_check_branch
          %296 = sbr.rel (%p294) target = $region56
        $region55: #{tpu_custom_call.1} parent=51 // pred_region
          %298 = dma.done %s290, 512
        $region56: #{tpu_custom_call.1} parent=51 // pred_fallthru
          _
        %s299 = sand.u32 %s33, 1
        %s300 = scalar_lea.sflag [#allocation6], %s299
        %s301 = sand.u32 %s33, 1
        %s302 = smul.addr %s301, 32
        %s303 = scalar_lea.vmem [#allocation5], %s302
        %p304 = pneg %p46
        %p305 = pneg %p43
        %p306 = pneg %p67
        %p307 = pneg %p64
        %p308 = pneg %p88
        %p309 = pneg %p85
        %p310 = pneg %p109
        %p311 = pneg %p106
        %p312 = pneg %p130
        %p313 = pneg %p127
        %p314 = pneg %p151
        %p315 = pneg %p148
        %p316 = pneg %p172
        %p317 = pneg %p169
        %p318 = pneg %p193
        %p319 = pneg %p190
        %p320 = pneg %p219
        %p321 = pneg %p216
        %s322 = sand.u32 %s206, 1
        %s323 = scalar_lea.sflag [#allocation7], %s322
        %s324 = sand.u32 %s206, 1
        %s325 = smul.addr %s324, 64
        %s326 = scalar_lea.vmem [#allocation8], %s325
        %s327 = smul.u32 4, %s25
        %s328 = smul.u32 4, %s25
        %v330 = vld [vmem:[%s1] ss:$2 sm:$0x3]
        %s331 = scalar_lea.vmem %s1, 1
        %v332 = vld [vmem:[%s331] ss:$2 sm:$0x3]
        %333 = vst [vmem:[#allocation2] sm:$0xf0] 0.0
        %334 = vst [vmem:[#allocation2 + $0x8] sm:$0xf0] 0.0
        %335 = vst [vmem:[#allocation2 + $0x10] sm:$0xf0] 0.0
        %336 = vst [vmem:[#allocation2 + $0x18] sm:$0xf0] 0.0
        %337 = vst [vmem:[#allocation2 + $0x20] sm:$0xf0] 0.0
        %338 = vst [vmem:[#allocation2 + $0x28] sm:$0xf0] 0.0
        %339 = vst [vmem:[#allocation2 + $0x30] sm:$0xf0] 0.0
        %340 = vst [vmem:[#allocation2 + $0x38] sm:$0xf0] 0.0
        %341 = vst [vmem:[#allocation2 + $0x40] sm:$0xf0] 0.0
        %342 = vst [vmem:[#allocation2 + $0x48] sm:$0xf0] 0.0
        %343 = vst [vmem:[#allocation2 + $0x50] sm:$0xf0] 0.0
        %344 = vst [vmem:[#allocation2 + $0x58] sm:$0xf0] 0.0
        %345 = vst [vmem:[#allocation2 + $0x60] sm:$0xf0] 0.0
        %346 = vst [vmem:[#allocation2 + $0x68] sm:$0xf0] 0.0
        %347 = vst [vmem:[#allocation2 + $0x70] sm:$0xf0] 0.0
        %348 = vst [vmem:[#allocation2 + $0x78] sm:$0xf0] 0.0
        %349 = vst [vmem:[#allocation2] sm:$0xff] 0.0
        %350 = vst [vmem:[#allocation2 + $0x20] sm:$0xff] 0.0
        %351 = vst [vmem:[#allocation2 + $0x40] sm:$0xff] 0.0
        %352 = vst [vmem:[#allocation2 + $0x60] sm:$0xff] 0.0
        %353 = vst [vmem:[#allocation2 + $0x18] sm:$0xff] 0.0
        %354 = vst [vmem:[#allocation2 + $0x38] sm:$0xff] 0.0
        %355 = vst [vmem:[#allocation2 + $0x58] sm:$0xff] 0.0
        %356 = vst [vmem:[#allocation2 + $0x78] sm:$0xff] 0.0
        %v357 = vld [vmem:[%s293] sm:$0xff]
        %v358 = vld [vmem:[%s293 + $0x8] sm:$0xff]
        %v359 = vld [vmem:[%s293 + $0x10] sm:$0xff]
        %v360 = vld [vmem:[%s293 + $0x18] sm:$0xff]
        %365 = vst [vmem:[#allocation1] ss:$2 sm:$0xff] %v357
        %v366 = vld.sshfl [vmem:[#allocation1] sm:$0xff pattern:$0x75316420]
        %v367 = vld.sshfl [vmem:[#allocation1 + $0x8] sm:$0xff pattern:$0x75316420]
        %s368 = scalar_lea.vmem [#allocation1], 16
        %369 = vst [vmem:[%s368] ss:$2 sm:$0xff] %v358
        %v370 = vld.sshfl [vmem:[#allocation1 + $0x10] sm:$0xff pattern:$0x75316420]
        %v371 = vld.sshfl [vmem:[#allocation1 + $0x18] sm:$0xff pattern:$0x75316420]
        %s372 = scalar_lea.vmem [#allocation1], 32
        %373 = vst [vmem:[%s372] ss:$2 sm:$0xff] %v359
        %v374 = vld.sshfl [vmem:[#allocation1 + $0x20] sm:$0xff pattern:$0x75316420]
        %v375 = vld.sshfl [vmem:[#allocation1 + $0x28] sm:$0xff pattern:$0x75316420]
        %s376 = scalar_lea.vmem [#allocation1], 48
        %377 = vst [vmem:[%s376] ss:$2 sm:$0xff] %v360
        %v378 = vld.sshfl [vmem:[#allocation1 + $0x30] sm:$0xff pattern:$0x75316420]
        %v379 = vld.sshfl [vmem:[#allocation1 + $0x38] sm:$0xff pattern:$0x75316420]
        %388 = vst [vmem:[#allocation2 + $0x8] sm:$0xf] %v366
        %389 = vst [vmem:[#allocation2 + $0x10] sm:$0xf] %v367
        %390 = vst [vmem:[#allocation2 + $0x28] sm:$0xf] %v370
        %391 = vst [vmem:[#allocation2 + $0x30] sm:$0xf] %v371
        %392 = vst [vmem:[#allocation2 + $0x48] sm:$0xf] %v374
        %393 = vst [vmem:[#allocation2 + $0x50] sm:$0xf] %v375
        %394 = vst [vmem:[#allocation2 + $0x68] sm:$0xf] %v378
        %395 = vst [vmem:[#allocation2 + $0x70] sm:$0xf] %v379
        %v396 = vld [vmem:[#allocation2] sm:$0xff]
        %v397 = vld [vmem:[#allocation2 + $0x8] sm:$0xff]
        %v398 = vld [vmem:[#allocation2 + $0x10] sm:$0xff]
        %v400 = vperm.slane %v330, 0
        %v401 = vperm.slane %v330, 1
        %402 = vrot.lane.b32.xlu0 %v400, 111
        %v403 = vpop.permute.xlu0 %402
        %404 = vrot.lane.b32.xlu0 %v401, 111
        %v405 = vpop.permute.xlu0 %404
        %vm406 = vcmask 908288
        %v407 = vsel %vm406, %v403, %v405
        %v411 = vmul.f32 %v396, %v403
        %v412 = vmul.f32 %v397, %v407
        %v413 = vmul.f32 %v398, %v405
        %v414 = vpack.c.bf16 %v412, %v411
        %v415 = vpack.c.bf16 %v413, %v413
        %418 = vrot.lane.b32.xlu0 %v414, 17
        %v419 = vpop.permute.xlu0 %418
        %420 = vrot.lane.b32.xlu0 %v415, 17
        %v421 = vpop.permute.xlu0 %420
        %v422 = vrot.slane %v419, 4
        %v423 = vrot.slane %v421, 4
        %vm424 = vcmask 1043456
        %v425 = vsel %vm424, %v422, %v423
        %vm426 = vcmask 138240
        %v427 = vsel %vm426, %v419, %v425
        %429 = vst [vmem:[#allocation4] sm:$0xff] %v427
        %s430 = scalar_lea.vmem [#allocation2], 32
        %v431 = vld [vmem:[%s430] sm:$0xff]
        %v432 = vld [vmem:[%s430 + $0x8] sm:$0xff]
        %v433 = vld [vmem:[%s430 + $0x10] sm:$0xff]
        %v434 = vmul.f32 %v431, %v403
        %v435 = vmul.f32 %v432, %v407
        %v436 = vmul.f32 %v433, %v405
        %v437 = vpack.c.bf16 %v435, %v434
        %v438 = vpack.c.bf16 %v436, %v436
        %441 = vrot.lane.b32.xlu0 %v437, 17
        %v442 = vpop.permute.xlu0 %441
        %443 = vrot.lane.b32.xlu0 %v438, 17
        %v444 = vpop.permute.xlu0 %443
        %v445 = vrot.slane %v442, 4
        %v446 = vrot.slane %v444, 4
        %v447 = vsel %vm424, %v445, %v446
        %v448 = vsel %vm426, %v442, %v447
        %450 = vst [vmem:[#allocation4 + $0x8] sm:$0xff] %v448
        %s451 = scalar_lea.vmem [#allocation2], 64
        %v452 = vld [vmem:[%s451] sm:$0xff]
        %v453 = vld [vmem:[%s451 + $0x8] sm:$0xff]
        %v454 = vld [vmem:[%s451 + $0x10] sm:$0xff]
        %v455 = vmul.f32 %v452, %v403
        %v456 = vmul.f32 %v453, %v407
        %v457 = vmul.f32 %v454, %v405
        %v458 = vpack.c.bf16 %v456, %v455
        %v459 = vpack.c.bf16 %v457, %v457
        %462 = vrot.lane.b32.xlu0 %v458, 17
        %v463 = vpop.permute.xlu0 %462
        %464 = vrot.lane.b32.xlu0 %v459, 17
        %v465 = vpop.permute.xlu0 %464
        %v466 = vrot.slane %v463, 4
        %v467 = vrot.slane %v465, 4
        %v468 = vsel %vm424, %v466, %v467
        %v469 = vsel %vm426, %v463, %v468
        %471 = vst [vmem:[#allocation4 + $0x10] sm:$0xff] %v469
        %s472 = scalar_lea.vmem [#allocation2], 96
        %v473 = vld [vmem:[%s472] sm:$0xff]
        %v474 = vld [vmem:[%s472 + $0x8] sm:$0xff]
        %v475 = vld [vmem:[%s472 + $0x10] sm:$0xff]
        %v476 = vmul.f32 %v473, %v403
        %v477 = vmul.f32 %v474, %v407
        %v478 = vmul.f32 %v475, %v405
        %v479 = vpack.c.bf16 %v477, %v476
        %v480 = vpack.c.bf16 %v478, %v478
        %483 = vrot.lane.b32.xlu0 %v479, 17
        %v484 = vpop.permute.xlu0 %483
        %485 = vrot.lane.b32.xlu0 %v480, 17
        %v486 = vpop.permute.xlu0 %485
        %v487 = vrot.slane %v484, 4
        %v488 = vrot.slane %v486, 4
        %v489 = vsel %vm424, %v487, %v488
        %v490 = vsel %vm426, %v484, %v489
        %492 = vst [vmem:[#allocation4 + $0x18] sm:$0xff] %v490
        %v493 = vld [vmem:[#allocation2] sm:$0xff]
        %v494 = vld [vmem:[#allocation2 + $0x8] sm:$0xff]
        %v495 = vld [vmem:[#allocation2 + $0x10] sm:$0xff]
        %v496 = vpack.c.bf16 %v494, %v493
        %v497 = vpack.c.bf16 %v495, %v495
        %500 = vrot.lane.b32.xlu0 %v496, 16
        %v501 = vpop.permute.xlu0 %500
        %502 = vrot.lane.b32.xlu0 %v497, 16
        %v503 = vpop.permute.xlu0 %502
        %v504 = vrot.slane %v501, 4
        %v505 = vrot.slane %v503, 4
        %v506 = vsel %vm424, %v504, %v505
        %vm507 = vcmask 130048
        %v508 = vsel %vm507, %v501, %v506
        %510 = vst [vmem:[#allocation4 + $0x20] sm:$0xff] %v508
        %v511 = vld [vmem:[%s430] sm:$0xff]
        %v512 = vld [vmem:[%s430 + $0x8] sm:$0xff]
        %v513 = vld [vmem:[%s430 + $0x10] sm:$0xff]
        %v514 = vpack.c.bf16 %v512, %v511
        %v515 = vpack.c.bf16 %v513, %v513
        %518 = vrot.lane.b32.xlu0 %v514, 16
        %v519 = vpop.permute.xlu0 %518
        %520 = vrot.lane.b32.xlu0 %v515, 16
        %v521 = vpop.permute.xlu0 %520
        %v522 = vrot.slane %v519, 4
        %v523 = vrot.slane %v521, 4
        %v524 = vsel %vm424, %v522, %v523
        %v525 = vsel %vm507, %v519, %v524
        %527 = vst [vmem:[#allocation4 + $0x28] sm:$0xff] %v525
        %v528 = vld [vmem:[%s451] sm:$0xff]
        %v529 = vld [vmem:[%s451 + $0x8] sm:$0xff]
        %v530 = vld [vmem:[%s451 + $0x10] sm:$0xff]
        %v531 = vpack.c.bf16 %v529, %v528
        %v532 = vpack.c.bf16 %v530, %v530
        %535 = vrot.lane.b32.xlu0 %v531, 16
        %v536 = vpop.permute.xlu0 %535
        %537 = vrot.lane.b32.xlu0 %v532, 16
        %v538 = vpop.permute.xlu0 %537
        %v539 = vrot.slane %v536, 4
        %v540 = vrot.slane %v538, 4
        %v541 = vsel %vm424, %v539, %v540
        %v542 = vsel %vm507, %v536, %v541
        %544 = vst [vmem:[#allocation4 + $0x30] sm:$0xff] %v542
        %v545 = vld [vmem:[%s472] sm:$0xff]
        %v546 = vld [vmem:[%s472 + $0x8] sm:$0xff]
        %v547 = vld [vmem:[%s472 + $0x10] sm:$0xff]
        %v548 = vpack.c.bf16 %v546, %v545
        %v549 = vpack.c.bf16 %v547, %v547
        %552 = vrot.lane.b32.xlu0 %v548, 16
        %v553 = vpop.permute.xlu0 %552
        %554 = vrot.lane.b32.xlu0 %v549, 16
        %v555 = vpop.permute.xlu0 %554
        %v556 = vrot.slane %v553, 4
        %v557 = vrot.slane %v555, 4
        %v558 = vsel %vm424, %v556, %v557
        %v559 = vsel %vm507, %v553, %v558
        %561 = vst [vmem:[#allocation4 + $0x38] sm:$0xff] %v559
        %v562 = vld [vmem:[#allocation2] sm:$0xff]
        %v563 = vld [vmem:[#allocation2 + $0x8] sm:$0xff]
        %v564 = vld [vmem:[#allocation2 + $0x10] sm:$0xff]
        %v566 = vperm.slane %v332, 0
        %v567 = vperm.slane %v332, 1
        %568 = vrot.lane.b32.xlu0 %v566, 113
        %v569 = vpop.permute.xlu0 %568
        %570 = vrot.lane.b32.xlu0 %v567, 113
        %v571 = vpop.permute.xlu0 %570
        %vm572 = vcmask 924672
        %v573 = vsel %vm572, %v569, %v571
        %v577 = vmul.f32 %v562, %v569
        %v578 = vmul.f32 %v563, %v573
        %v579 = vmul.f32 %v564, %v571
        %v580 = vpack.c.bf16 %v578, %v577
        %v581 = vpack.c.bf16 %v579, %v579
        %584 = vrot.lane.b32.xlu0 %v580, 15
        %v585 = vpop.permute.xlu0 %584
        %586 = vrot.lane.b32.xlu0 %v581, 15
        %v587 = vpop.permute.xlu0 %586
        %v588 = vrot.slane %v585, 4
        %v589 = vrot.slane %v587, 4
        %v590 = vsel %vm424, %v588, %v589
        %vm591 = vcmask 121856
        %v592 = vsel %vm591, %v585, %v590
        %594 = vst [vmem:[#allocation4 + $0x40] sm:$0xff] %v592
        %v595 = vld [vmem:[%s430] sm:$0xff]
        %v596 = vld [vmem:[%s430 + $0x8] sm:$0xff]
        %v597 = vld [vmem:[%s430 + $0x10] sm:$0xff]
        %v598 = vmul.f32 %v595, %v569
        %v599 = vmul.f32 %v596, %v573
        %v600 = vmul.f32 %v597, %v571
        %v601 = vpack.c.bf16 %v599, %v598
        %v602 = vpack.c.bf16 %v600, %v600
        %605 = vrot.lane.b32.xlu0 %v601, 15
        %v606 = vpop.permute.xlu0 %605
        %607 = vrot.lane.b32.xlu0 %v602, 15
        %v608 = vpop.permute.xlu0 %607
        %v609 = vrot.slane %v606, 4
        %v610 = vrot.slane %v608, 4
        %v611 = vsel %vm424, %v609, %v610
        %v612 = vsel %vm591, %v606, %v611
        %614 = vst [vmem:[#allocation4 + $0x48] sm:$0xff] %v612
        %v615 = vld [vmem:[%s451] sm:$0xff]
        %v616 = vld [vmem:[%s451 + $0x8] sm:$0xff]
        %v617 = vld [vmem:[%s451 + $0x10] sm:$0xff]
        %v618 = vmul.f32 %v615, %v569
        %v619 = vmul.f32 %v616, %v573
        %v620 = vmul.f32 %v617, %v571
        %v621 = vpack.c.bf16 %v619, %v618
        %v622 = vpack.c.bf16 %v620, %v620
        %625 = vrot.lane.b32.xlu0 %v621, 15
        %v626 = vpop.permute.xlu0 %625
        %627 = vrot.lane.b32.xlu0 %v622, 15
        %v628 = vpop.permute.xlu0 %627
        %v629 = vrot.slane %v626, 4
        %v630 = vrot.slane %v628, 4
        %v631 = vsel %vm424, %v629, %v630
        %v632 = vsel %vm591, %v626, %v631
        %634 = vst [vmem:[#allocation4 + $0x50] sm:$0xff] %v632
        %v635 = vld [vmem:[%s472] sm:$0xff]
        %v636 = vld [vmem:[%s472 + $0x8] sm:$0xff]
        %v637 = vld [vmem:[%s472 + $0x10] sm:$0xff]
        %v638 = vmul.f32 %v635, %v569
        %v639 = vmul.f32 %v636, %v573
        %v640 = vmul.f32 %v637, %v571
        %v641 = vpack.c.bf16 %v639, %v638
        %v642 = vpack.c.bf16 %v640, %v640
        %645 = vrot.lane.b32.xlu0 %v641, 15
        %v646 = vpop.permute.xlu0 %645
        %647 = vrot.lane.b32.xlu0 %v642, 15
        %v648 = vpop.permute.xlu0 %647
        %v649 = vrot.slane %v646, 4
        %v650 = vrot.slane %v648, 4
        %v651 = vsel %vm424, %v649, %v650
        %v652 = vsel %vm591, %v646, %v651
        %654 = vst [vmem:[#allocation4 + $0x58] sm:$0xff] %v652
        %v655 = vld [vmem:[#allocation2] sm:$0xff]
        %v656 = vld [vmem:[#allocation2 + $0x8] sm:$0xff]
        %v657 = vld [vmem:[#allocation2 + $0x10] sm:$0xff]
        %658 = vrot.lane.b32.xlu0 %v400, 127
        %v659 = vpop.permute.xlu0 %658
        %660 = vrot.lane.b32.xlu0 %v401, 127
        %v661 = vpop.permute.xlu0 %660
        %vm662 = vcmask 1039360
        %v663 = vsel %vm662, %v659, %v661
        %v667 = vmul.f32 %v655, %v659
        %v668 = vmul.f32 %v656, %v663
        %v669 = vmul.f32 %v657, %v661
        %v670 = vpack.c.bf16 %v668, %v667
        %v671 = vpack.c.bf16 %v669, %v669
        %674 = vrot.lane.b32.xlu0 %v670, 1
        %v675 = vpop.permute.xlu0 %674
        %676 = vrot.lane.b32.xlu0 %v671, 1
        %v677 = vpop.permute.xlu0 %676
        %v678 = vrot.slane %v675, 4
        %v679 = vrot.slane %v677, 4
        %v680 = vsel %vm424, %v678, %v679
        %vm681 = vcmask 7168
        %v682 = vsel %vm681, %v675, %v680
        %684 = vst [vmem:[#allocation4 + $0x60] sm:$0xff] %v682
        %v685 = vld [vmem:[%s430] sm:$0xff]
        %v686 = vld [vmem:[%s430 + $0x8] sm:$0xff]
        %v687 = vld [vmem:[%s430 + $0x10] sm:$0xff]
        %v688 = vmul.f32 %v685, %v659
        %v689 = vmul.f32 %v686, %v663
        %v690 = vmul.f32 %v687, %v661
        %v691 = vpack.c.bf16 %v689, %v688
        %v692 = vpack.c.bf16 %v690, %v690
        %695 = vrot.lane.b32.xlu0 %v691, 1
        %v696 = vpop.permute.xlu0 %695
        %697 = vrot.lane.b32.xlu0 %v692, 1
        %v698 = vpop.permute.xlu0 %697
        %v699 = vrot.slane %v696, 4
        %v700 = vrot.slane %v698, 4
        %v701 = vsel %vm424, %v699, %v700
        %v702 = vsel %vm681, %v696, %v701
        %704 = vst [vmem:[#allocation4 + $0x68] sm:$0xff] %v702
        %v705 = vld [vmem:[%s451] sm:$0xff]
        %v706 = vld [vmem:[%s451 + $0x8] sm:$0xff]
        %v707 = vld [vmem:[%s451 + $0x10] sm:$0xff]
        %v708 = vmul.f32 %v705, %v659
        %v709 = vmul.f32 %v706, %v663
        %v710 = vmul.f32 %v707, %v661
        %v711 = vpack.c.bf16 %v709, %v708
        %v712 = vpack.c.bf16 %v710, %v710
        %715 = vrot.lane.b32.xlu0 %v711, 1
        %v716 = vpop.permute.xlu0 %715
        %717 = vrot.lane.b32.xlu0 %v712, 1
        %v718 = vpop.permute.xlu0 %717
        %v719 = vrot.slane %v716, 4
        %v720 = vrot.slane %v718, 4
        %v721 = vsel %vm424, %v719, %v720
        %v722 = vsel %vm681, %v716, %v721
        %724 = vst [vmem:[#allocation4 + $0x70] sm:$0xff] %v722
        %v725 = vld [vmem:[%s472] sm:$0xff]
        %v726 = vld [vmem:[%s472 + $0x8] sm:$0xff]
        %v727 = vld [vmem:[%s472 + $0x10] sm:$0xff]
        %v728 = vmul.f32 %v725, %v659
        %v729 = vmul.f32 %v726, %v663
        %v730 = vmul.f32 %v727, %v661
        %v731 = vpack.c.bf16 %v729, %v728
        %v732 = vpack.c.bf16 %v730, %v730
        %735 = vrot.lane.b32.xlu0 %v731, 1
        %v736 = vpop.permute.xlu0 %735
        %737 = vrot.lane.b32.xlu0 %v732, 1
        %v738 = vpop.permute.xlu0 %737
        %v739 = vrot.slane %v736, 4
        %v740 = vrot.slane %v738, 4
        %v741 = vsel %vm424, %v739, %v740
        %v742 = vsel %vm681, %v736, %v741
        %744 = vst [vmem:[#allocation4 + $0x78] sm:$0xff] %v742
        %v745 = vld [vmem:[#allocation2 + $0x8] sm:$0xff]
        %v746 = vld [vmem:[#allocation2 + $0x10] sm:$0xff]
        %v747 = vpack.c.bf16 %v746, %v745
        %748 = vst [vmem:[#allocation4 + $0x80] sm:$0xff] %v747
        %v749 = vld [vmem:[%s430 + $0x8] sm:$0xff]
        %v750 = vld [vmem:[%s430 + $0x10] sm:$0xff]
        %v751 = vpack.c.bf16 %v750, %v749
        %752 = vst [vmem:[#allocation4 + $0x88] sm:$0xff] %v751
        %v753 = vld [vmem:[%s451 + $0x8] sm:$0xff]
        %v754 = vld [vmem:[%s451 + $0x10] sm:$0xff]
        %v755 = vpack.c.bf16 %v754, %v753
        %756 = vst [vmem:[#allocation4 + $0x90] sm:$0xff] %v755
        %v757 = vld [vmem:[%s472 + $0x8] sm:$0xff]
        %v758 = vld [vmem:[%s472 + $0x10] sm:$0xff]
        %v759 = vpack.c.bf16 %v758, %v757
        %760 = vst [vmem:[#allocation4 + $0x98] sm:$0xff] %v759
        %v761 = vld [vmem:[#allocation2 + $0x8] sm:$0xff]
        %v762 = vld [vmem:[#allocation2 + $0x10] sm:$0xff]
        %v763 = vld [vmem:[#allocation2 + $0x18] sm:$0xff]
        %764 = vrot.lane.b32.xlu0 %v566, 1
        %v765 = vpop.permute.xlu0 %764
        %766 = vrot.lane.b32.xlu0 %v567, 1
        %v767 = vpop.permute.xlu0 %766
        %vm768 = vcmask 7168
        %v769 = vsel %vm768, %v765, %v767
        %v773 = vmul.f32 %v761, %v765
        %v774 = vmul.f32 %v762, %v769
        %v775 = vmul.f32 %v763, %v767
        %v776 = vpack.c.bf16 %v774, %v773
        %v777 = vpack.c.bf16 %v775, %v775
        %780 = vrot.lane.b32.xlu0 %v776, 127
        %v781 = vpop.permute.xlu0 %780
        %782 = vrot.lane.b32.xlu0 %v777, 127
        %v783 = vpop.permute.xlu0 %782
        %v784 = vrot.slane %v781, 4
        %v785 = vrot.slane %v783, 4
        %v786 = vsel %vm424, %v784, %v785
        %vm787 = vcmask 1039360
        %v788 = vsel %vm787, %v781, %v786
        %790 = vst [vmem:[#allocation4 + $0xa0] sm:$0xff] %v788
        %v791 = vld [vmem:[%s430 + $0x8] sm:$0xff]
        %v792 = vld [vmem:[%s430 + $0x10] sm:$0xff]
        %v793 = vld [vmem:[%s430 + $0x18] sm:$0xff]
        %v794 = vmul.f32 %v791, %v765
        %v795 = vmul.f32 %v792, %v769
        %v796 = vmul.f32 %v793, %v767
        %v797 = vpack.c.bf16 %v795, %v794
        %v798 = vpack.c.bf16 %v796, %v796
        %801 = vrot.lane.b32.xlu0 %v797, 127
        %v802 = vpop.permute.xlu0 %801
        %803 = vrot.lane.b32.xlu0 %v798, 127
        %v804 = vpop.permute.xlu0 %803
        %v805 = vrot.slane %v802, 4
        %v806 = vrot.slane %v804, 4
        %v807 = vsel %vm424, %v805, %v806
        %v808 = vsel %vm787, %v802, %v807
        %810 = vst [vmem:[#allocation4 + $0xa8] sm:$0xff] %v808
        %v811 = vld [vmem:[%s451 + $0x8] sm:$0xff]
        %v812 = vld [vmem:[%s451 + $0x10] sm:$0xff]
        %v813 = vld [vmem:[%s451 + $0x18] sm:$0xff]
        %v814 = vmul.f32 %v811, %v765
        %v815 = vmul.f32 %v812, %v769
        %v816 = vmul.f32 %v813, %v767
        %v817 = vpack.c.bf16 %v815, %v814
        %v818 = vpack.c.bf16 %v816, %v816
        %821 = vrot.lane.b32.xlu0 %v817, 127
        %v822 = vpop.permute.xlu0 %821
        %823 = vrot.lane.b32.xlu0 %v818, 127
        %v824 = vpop.permute.xlu0 %823
        %v825 = vrot.slane %v822, 4
        %v826 = vrot.slane %v824, 4
        %v827 = vsel %vm424, %v825, %v826
        %v828 = vsel %vm787, %v822, %v827
        %830 = vst [vmem:[#allocation4 + $0xb0] sm:$0xff] %v828
        %v831 = vld [vmem:[%s472 + $0x8] sm:$0xff]
        %v832 = vld [vmem:[%s472 + $0x10] sm:$0xff]
        %v833 = vld [vmem:[%s472 + $0x18] sm:$0xff]
        %v834 = vmul.f32 %v831, %v765
        %v835 = vmul.f32 %v832, %v769
        %v836 = vmul.f32 %v833, %v767
        %v837 = vpack.c.bf16 %v835, %v834
        %v838 = vpack.c.bf16 %v836, %v836
        %841 = vrot.lane.b32.xlu0 %v837, 127
        %v842 = vpop.permute.xlu0 %841
        %843 = vrot.lane.b32.xlu0 %v838, 127
        %v844 = vpop.permute.xlu0 %843
        %v845 = vrot.slane %v842, 4
        %v846 = vrot.slane %v844, 4
        %v847 = vsel %vm424, %v845, %v846
        %v848 = vsel %vm787, %v842, %v847
        %850 = vst [vmem:[#allocation4 + $0xb8] sm:$0xff] %v848
        %v851 = vld [vmem:[#allocation2 + $0x8] sm:$0xff]
        %v852 = vld [vmem:[#allocation2 + $0x10] sm:$0xff]
        %v853 = vld [vmem:[#allocation2 + $0x18] sm:$0xff]
        %854 = vrot.lane.b32.xlu0 %v400, 15
        %v855 = vpop.permute.xlu0 %854
        %856 = vrot.lane.b32.xlu0 %v401, 15
        %v857 = vpop.permute.xlu0 %856
        %vm858 = vcmask 121856
        %v859 = vsel %vm858, %v855, %v857
        %v863 = vmul.f32 %v851, %v855
        %v864 = vmul.f32 %v852, %v859
        %v865 = vmul.f32 %v853, %v857
        %v866 = vpack.c.bf16 %v864, %v863
        %v867 = vpack.c.bf16 %v865, %v865
        %870 = vrot.lane.b32.xlu0 %v866, 113
        %v871 = vpop.permute.xlu0 %870
        %872 = vrot.lane.b32.xlu0 %v867, 113
        %v873 = vpop.permute.xlu0 %872
        %v874 = vrot.slane %v871, 4
        %v875 = vrot.slane %v873, 4
        %v876 = vsel %vm424, %v874, %v875
        %vm877 = vcmask 924672
        %v878 = vsel %vm877, %v871, %v876
        %880 = vst [vmem:[#allocation4 + $0xc0] sm:$0xff] %v878
        %v881 = vld [vmem:[%s430 + $0x8] sm:$0xff]
        %v882 = vld [vmem:[%s430 + $0x10] sm:$0xff]
        %v883 = vld [vmem:[%s430 + $0x18] sm:$0xff]
        %v884 = vmul.f32 %v881, %v855
        %v885 = vmul.f32 %v882, %v859
        %v886 = vmul.f32 %v883, %v857
        %v887 = vpack.c.bf16 %v885, %v884
        %v888 = vpack.c.bf16 %v886, %v886
        %891 = vrot.lane.b32.xlu0 %v887, 113
        %v892 = vpop.permute.xlu0 %891
        %893 = vrot.lane.b32.xlu0 %v888, 113
        %v894 = vpop.permute.xlu0 %893
        %v895 = vrot.slane %v892, 4
        %v896 = vrot.slane %v894, 4
        %v897 = vsel %vm424, %v895, %v896
        %v898 = vsel %vm877, %v892, %v897
        %900 = vst [vmem:[#allocation4 + $0xc8] sm:$0xff] %v898
        %v901 = vld [vmem:[%s451 + $0x8] sm:$0xff]
        %v902 = vld [vmem:[%s451 + $0x10] sm:$0xff]
        %v903 = vld [vmem:[%s451 + $0x18] sm:$0xff]
        %v904 = vmul.f32 %v901, %v855
        %v905 = vmul.f32 %v902, %v859
        %v906 = vmul.f32 %v903, %v857
        %v907 = vpack.c.bf16 %v905, %v904
        %v908 = vpack.c.bf16 %v906, %v906
        %911 = vrot.lane.b32.xlu0 %v907, 113
        %v912 = vpop.permute.xlu0 %911
        %913 = vrot.lane.b32.xlu0 %v908, 113
        %v914 = vpop.permute.xlu0 %913
        %v915 = vrot.slane %v912, 4
        %v916 = vrot.slane %v914, 4
        %v917 = vsel %vm424, %v915, %v916
        %v918 = vsel %vm877, %v912, %v917
        %920 = vst [vmem:[#allocation4 + $0xd0] sm:$0xff] %v918
        %v921 = vld [vmem:[%s472 + $0x8] sm:$0xff]
        %v922 = vld [vmem:[%s472 + $0x10] sm:$0xff]
        %v923 = vld [vmem:[%s472 + $0x18] sm:$0xff]
        %v924 = vmul.f32 %v921, %v855
        %v925 = vmul.f32 %v922, %v859
        %v926 = vmul.f32 %v923, %v857
        %v927 = vpack.c.bf16 %v925, %v924
        %v928 = vpack.c.bf16 %v926, %v926
        %931 = vrot.lane.b32.xlu0 %v927, 113
        %v932 = vpop.permute.xlu0 %931
        %933 = vrot.lane.b32.xlu0 %v928, 113
        %v934 = vpop.permute.xlu0 %933
        %v935 = vrot.slane %v932, 4
        %v936 = vrot.slane %v934, 4
        %v937 = vsel %vm424, %v935, %v936
        %v938 = vsel %vm877, %v932, %v937
        %940 = vst [vmem:[#allocation4 + $0xd8] sm:$0xff] %v938
        %v941 = vld [vmem:[#allocation2 + $0x8] sm:$0xff]
        %v942 = vld [vmem:[#allocation2 + $0x10] sm:$0xff]
        %v943 = vld [vmem:[#allocation2 + $0x18] sm:$0xff]
        %v944 = vpack.c.bf16 %v942, %v941
        %v945 = vpack.c.bf16 %v943, %v943
        %948 = vrot.lane.b32.xlu0 %v944, 112
        %v949 = vpop.permute.xlu0 %948
        %950 = vrot.lane.b32.xlu0 %v945, 112
        %v951 = vpop.permute.xlu0 %950
        %v952 = vrot.slane %v949, 4
        %v953 = vrot.slane %v951, 4
        %v954 = vsel %vm424, %v952, %v953
        %vm955 = vcmask 916480
        %v956 = vsel %vm955, %v949, %v954
        %958 = vst [vmem:[#allocation4 + $0xe0] sm:$0xff] %v956
        %v959 = vld [vmem:[%s430 + $0x8] sm:$0xff]
        %v960 = vld [vmem:[%s430 + $0x10] sm:$0xff]
        %v961 = vld [vmem:[%s430 + $0x18] sm:$0xff]
        %v962 = vpack.c.bf16 %v960, %v959
        %v963 = vpack.c.bf16 %v961, %v961
        %966 = vrot.lane.b32.xlu0 %v962, 112
        %v967 = vpop.permute.xlu0 %966
        %968 = vrot.lane.b32.xlu0 %v963, 112
        %v969 = vpop.permute.xlu0 %968
        %v970 = vrot.slane %v967, 4
        %v971 = vrot.slane %v969, 4
        %v972 = vsel %vm424, %v970, %v971
        %v973 = vsel %vm955, %v967, %v972
        %975 = vst [vmem:[#allocation4 + $0xe8] sm:$0xff] %v973
        %v976 = vld [vmem:[%s451 + $0x8] sm:$0xff]
        %v977 = vld [vmem:[%s451 + $0x10] sm:$0xff]
        %v978 = vld [vmem:[%s451 + $0x18] sm:$0xff]
        %v979 = vpack.c.bf16 %v977, %v976
        %v980 = vpack.c.bf16 %v978, %v978
        %983 = vrot.lane.b32.xlu0 %v979, 112
        %v984 = vpop.permute.xlu0 %983
        %985 = vrot.lane.b32.xlu0 %v980, 112
        %v986 = vpop.permute.xlu0 %985
        %v987 = vrot.slane %v984, 4
        %v988 = vrot.slane %v986, 4
        %v989 = vsel %vm424, %v987, %v988
        %v990 = vsel %vm955, %v984, %v989
        %992 = vst [vmem:[#allocation4 + $0xf0] sm:$0xff] %v990
        %v993 = vld [vmem:[%s472 + $0x8] sm:$0xff]
        %v994 = vld [vmem:[%s472 + $0x10] sm:$0xff]
        %v995 = vld [vmem:[%s472 + $0x18] sm:$0xff]
        %v996 = vpack.c.bf16 %v994, %v993
        %v997 = vpack.c.bf16 %v995, %v995
        %1000 = vrot.lane.b32.xlu0 %v996, 112
        %v1001 = vpop.permute.xlu0 %1000
        %1002 = vrot.lane.b32.xlu0 %v997, 112
        %v1003 = vpop.permute.xlu0 %1002
        %v1004 = vrot.slane %v1001, 4
        %v1005 = vrot.slane %v1003, 4
        %v1006 = vsel %vm424, %v1004, %v1005
        %v1007 = vsel %vm955, %v1001, %v1006
        %1009 = vst [vmem:[#allocation4 + $0xf8] sm:$0xff] %v1007
        %v1010 = vld [vmem:[#allocation2 + $0x8] sm:$0xff]
        %v1011 = vld [vmem:[#allocation2 + $0x10] sm:$0xff]
        %v1012 = vld [vmem:[#allocation2 + $0x18] sm:$0xff]
        %1013 = vrot.lane.b32.xlu0 %v566, 17
        %v1014 = vpop.permute.xlu0 %1013
        %1015 = vrot.lane.b32.xlu0 %v567, 17
        %v1016 = vpop.permute.xlu0 %1015
        %vm1017 = vcmask 138240
        %v1018 = vsel %vm1017, %v1014, %v1016
        %v1022 = vmul.f32 %v1010, %v1014
        %v1023 = vmul.f32 %v1011, %v1018
        %v1024 = vmul.f32 %v1012, %v1016
        %v1025 = vpack.c.bf16 %v1023, %v1022
        %v1026 = vpack.c.bf16 %v1024, %v1024
        %1029 = vrot.lane.b32.xlu0 %v1025, 111
        %v1030 = vpop.permute.xlu0 %1029
        %1031 = vrot.lane.b32.xlu0 %v1026, 111
        %v1032 = vpop.permute.xlu0 %1031
        %v1033 = vrot.slane %v1030, 4
        %v1034 = vrot.slane %v1032, 4
        %v1035 = vsel %vm424, %v1033, %v1034
        %vm1036 = vcmask 908288
        %v1037 = vsel %vm1036, %v1030, %v1035
        %1039 = vst [vmem:[#allocation4 + $0x100] sm:$0xff] %v1037
        %v1040 = vld [vmem:[%s430 + $0x8] sm:$0xff]
        %v1041 = vld [vmem:[%s430 + $0x10] sm:$0xff]
        %v1042 = vld [vmem:[%s430 + $0x18] sm:$0xff]
        %v1043 = vmul.f32 %v1040, %v1014
        %v1044 = vmul.f32 %v1041, %v1018
        %v1045 = vmul.f32 %v1042, %v1016
        %v1046 = vpack.c.bf16 %v1044, %v1043
        %v1047 = vpack.c.bf16 %v1045, %v1045
        %1050 = vrot.lane.b32.xlu0 %v1046, 111
        %v1051 = vpop.permute.xlu0 %1050
        %1052 = vrot.lane.b32.xlu0 %v1047, 111
        %v1053 = vpop.permute.xlu0 %1052
        %v1054 = vrot.slane %v1051, 4
        %v1055 = vrot.slane %v1053, 4
        %v1056 = vsel %vm424, %v1054, %v1055
        %v1057 = vsel %vm1036, %v1051, %v1056
        %1059 = vst [vmem:[#allocation4 + $0x108] sm:$0xff] %v1057
        %v1060 = vld [vmem:[%s451 + $0x8] sm:$0xff]
        %v1061 = vld [vmem:[%s451 + $0x10] sm:$0xff]
        %v1062 = vld [vmem:[%s451 + $0x18] sm:$0xff]
        %v1063 = vmul.f32 %v1060, %v1014
        %v1064 = vmul.f32 %v1061, %v1018
        %v1065 = vmul.f32 %v1062, %v1016
        %v1066 = vpack.c.bf16 %v1064, %v1063
        %v1067 = vpack.c.bf16 %v1065, %v1065
        %1070 = vrot.lane.b32.xlu0 %v1066, 111
        %v1071 = vpop.permute.xlu0 %1070
        %1072 = vrot.lane.b32.xlu0 %v1067, 111
        %v1073 = vpop.permute.xlu0 %1072
        %v1074 = vrot.slane %v1071, 4
        %v1075 = vrot.slane %v1073, 4
        %v1076 = vsel %vm424, %v1074, %v1075
        %v1077 = vsel %vm1036, %v1071, %v1076
        %1079 = vst [vmem:[#allocation4 + $0x110] sm:$0xff] %v1077
        %v1080 = vld [vmem:[%s472 + $0x8] sm:$0xff]
        %v1081 = vld [vmem:[%s472 + $0x10] sm:$0xff]
        %v1082 = vld [vmem:[%s472 + $0x18] sm:$0xff]
        %v1083 = vmul.f32 %v1080, %v1014
        %v1084 = vmul.f32 %v1081, %v1018
        %v1085 = vmul.f32 %v1082, %v1016
        %v1086 = vpack.c.bf16 %v1084, %v1083
        %v1087 = vpack.c.bf16 %v1085, %v1085
        %1090 = vrot.lane.b32.xlu0 %v1086, 111
        %v1091 = vpop.permute.xlu0 %1090
        %1092 = vrot.lane.b32.xlu0 %v1087, 111
        %v1093 = vpop.permute.xlu0 %1092
        %v1094 = vrot.slane %v1091, 4
        %v1095 = vrot.slane %v1093, 4
        %v1096 = vsel %vm424, %v1094, %v1095
        %v1097 = vsel %vm1036, %v1091, %v1096
        %1099 = vst [vmem:[#allocation4 + $0x118] sm:$0xff] %v1097
        %v1100 = vld [vmem:[%s2] sm:$0xf]
        %v1101 = vld [vmem:[#allocation4] sm:$0xff]
        %v1102 = vld [vmem:[#allocation4 + $0x8] sm:$0xff]
        %v1103 = vld [vmem:[#allocation4 + $0x10] sm:$0xff]
        %v1104 = vld [vmem:[#allocation4 + $0x18] sm:$0xff]
        %v1105 = vld [vmem:[#allocation4 + $0x20] sm:$0xff]
        %v1106 = vld [vmem:[#allocation4 + $0x28] sm:$0xff]
        %v1107 = vld [vmem:[#allocation4 + $0x30] sm:$0xff]
        %v1108 = vld [vmem:[#allocation4 + $0x38] sm:$0xff]
        %v1109 = vld [vmem:[#allocation4 + $0x40] sm:$0xff]
        %v1110 = vld [vmem:[#allocation4 + $0x48] sm:$0xff]
        %v1111 = vld [vmem:[#allocation4 + $0x50] sm:$0xff]
        %v1112 = vld [vmem:[#allocation4 + $0x58] sm:$0xff]
        %v1113 = vld [vmem:[#allocation4 + $0x60] sm:$0xff]
        %v1114 = vld [vmem:[#allocation4 + $0x68] sm:$0xff]
        %v1115 = vld [vmem:[#allocation4 + $0x70] sm:$0xff]
        %v1116 = vld [vmem:[#allocation4 + $0x78] sm:$0xff]
        %v1117 = vld [vmem:[#allocation4 + $0x80] sm:$0xff]
        %v1118 = vld [vmem:[#allocation4 + $0x88] sm:$0xff]
        %v1119 = vld [vmem:[#allocation4 + $0x90] sm:$0xff]
        %v1120 = vld [vmem:[#allocation4 + $0x98] sm:$0xff]
        %v1121 = vld [vmem:[#allocation4 + $0xa0] sm:$0xff]
        %v1122 = vld [vmem:[#allocation4 + $0xa8] sm:$0xff]
        %v1123 = vld [vmem:[#allocation4 + $0xb0] sm:$0xff]
        %v1124 = vld [vmem:[#allocation4 + $0xb8] sm:$0xff]
        %v1125 = vld [vmem:[#allocation4 + $0xc0] sm:$0xff]
        %v1126 = vld [vmem:[#allocation4 + $0xc8] sm:$0xff]
        %v1127 = vld [vmem:[#allocation4 + $0xd0] sm:$0xff]
        %v1128 = vld [vmem:[#allocation4 + $0xd8] sm:$0xff]
        %v1129 = vld [vmem:[#allocation4 + $0xe0] sm:$0xff]
        %v1130 = vld [vmem:[#allocation4 + $0xe8] sm:$0xff]
        %v1131 = vld [vmem:[#allocation4 + $0xf0] sm:$0xff]
        %v1132 = vld [vmem:[#allocation4 + $0xf8] sm:$0xff]
        %v1133 = vld [vmem:[#allocation4 + $0x100] sm:$0xff]
        %v1134 = vld [vmem:[#allocation4 + $0x108] sm:$0xff]
        %v1135 = vld [vmem:[#allocation4 + $0x110] sm:$0xff]
        %v1136 = vld [vmem:[#allocation4 + $0x118] sm:$0xff]
        %v1173 = vunpack.c.l.b16 %v1101
        %v1174 = vunpack.c.h.b16 %v1101
        %v1175 = vunpack.c.l.b16 %v1102
        %v1176 = vunpack.c.h.b16 %v1102
        %v1177 = vunpack.c.l.b16 %v1103
        %v1178 = vunpack.c.h.b16 %v1103
        %v1179 = vunpack.c.l.b16 %v1104
        %v1180 = vunpack.c.h.b16 %v1104
        %v1181 = vunpack.c.l.b16 %v1105
        %v1182 = vunpack.c.h.b16 %v1105
        %v1183 = vunpack.c.l.b16 %v1106
        %v1184 = vunpack.c.h.b16 %v1106
        %v1185 = vunpack.c.l.b16 %v1107
        %v1186 = vunpack.c.h.b16 %v1107
        %v1187 = vunpack.c.l.b16 %v1108
        %v1188 = vunpack.c.h.b16 %v1108
        %v1189 = vunpack.c.l.b16 %v1109
        %v1190 = vunpack.c.h.b16 %v1109
        %v1191 = vunpack.c.l.b16 %v1110
        %v1192 = vunpack.c.h.b16 %v1110
        %v1193 = vunpack.c.l.b16 %v1111
        %v1194 = vunpack.c.h.b16 %v1111
        %v1195 = vunpack.c.l.b16 %v1112
        %v1196 = vunpack.c.h.b16 %v1112
        %v1197 = vunpack.c.l.b16 %v1113
        %v1198 = vunpack.c.h.b16 %v1113
        %v1199 = vunpack.c.l.b16 %v1114
        %v1200 = vunpack.c.h.b16 %v1114
        %v1201 = vunpack.c.l.b16 %v1115
        %v1202 = vunpack.c.h.b16 %v1115
        %v1203 = vunpack.c.l.b16 %v1116
        %v1204 = vunpack.c.h.b16 %v1116
        %v1205 = vunpack.c.l.b16 %v1117
        %v1206 = vunpack.c.h.b16 %v1117
        %v1207 = vunpack.c.l.b16 %v1118
        %v1208 = vunpack.c.h.b16 %v1118
        %v1209 = vunpack.c.l.b16 %v1119
        %v1210 = vunpack.c.h.b16 %v1119
        %v1211 = vunpack.c.l.b16 %v1120
        %v1212 = vunpack.c.h.b16 %v1120
        %v1213 = vunpack.c.l.b16 %v1121
        %v1214 = vunpack.c.h.b16 %v1121
        %v1215 = vunpack.c.l.b16 %v1122
        %v1216 = vunpack.c.h.b16 %v1122
        %v1217 = vunpack.c.l.b16 %v1123
        %v1218 = vunpack.c.h.b16 %v1123
        %v1219 = vunpack.c.l.b16 %v1124
        %v1220 = vunpack.c.h.b16 %v1124
        %v1221 = vunpack.c.l.b16 %v1125
        %v1222 = vunpack.c.h.b16 %v1125
        %v1223 = vunpack.c.l.b16 %v1126
        %v1224 = vunpack.c.h.b16 %v1126
        %v1225 = vunpack.c.l.b16 %v1127
        %v1226 = vunpack.c.h.b16 %v1127
        %v1227 = vunpack.c.l.b16 %v1128
        %v1228 = vunpack.c.h.b16 %v1128
        %v1229 = vunpack.c.l.b16 %v1129
        %v1230 = vunpack.c.h.b16 %v1129
        %v1231 = vunpack.c.l.b16 %v1130
        %v1232 = vunpack.c.h.b16 %v1130
        %v1233 = vunpack.c.l.b16 %v1131
        %v1234 = vunpack.c.h.b16 %v1131
        %v1235 = vunpack.c.l.b16 %v1132
        %v1236 = vunpack.c.h.b16 %v1132
        %v1237 = vunpack.c.l.b16 %v1133
        %v1238 = vunpack.c.h.b16 %v1133
        %v1239 = vunpack.c.l.b16 %v1134
        %v1240 = vunpack.c.h.b16 %v1134
        %v1241 = vunpack.c.l.b16 %v1135
        %v1242 = vunpack.c.h.b16 %v1135
        %v1243 = vunpack.c.l.b16 %v1136
        %v1244 = vunpack.c.h.b16 %v1136
        %v1245 = vpack.c.b16 %v1181, %v1173
        %v1246 = vpack.c.b16 %v1182, %v1174
        %v1247 = vpack.c.b16 %v1183, %v1175
        %v1248 = vpack.c.b16 %v1184, %v1176
        %v1249 = vpack.c.b16 %v1185, %v1177
        %v1250 = vpack.c.b16 %v1186, %v1178
        %v1251 = vpack.c.b16 %v1187, %v1179
        %v1252 = vpack.c.b16 %v1188, %v1180
        %v1253 = vpack.c.b16 %v1197, %v1189
        %v1254 = vpack.c.b16 %v1198, %v1190
        %v1255 = vpack.c.b16 %v1199, %v1191
        %v1256 = vpack.c.b16 %v1200, %v1192
        %v1257 = vpack.c.b16 %v1201, %v1193
        %v1258 = vpack.c.b16 %v1202, %v1194
        %v1259 = vpack.c.b16 %v1203, %v1195
        %v1260 = vpack.c.b16 %v1204, %v1196
        %v1261 = vpack.c.b16 %v1213, %v1205
        %v1262 = vpack.c.b16 %v1214, %v1206
        %v1263 = vpack.c.b16 %v1215, %v1207
        %v1264 = vpack.c.b16 %v1216, %v1208
        %v1265 = vpack.c.b16 %v1217, %v1209
        %v1266 = vpack.c.b16 %v1218, %v1210
        %v1267 = vpack.c.b16 %v1219, %v1211
        %v1268 = vpack.c.b16 %v1220, %v1212
        %v1269 = vpack.c.b16 %v1229, %v1221
        %v1270 = vpack.c.b16 %v1230, %v1222
        %v1271 = vpack.c.b16 %v1231, %v1223
        %v1272 = vpack.c.b16 %v1232, %v1224
        %v1273 = vpack.c.b16 %v1233, %v1225
        %v1274 = vpack.c.b16 %v1234, %v1226
        %v1275 = vpack.c.b16 %v1235, %v1227
        %v1276 = vpack.c.b16 %v1236, %v1228
        %v1277 = vpack.c.b16 %v1237, %v1237
        %v1278 = vpack.c.b16 %v1238, %v1238
        %v1279 = vpack.c.b16 %v1239, %v1239
        %v1280 = vpack.c.b16 %v1240, %v1240
        %v1281 = vpack.c.b16 %v1241, %v1241
        %v1282 = vpack.c.b16 %v1242, %v1242
        %v1283 = vpack.c.b16 %v1243, %v1243
        %v1284 = vpack.c.b16 %v1244, %v1244
        %vm1317 = vcmask 588800
        %v1319 = vsel %vm1317, %v1100, 0
        %vm1321 = vcmask 1043456
        %v1323 = vsel %vm1321, %v1277, 0
        %v1326 = vsel %vm1321, %v1278, 0
        %v1329 = vsel %vm1321, %v1279, 0
        %v1332 = vsel %vm1321, %v1280, 0
        %v1335 = vsel %vm1321, %v1281, 0
        %v1338 = vsel %vm1321, %v1282, 0
        %v1341 = vsel %vm1321, %v1283, 0
        %v1344 = vsel %vm1321, %v1284, 0
        %1346 = vmatpush.bf16.msra.mxu0 0
        %1347 = vmatpush.bf16.msra.mxu0 0
        %1348 = vmatpush.bf16.msra.mxu0 0
        %1349 = vmatpush.bf16.msra.mxu0 %v1323
        %1350 = vmatpush.bf16.msra.mxu0 %v1269
        %1351 = vmatpush.bf16.msra.mxu0 %v1261
        %1352 = vmatpush.bf16.msra.mxu0 %v1253
        %1353 = vmatpush.bf16.msra.mxu0 %v1245
        %1354 = vmatmul.bf16.gmra.mxu0 %v1319
        %v1355 = vpop.f32.mrf.mxu0
        %v1356 = vadd.f32 0.0, %v1355
        %v1357 = vpop.f32.mrf.mxu0
        %1358 = vdwg.mxu0
        %1359 = vmatpush.bf16.msra.mxu0 0
        %1360 = vmatpush.bf16.msra.mxu0 0
        %1361 = vmatpush.bf16.msra.mxu0 0
        %1362 = vmatpush.bf16.msra.mxu0 %v1326
        %1363 = vmatpush.bf16.msra.mxu0 %v1270
        %1364 = vmatpush.bf16.msra.mxu0 %v1262
        %1365 = vmatpush.bf16.msra.mxu0 %v1254
        %1366 = vmatpush.bf16.msra.mxu0 %v1246
        %1367 = vmatmul.bf16.gmra.mxu0 %v1319
        %v1368 = vpop.f32.mrf.mxu0
        %v1369 = vadd.f32 0.0, %v1368
        %v1370 = vpop.f32.mrf.mxu0
        %1371 = vdwg.mxu0
        %1372 = vmatpush.bf16.msra.mxu0 0
        %1373 = vmatpush.bf16.msra.mxu0 0
        %1374 = vmatpush.bf16.msra.mxu0 0
        %1375 = vmatpush.bf16.msra.mxu0 %v1329
        %1376 = vmatpush.bf16.msra.mxu0 %v1271
        %1377 = vmatpush.bf16.msra.mxu0 %v1263
        %1378 = vmatpush.bf16.msra.mxu0 %v1255
        %1379 = vmatpush.bf16.msra.mxu0 %v1247
        %1380 = vmatmul.bf16.gmra.mxu0 %v1319
        %v1381 = vpop.f32.mrf.mxu0
        %v1382 = vadd.f32 0.0, %v1381
        %v1383 = vpop.f32.mrf.mxu0
        %1384 = vdwg.mxu0
        %1385 = vmatpush.bf16.msra.mxu0 0
        %1386 = vmatpush.bf16.msra.mxu0 0
        %1387 = vmatpush.bf16.msra.mxu0 0
        %1388 = vmatpush.bf16.msra.mxu0 %v1332
        %1389 = vmatpush.bf16.msra.mxu0 %v1272
        %1390 = vmatpush.bf16.msra.mxu0 %v1264
        %1391 = vmatpush.bf16.msra.mxu0 %v1256
        %1392 = vmatpush.bf16.msra.mxu0 %v1248
        %1393 = vmatmul.bf16.gmra.mxu0 %v1319
        %v1394 = vpop.f32.mrf.mxu0
        %v1395 = vadd.f32 0.0, %v1394
        %v1396 = vpop.f32.mrf.mxu0
        %1397 = vdwg.mxu0
        %1398 = vmatpush.bf16.msra.mxu0 0
        %1399 = vmatpush.bf16.msra.mxu0 0
        %1400 = vmatpush.bf16.msra.mxu0 0
        %1401 = vmatpush.bf16.msra.mxu0 %v1335
        %1402 = vmatpush.bf16.msra.mxu0 %v1273
        %1403 = vmatpush.bf16.msra.mxu0 %v1265
        %1404 = vmatpush.bf16.msra.mxu0 %v1257
        %1405 = vmatpush.bf16.msra.mxu0 %v1249
        %1406 = vmatmul.bf16.gmra.mxu0 %v1319
        %v1407 = vpop.f32.mrf.mxu0
        %v1408 = vadd.f32 0.0, %v1407
        %v1409 = vpop.f32.mrf.mxu0
        %1410 = vdwg.mxu0
        %1411 = vmatpush.bf16.msra.mxu0 0
        %1412 = vmatpush.bf16.msra.mxu0 0
        %1413 = vmatpush.bf16.msra.mxu0 0
        %1414 = vmatpush.bf16.msra.mxu0 %v1338
        %1415 = vmatpush.bf16.msra.mxu0 %v1274
        %1416 = vmatpush.bf16.msra.mxu0 %v1266
        %1417 = vmatpush.bf16.msra.mxu0 %v1258
        %1418 = vmatpush.bf16.msra.mxu0 %v1250
        %1419 = vmatmul.bf16.gmra.mxu0 %v1319
        %v1420 = vpop.f32.mrf.mxu0
        %v1421 = vadd.f32 0.0, %v1420
        %v1422 = vpop.f32.mrf.mxu0
        %1423 = vdwg.mxu0
        %1424 = vmatpush.bf16.msra.mxu0 0
        %1425 = vmatpush.bf16.msra.mxu0 0
        %1426 = vmatpush.bf16.msra.mxu0 0
        %1427 = vmatpush.bf16.msra.mxu0 %v1341
        %1428 = vmatpush.bf16.msra.mxu0 %v1275
        %1429 = vmatpush.bf16.msra.mxu0 %v1267
        %1430 = vmatpush.bf16.msra.mxu0 %v1259
        %1431 = vmatpush.bf16.msra.mxu0 %v1251
        %1432 = vmatmul.bf16.gmra.mxu0 %v1319
        %v1433 = vpop.f32.mrf.mxu0
        %v1434 = vadd.f32 0.0, %v1433
        %v1435 = vpop.f32.mrf.mxu0
        %1436 = vdwg.mxu0
        %1437 = vmatpush.bf16.msra.mxu0 0
        %1438 = vmatpush.bf16.msra.mxu0 0
        %1439 = vmatpush.bf16.msra.mxu0 0
        %1440 = vmatpush.bf16.msra.mxu0 %v1344
        %1441 = vmatpush.bf16.msra.mxu0 %v1276
        %1442 = vmatpush.bf16.msra.mxu0 %v1268
        %1443 = vmatpush.bf16.msra.mxu0 %v1260
        %1444 = vmatpush.bf16.msra.mxu0 %v1252
        %1445 = vmatmul.bf16.gmra.mxu0 %v1319
        %v1446 = vpop.f32.mrf.mxu0
        %v1447 = vadd.f32 0.0, %v1446
        %v1448 = vpop.f32.mrf.mxu0
        %1449 = vdwg.mxu0
        %v1450 = vld [vmem:[%s3] sm:$0xff]
        %1452 = vset.pattern.permute.xlu0 0
        %1453 = vperm.xlu0 %1452, %v1450
        %v1454 = vpop.permute.xlu0 %1453
        %v1456 = vmul.f32 %v1356, %v1454
        %v1457 = vmul.f32 %v1369, %v1454
        %v1458 = vmul.f32 %v1382, %v1454
        %v1459 = vmul.f32 %v1395, %v1454
        %v1460 = vmul.f32 %v1408, %v1454
        %v1461 = vmul.f32 %v1421, %v1454
        %v1462 = vmul.f32 %v1434, %v1454
        %v1463 = vmul.f32 %v1447, %v1454
        %v1464 = vld [vmem:[%s4] sm:$0xff]
        %1466 = vset.pattern.permute.xlu0 0
        %1467 = vperm.xlu0 %1466, %v1464
        %v1468 = vpop.permute.xlu0 %1467
        %v1470 = vadd.f32 %v1456, %v1468
        %v1471 = vadd.f32 %v1457, %v1468
        %v1472 = vadd.f32 %v1458, %v1468
        %v1473 = vadd.f32 %v1459, %v1468
        %v1474 = vadd.f32 %v1460, %v1468
        %v1475 = vadd.f32 %v1461, %v1468
        %v1476 = vadd.f32 %v1462, %v1468
        %v1477 = vadd.f32 %v1463, %v1468
        %v1478 = vmax.f32 %v1470, 0.0
        %v1479 = vmax.f32 %v1471, 0.0
        %v1480 = vmax.f32 %v1472, 0.0
        %v1481 = vmax.f32 %v1473, 0.0
        %v1482 = vmax.f32 %v1474, 0.0
        %v1483 = vmax.f32 %v1475, 0.0
        %v1484 = vmax.f32 %v1476, 0.0
        %v1485 = vmax.f32 %v1477, 0.0
        %1486 = vst [vmem:[#allocation3] sm:$0xff] 0.0
        %1487 = vst [vmem:[#allocation3 + $0x20] sm:$0xff] 0.0
        %1488 = vst [vmem:[#allocation3 + $0x40] sm:$0xff] 0.0
        %1489 = vst [vmem:[#allocation3 + $0x60] sm:$0xff] 0.0
        %1490 = vst [vmem:[#allocation3 + $0x18] sm:$0xff] 0.0
        %1491 = vst [vmem:[#allocation3 + $0x38] sm:$0xff] 0.0
        %1492 = vst [vmem:[#allocation3 + $0x58] sm:$0xff] 0.0
        %1493 = vst [vmem:[#allocation3 + $0x78] sm:$0xff] 0.0
        %1494 = vst [vmem:[#allocation3 + $0x8] sm:$0xff] %v1478
        %1495 = vst [vmem:[#allocation3 + $0x10] sm:$0xff] %v1479
        %s1496 = scalar_lea.vmem [#allocation3], 32
        %1497 = vst [vmem:[%s1496 + $0x8] sm:$0xff] %v1480
        %1498 = vst [vmem:[%s1496 + $0x10] sm:$0xff] %v1481
        %s1499 = scalar_lea.vmem [#allocation3], 64
        %1500 = vst [vmem:[%s1499 + $0x8] sm:$0xff] %v1482
        %1501 = vst [vmem:[%s1499 + $0x10] sm:$0xff] %v1483
        %s1502 = scalar_lea.vmem [#allocation3], 96
        %1503 = vst [vmem:[%s1502 + $0x8] sm:$0xff] %v1484
        %1504 = vst [vmem:[%s1502 + $0x10] sm:$0xff] %v1485
        %v1505 = vld [vmem:[#allocation3] sm:$0xff]
        %v1506 = vld [vmem:[#allocation3 + $0x8] sm:$0xff]
        %v1507 = vld [vmem:[#allocation3 + $0x10] sm:$0xff]
        %v1508 = vmul.f32 %v1505, %v403
        %v1509 = vmul.f32 %v1506, %v407
        %v1510 = vmul.f32 %v1507, %v405
        %v1511 = vpack.c.bf16 %v1509, %v1508
        %v1512 = vpack.c.bf16 %v1510, %v1510
        %1515 = vrot.lane.b32.xlu0 %v1511, 17
        %v1516 = vpop.permute.xlu0 %1515
        %1517 = vrot.lane.b32.xlu0 %v1512, 17
        %v1518 = vpop.permute.xlu0 %1517
        %v1519 = vrot.slane %v1516, 4
        %v1520 = vrot.slane %v1518, 4
        %v1521 = vsel %vm424, %v1519, %v1520
        %v1522 = vsel %vm426, %v1516, %v1521
        %1524 = vst [vmem:[#allocation4] sm:$0xff] %v1522
        %v1525 = vld [vmem:[%s1496] sm:$0xff]
        %v1526 = vld [vmem:[%s1496 + $0x8] sm:$0xff]
        %v1527 = vld [vmem:[%s1496 + $0x10] sm:$0xff]
        %v1528 = vmul.f32 %v1525, %v403
        %v1529 = vmul.f32 %v1526, %v407
        %v1530 = vmul.f32 %v1527, %v405
        %v1531 = vpack.c.bf16 %v1529, %v1528
        %v1532 = vpack.c.bf16 %v1530, %v1530
        %1535 = vrot.lane.b32.xlu0 %v1531, 17
        %v1536 = vpop.permute.xlu0 %1535
        %1537 = vrot.lane.b32.xlu0 %v1532, 17
        %v1538 = vpop.permute.xlu0 %1537
        %v1539 = vrot.slane %v1536, 4
        %v1540 = vrot.slane %v1538, 4
        %v1541 = vsel %vm424, %v1539, %v1540
        %v1542 = vsel %vm426, %v1536, %v1541
        %1544 = vst [vmem:[#allocation4 + $0x8] sm:$0xff] %v1542
        %v1545 = vld [vmem:[%s1499] sm:$0xff]
        %v1546 = vld [vmem:[%s1499 + $0x8] sm:$0xff]
        %v1547 = vld [vmem:[%s1499 + $0x10] sm:$0xff]
        %v1548 = vmul.f32 %v1545, %v403
        %v1549 = vmul.f32 %v1546, %v407
        %v1550 = vmul.f32 %v1547, %v405
        %v1551 = vpack.c.bf16 %v1549, %v1548
        %v1552 = vpack.c.bf16 %v1550, %v1550
        %1555 = vrot.lane.b32.xlu0 %v1551, 17
        %v1556 = vpop.permute.xlu0 %1555
        %1557 = vrot.lane.b32.xlu0 %v1552, 17
        %v1558 = vpop.permute.xlu0 %1557
        %v1559 = vrot.slane %v1556, 4
        %v1560 = vrot.slane %v1558, 4
        %v1561 = vsel %vm424, %v1559, %v1560
        %v1562 = vsel %vm426, %v1556, %v1561
        %1564 = vst [vmem:[#allocation4 + $0x10] sm:$0xff] %v1562
        %v1565 = vld [vmem:[%s1502] sm:$0xff]
        %v1566 = vld [vmem:[%s1502 + $0x8] sm:$0xff]
        %v1567 = vld [vmem:[%s1502 + $0x10] sm:$0xff]
        %v1568 = vmul.f32 %v1565, %v403
        %v1569 = vmul.f32 %v1566, %v407
        %v1570 = vmul.f32 %v1567, %v405
        %v1571 = vpack.c.bf16 %v1569, %v1568
        %v1572 = vpack.c.bf16 %v1570, %v1570
        %1575 = vrot.lane.b32.xlu0 %v1571, 17
        %v1576 = vpop.permute.xlu0 %1575
        %1577 = vrot.lane.b32.xlu0 %v1572, 17
        %v1578 = vpop.permute.xlu0 %1577
        %v1579 = vrot.slane %v1576, 4
        %v1580 = vrot.slane %v1578, 4
        %v1581 = vsel %vm424, %v1579, %v1580
        %v1582 = vsel %vm426, %v1576, %v1581
        %1584 = vst [vmem:[#allocation4 + $0x18] sm:$0xff] %v1582
        %v1585 = vld [vmem:[#allocation3] sm:$0xff]
        %v1586 = vld [vmem:[#allocation3 + $0x8] sm:$0xff]
        %v1587 = vld [vmem:[#allocation3 + $0x10] sm:$0xff]
        %v1588 = vpack.c.bf16 %v1586, %v1585
        %v1589 = vpack.c.bf16 %v1587, %v1587
        %1592 = vrot.lane.b32.xlu0 %v1588, 16
        %v1593 = vpop.permute.xlu0 %1592
        %1594 = vrot.lane.b32.xlu0 %v1589, 16
        %v1595 = vpop.permute.xlu0 %1594
        %v1596 = vrot.slane %v1593, 4
        %v1597 = vrot.slane %v1595, 4
        %v1598 = vsel %vm424, %v1596, %v1597
        %v1599 = vsel %vm507, %v1593, %v1598
        %1601 = vst [vmem:[#allocation4 + $0x20] sm:$0xff] %v1599
        %v1602 = vld [vmem:[%s1496] sm:$0xff]
        %v1603 = vld [vmem:[%s1496 + $0x8] sm:$0xff]
        %v1604 = vld [vmem:[%s1496 + $0x10] sm:$0xff]
        %v1605 = vpack.c.bf16 %v1603, %v1602
        %v1606 = vpack.c.bf16 %v1604, %v1604
        %1609 = vrot.lane.b32.xlu0 %v1605, 16
        %v1610 = vpop.permute.xlu0 %1609
        %1611 = vrot.lane.b32.xlu0 %v1606, 16
        %v1612 = vpop.permute.xlu0 %1611
        %v1613 = vrot.slane %v1610, 4
        %v1614 = vrot.slane %v1612, 4
        %v1615 = vsel %vm424, %v1613, %v1614
        %v1616 = vsel %vm507, %v1610, %v1615
        %1618 = vst [vmem:[#allocation4 + $0x28] sm:$0xff] %v1616
        %v1619 = vld [vmem:[%s1499] sm:$0xff]
        %v1620 = vld [vmem:[%s1499 + $0x8] sm:$0xff]
        %v1621 = vld [vmem:[%s1499 + $0x10] sm:$0xff]
        %v1622 = vpack.c.bf16 %v1620, %v1619
        %v1623 = vpack.c.bf16 %v1621, %v1621
        %1626 = vrot.lane.b32.xlu0 %v1622, 16
        %v1627 = vpop.permute.xlu0 %1626
        %1628 = vrot.lane.b32.xlu0 %v1623, 16
        %v1629 = vpop.permute.xlu0 %1628
        %v1630 = vrot.slane %v1627, 4
        %v1631 = vrot.slane %v1629, 4
        %v1632 = vsel %vm424, %v1630, %v1631
        %v1633 = vsel %vm507, %v1627, %v1632
        %1635 = vst [vmem:[#allocation4 + $0x30] sm:$0xff] %v1633
        %v1636 = vld [vmem:[%s1502] sm:$0xff]
        %v1637 = vld [vmem:[%s1502 + $0x8] sm:$0xff]
        %v1638 = vld [vmem:[%s1502 + $0x10] sm:$0xff]
        %v1639 = vpack.c.bf16 %v1637, %v1636
        %v1640 = vpack.c.bf16 %v1638, %v1638
        %1643 = vrot.lane.b32.xlu0 %v1639, 16
        %v1644 = vpop.permute.xlu0 %1643
        %1645 = vrot.lane.b32.xlu0 %v1640, 16
        %v1646 = vpop.permute.xlu0 %1645
        %v1647 = vrot.slane %v1644, 4
        %v1648 = vrot.slane %v1646, 4
        %v1649 = vsel %vm424, %v1647, %v1648
        %v1650 = vsel %vm507, %v1644, %v1649
        %1652 = vst [vmem:[#allocation4 + $0x38] sm:$0xff] %v1650
        %v1653 = vld [vmem:[#allocation3] sm:$0xff]
        %v1654 = vld [vmem:[#allocation3 + $0x8] sm:$0xff]
        %v1655 = vld [vmem:[#allocation3 + $0x10] sm:$0xff]
        %v1656 = vmul.f32 %v1653, %v569
        %v1657 = vmul.f32 %v1654, %v573
        %v1658 = vmul.f32 %v1655, %v571
        %v1659 = vpack.c.bf16 %v1657, %v1656
        %v1660 = vpack.c.bf16 %v1658, %v1658
        %1663 = vrot.lane.b32.xlu0 %v1659, 15
        %v1664 = vpop.permute.xlu0 %1663
        %1665 = vrot.lane.b32.xlu0 %v1660, 15
        %v1666 = vpop.permute.xlu0 %1665
        %v1667 = vrot.slane %v1664, 4
        %v1668 = vrot.slane %v1666, 4
        %v1669 = vsel %vm424, %v1667, %v1668
        %v1670 = vsel %vm591, %v1664, %v1669
        %1672 = vst [vmem:[#allocation4 + $0x40] sm:$0xff] %v1670
        %v1673 = vld [vmem:[%s1496] sm:$0xff]
        %v1674 = vld [vmem:[%s1496 + $0x8] sm:$0xff]
        %v1675 = vld [vmem:[%s1496 + $0x10] sm:$0xff]
        %v1676 = vmul.f32 %v1673, %v569
        %v1677 = vmul.f32 %v1674, %v573
        %v1678 = vmul.f32 %v1675, %v571
        %v1679 = vpack.c.bf16 %v1677, %v1676
        %v1680 = vpack.c.bf16 %v1678, %v1678
        %1683 = vrot.lane.b32.xlu0 %v1679, 15
        %v1684 = vpop.permute.xlu0 %1683
        %1685 = vrot.lane.b32.xlu0 %v1680, 15
        %v1686 = vpop.permute.xlu0 %1685
        %v1687 = vrot.slane %v1684, 4
        %v1688 = vrot.slane %v1686, 4
        %v1689 = vsel %vm424, %v1687, %v1688
        %v1690 = vsel %vm591, %v1684, %v1689
        %1692 = vst [vmem:[#allocation4 + $0x48] sm:$0xff] %v1690
        %v1693 = vld [vmem:[%s1499] sm:$0xff]
        %v1694 = vld [vmem:[%s1499 + $0x8] sm:$0xff]
        %v1695 = vld [vmem:[%s1499 + $0x10] sm:$0xff]
        %v1696 = vmul.f32 %v1693, %v569
        %v1697 = vmul.f32 %v1694, %v573
        %v1698 = vmul.f32 %v1695, %v571
        %v1699 = vpack.c.bf16 %v1697, %v1696
        %v1700 = vpack.c.bf16 %v1698, %v1698
        %1703 = vrot.lane.b32.xlu0 %v1699, 15
        %v1704 = vpop.permute.xlu0 %1703
        %1705 = vrot.lane.b32.xlu0 %v1700, 15
        %v1706 = vpop.permute.xlu0 %1705
        %v1707 = vrot.slane %v1704, 4
        %v1708 = vrot.slane %v1706, 4
        %v1709 = vsel %vm424, %v1707, %v1708
        %v1710 = vsel %vm591, %v1704, %v1709
        %1712 = vst [vmem:[#allocation4 + $0x50] sm:$0xff] %v1710
        %v1713 = vld [vmem:[%s1502] sm:$0xff]
        %v1714 = vld [vmem:[%s1502 + $0x8] sm:$0xff]
        %v1715 = vld [vmem:[%s1502 + $0x10] sm:$0xff]
        %v1716 = vmul.f32 %v1713, %v569
        %v1717 = vmul.f32 %v1714, %v573
        %v1718 = vmul.f32 %v1715, %v571
        %v1719 = vpack.c.bf16 %v1717, %v1716
        %v1720 = vpack.c.bf16 %v1718, %v1718
        %1723 = vrot.lane.b32.xlu0 %v1719, 15
        %v1724 = vpop.permute.xlu0 %1723
        %1725 = vrot.lane.b32.xlu0 %v1720, 15
        %v1726 = vpop.permute.xlu0 %1725
        %v1727 = vrot.slane %v1724, 4
        %v1728 = vrot.slane %v1726, 4
        %v1729 = vsel %vm424, %v1727, %v1728
        %v1730 = vsel %vm591, %v1724, %v1729
        %1732 = vst [vmem:[#allocation4 + $0x58] sm:$0xff] %v1730
        %v1733 = vld [vmem:[#allocation3] sm:$0xff]
        %v1734 = vld [vmem:[#allocation3 + $0x8] sm:$0xff]
        %v1735 = vld [vmem:[#allocation3 + $0x10] sm:$0xff]
        %v1736 = vmul.f32 %v1733, %v659
        %v1737 = vmul.f32 %v1734, %v663
        %v1738 = vmul.f32 %v1735, %v661
        %v1739 = vpack.c.bf16 %v1737, %v1736
        %v1740 = vpack.c.bf16 %v1738, %v1738
        %1743 = vrot.lane.b32.xlu0 %v1739, 1
        %v1744 = vpop.permute.xlu0 %1743
        %1745 = vrot.lane.b32.xlu0 %v1740, 1
        %v1746 = vpop.permute.xlu0 %1745
        %v1747 = vrot.slane %v1744, 4
        %v1748 = vrot.slane %v1746, 4
        %v1749 = vsel %vm424, %v1747, %v1748
        %v1750 = vsel %vm681, %v1744, %v1749
        %1752 = vst [vmem:[#allocation4 + $0x60] sm:$0xff] %v1750
        %v1753 = vld [vmem:[%s1496] sm:$0xff]
        %v1754 = vld [vmem:[%s1496 + $0x8] sm:$0xff]
        %v1755 = vld [vmem:[%s1496 + $0x10] sm:$0xff]
        %v1756 = vmul.f32 %v1753, %v659
        %v1757 = vmul.f32 %v1754, %v663
        %v1758 = vmul.f32 %v1755, %v661
        %v1759 = vpack.c.bf16 %v1757, %v1756
        %v1760 = vpack.c.bf16 %v1758, %v1758
        %1763 = vrot.lane.b32.xlu0 %v1759, 1
        %v1764 = vpop.permute.xlu0 %1763
        %1765 = vrot.lane.b32.xlu0 %v1760, 1
        %v1766 = vpop.permute.xlu0 %1765
        %v1767 = vrot.slane %v1764, 4
        %v1768 = vrot.slane %v1766, 4
        %v1769 = vsel %vm424, %v1767, %v1768
        %v1770 = vsel %vm681, %v1764, %v1769
        %1772 = vst [vmem:[#allocation4 + $0x68] sm:$0xff] %v1770
        %v1773 = vld [vmem:[%s1499] sm:$0xff]
        %v1774 = vld [vmem:[%s1499 + $0x8] sm:$0xff]
        %v1775 = vld [vmem:[%s1499 + $0x10] sm:$0xff]
        %v1776 = vmul.f32 %v1773, %v659
        %v1777 = vmul.f32 %v1774, %v663
        %v1778 = vmul.f32 %v1775, %v661
        %v1779 = vpack.c.bf16 %v1777, %v1776
        %v1780 = vpack.c.bf16 %v1778, %v1778
        %1783 = vrot.lane.b32.xlu0 %v1779, 1
        %v1784 = vpop.permute.xlu0 %1783
        %1785 = vrot.lane.b32.xlu0 %v1780, 1
        %v1786 = vpop.permute.xlu0 %1785
        %v1787 = vrot.slane %v1784, 4
        %v1788 = vrot.slane %v1786, 4
        %v1789 = vsel %vm424, %v1787, %v1788
        %v1790 = vsel %vm681, %v1784, %v1789
        %1792 = vst [vmem:[#allocation4 + $0x70] sm:$0xff] %v1790
        %v1793 = vld [vmem:[%s1502] sm:$0xff]
        %v1794 = vld [vmem:[%s1502 + $0x8] sm:$0xff]
        %v1795 = vld [vmem:[%s1502 + $0x10] sm:$0xff]
        %v1796 = vmul.f32 %v1793, %v659
        %v1797 = vmul.f32 %v1794, %v663
        %v1798 = vmul.f32 %v1795, %v661
        %v1799 = vpack.c.bf16 %v1797, %v1796
        %v1800 = vpack.c.bf16 %v1798, %v1798
        %1803 = vrot.lane.b32.xlu0 %v1799, 1
        %v1804 = vpop.permute.xlu0 %1803
        %1805 = vrot.lane.b32.xlu0 %v1800, 1
        %v1806 = vpop.permute.xlu0 %1805
        %v1807 = vrot.slane %v1804, 4
        %v1808 = vrot.slane %v1806, 4
        %v1809 = vsel %vm424, %v1807, %v1808
        %v1810 = vsel %vm681, %v1804, %v1809
        %1812 = vst [vmem:[#allocation4 + $0x78] sm:$0xff] %v1810
        %v1813 = vld [vmem:[#allocation3 + $0x8] sm:$0xff]
        %v1814 = vld [vmem:[#allocation3 + $0x10] sm:$0xff]
        %v1815 = vpack.c.bf16 %v1814, %v1813
        %1816 = vst [vmem:[#allocation4 + $0x80] sm:$0xff] %v1815
        %v1817 = vld [vmem:[%s1496 + $0x8] sm:$0xff]
        %v1818 = vld [vmem:[%s1496 + $0x10] sm:$0xff]
        %v1819 = vpack.c.bf16 %v1818, %v1817
        %1820 = vst [vmem:[#allocation4 + $0x88] sm:$0xff] %v1819
        %v1821 = vld [vmem:[%s1499 + $0x8] sm:$0xff]
        %v1822 = vld [vmem:[%s1499 + $0x10] sm:$0xff]
        %v1823 = vpack.c.bf16 %v1822, %v1821
        %1824 = vst [vmem:[#allocation4 + $0x90] sm:$0xff] %v1823
        %v1825 = vld [vmem:[%s1502 + $0x8] sm:$0xff]
        %v1826 = vld [vmem:[%s1502 + $0x10] sm:$0xff]
        %v1827 = vpack.c.bf16 %v1826, %v1825
        %1828 = vst [vmem:[#allocation4 + $0x98] sm:$0xff] %v1827
        %v1829 = vld [vmem:[#allocation3 + $0x8] sm:$0xff]
        %v1830 = vld [vmem:[#allocation3 + $0x10] sm:$0xff]
        %v1831 = vld [vmem:[#allocation3 + $0x18] sm:$0xff]
        %v1832 = vmul.f32 %v1829, %v765
        %v1833 = vmul.f32 %v1830, %v769
        %v1834 = vmul.f32 %v1831, %v767
        %v1835 = vpack.c.bf16 %v1833, %v1832
        %v1836 = vpack.c.bf16 %v1834, %v1834
        %1839 = vrot.lane.b32.xlu0 %v1835, 127
        %v1840 = vpop.permute.xlu0 %1839
        %1841 = vrot.lane.b32.xlu0 %v1836, 127
        %v1842 = vpop.permute.xlu0 %1841
        %v1843 = vrot.slane %v1840, 4
        %v1844 = vrot.slane %v1842, 4
        %v1845 = vsel %vm424, %v1843, %v1844
        %v1846 = vsel %vm787, %v1840, %v1845
        %1848 = vst [vmem:[#allocation4 + $0xa0] sm:$0xff] %v1846
        %v1849 = vld [vmem:[%s1496 + $0x8] sm:$0xff]
        %v1850 = vld [vmem:[%s1496 + $0x10] sm:$0xff]
        %v1851 = vld [vmem:[%s1496 + $0x18] sm:$0xff]
        %v1852 = vmul.f32 %v1849, %v765
        %v1853 = vmul.f32 %v1850, %v769
        %v1854 = vmul.f32 %v1851, %v767
        %v1855 = vpack.c.bf16 %v1853, %v1852
        %v1856 = vpack.c.bf16 %v1854, %v1854
        %1859 = vrot.lane.b32.xlu0 %v1855, 127
        %v1860 = vpop.permute.xlu0 %1859
        %1861 = vrot.lane.b32.xlu0 %v1856, 127
        %v1862 = vpop.permute.xlu0 %1861
        %v1863 = vrot.slane %v1860, 4
        %v1864 = vrot.slane %v1862, 4
        %v1865 = vsel %vm424, %v1863, %v1864
        %v1866 = vsel %vm787, %v1860, %v1865
        %1868 = vst [vmem:[#allocation4 + $0xa8] sm:$0xff] %v1866
        %v1869 = vld [vmem:[%s1499 + $0x8] sm:$0xff]
        %v1870 = vld [vmem:[%s1499 + $0x10] sm:$0xff]
        %v1871 = vld [vmem:[%s1499 + $0x18] sm:$0xff]
        %v1872 = vmul.f32 %v1869, %v765
        %v1873 = vmul.f32 %v1870, %v769
        %v1874 = vmul.f32 %v1871, %v767
        %v1875 = vpack.c.bf16 %v1873, %v1872
        %v1876 = vpack.c.bf16 %v1874, %v1874
        %1879 = vrot.lane.b32.xlu0 %v1875, 127
        %v1880 = vpop.permute.xlu0 %1879
        %1881 = vrot.lane.b32.xlu0 %v1876, 127
        %v1882 = vpop.permute.xlu0 %1881
        %v1883 = vrot.slane %v1880, 4
        %v1884 = vrot.slane %v1882, 4
        %v1885 = vsel %vm424, %v1883, %v1884
        %v1886 = vsel %vm787, %v1880, %v1885
        %1888 = vst [vmem:[#allocation4 + $0xb0] sm:$0xff] %v1886
        %v1889 = vld [vmem:[%s1502 + $0x8] sm:$0xff]
        %v1890 = vld [vmem:[%s1502 + $0x10] sm:$0xff]
        %v1891 = vld [vmem:[%s1502 + $0x18] sm:$0xff]
        %v1892 = vmul.f32 %v1889, %v765
        %v1893 = vmul.f32 %v1890, %v769
        %v1894 = vmul.f32 %v1891, %v767
        %v1895 = vpack.c.bf16 %v1893, %v1892
        %v1896 = vpack.c.bf16 %v1894, %v1894
        %1899 = vrot.lane.b32.xlu0 %v1895, 127
        %v1900 = vpop.permute.xlu0 %1899
        %1901 = vrot.lane.b32.xlu0 %v1896, 127
        %v1902 = vpop.permute.xlu0 %1901
        %v1903 = vrot.slane %v1900, 4
        %v1904 = vrot.slane %v1902, 4
        %v1905 = vsel %vm424, %v1903, %v1904
        %v1906 = vsel %vm787, %v1900, %v1905
        %1908 = vst [vmem:[#allocation4 + $0xb8] sm:$0xff] %v1906
        %v1909 = vld [vmem:[#allocation3 + $0x8] sm:$0xff]
        %v1910 = vld [vmem:[#allocation3 + $0x10] sm:$0xff]
        %v1911 = vld [vmem:[#allocation3 + $0x18] sm:$0xff]
        %v1912 = vmul.f32 %v1909, %v855
        %v1913 = vmul.f32 %v1910, %v859
        %v1914 = vmul.f32 %v1911, %v857
        %v1915 = vpack.c.bf16 %v1913, %v1912
        %v1916 = vpack.c.bf16 %v1914, %v1914
        %1919 = vrot.lane.b32.xlu0 %v1915, 113
        %v1920 = vpop.permute.xlu0 %1919
        %1921 = vrot.lane.b32.xlu0 %v1916, 113
        %v1922 = vpop.permute.xlu0 %1921
        %v1923 = vrot.slane %v1920, 4
        %v1924 = vrot.slane %v1922, 4
        %v1925 = vsel %vm424, %v1923, %v1924
        %v1926 = vsel %vm877, %v1920, %v1925
        %1928 = vst [vmem:[#allocation4 + $0xc0] sm:$0xff] %v1926
        %v1929 = vld [vmem:[%s1496 + $0x8] sm:$0xff]
        %v1930 = vld [vmem:[%s1496 + $0x10] sm:$0xff]
        %v1931 = vld [vmem:[%s1496 + $0x18] sm:$0xff]
        %v1932 = vmul.f32 %v1929, %v855
        %v1933 = vmul.f32 %v1930, %v859
        %v1934 = vmul.f32 %v1931, %v857
        %v1935 = vpack.c.bf16 %v1933, %v1932
        %v1936 = vpack.c.bf16 %v1934, %v1934
        %1939 = vrot.lane.b32.xlu0 %v1935, 113
        %v1940 = vpop.permute.xlu0 %1939
        %1941 = vrot.lane.b32.xlu0 %v1936, 113
        %v1942 = vpop.permute.xlu0 %1941
        %v1943 = vrot.slane %v1940, 4
        %v1944 = vrot.slane %v1942, 4
        %v1945 = vsel %vm424, %v1943, %v1944
        %v1946 = vsel %vm877, %v1940, %v1945
        %1948 = vst [vmem:[#allocation4 + $0xc8] sm:$0xff] %v1946
        %v1949 = vld [vmem:[%s1499 + $0x8] sm:$0xff]
        %v1950 = vld [vmem:[%s1499 + $0x10] sm:$0xff]
        %v1951 = vld [vmem:[%s1499 + $0x18] sm:$0xff]
        %v1952 = vmul.f32 %v1949, %v855
        %v1953 = vmul.f32 %v1950, %v859
        %v1954 = vmul.f32 %v1951, %v857
        %v1955 = vpack.c.bf16 %v1953, %v1952
        %v1956 = vpack.c.bf16 %v1954, %v1954
        %1959 = vrot.lane.b32.xlu0 %v1955, 113
        %v1960 = vpop.permute.xlu0 %1959
        %1961 = vrot.lane.b32.xlu0 %v1956, 113
        %v1962 = vpop.permute.xlu0 %1961
        %v1963 = vrot.slane %v1960, 4
        %v1964 = vrot.slane %v1962, 4
        %v1965 = vsel %vm424, %v1963, %v1964
        %v1966 = vsel %vm877, %v1960, %v1965
        %1968 = vst [vmem:[#allocation4 + $0xd0] sm:$0xff] %v1966
        %v1969 = vld [vmem:[%s1502 + $0x8] sm:$0xff]
        %v1970 = vld [vmem:[%s1502 + $0x10] sm:$0xff]
        %v1971 = vld [vmem:[%s1502 + $0x18] sm:$0xff]
        %v1972 = vmul.f32 %v1969, %v855
        %v1973 = vmul.f32 %v1970, %v859
        %v1974 = vmul.f32 %v1971, %v857
        %v1975 = vpack.c.bf16 %v1973, %v1972
        %v1976 = vpack.c.bf16 %v1974, %v1974
        %1979 = vrot.lane.b32.xlu0 %v1975, 113
        %v1980 = vpop.permute.xlu0 %1979
        %1981 = vrot.lane.b32.xlu0 %v1976, 113
        %v1982 = vpop.permute.xlu0 %1981
        %v1983 = vrot.slane %v1980, 4
        %v1984 = vrot.slane %v1982, 4
        %v1985 = vsel %vm424, %v1983, %v1984
        %v1986 = vsel %vm877, %v1980, %v1985
        %1988 = vst [vmem:[#allocation4 + $0xd8] sm:$0xff] %v1986
        %v1989 = vld [vmem:[#allocation3 + $0x8] sm:$0xff]
        %v1990 = vld [vmem:[#allocation3 + $0x10] sm:$0xff]
        %v1991 = vld [vmem:[#allocation3 + $0x18] sm:$0xff]
        %v1992 = vpack.c.bf16 %v1990, %v1989
        %v1993 = vpack.c.bf16 %v1991, %v1991
        %1996 = vrot.lane.b32.xlu0 %v1992, 112
        %v1997 = vpop.permute.xlu0 %1996
        %1998 = vrot.lane.b32.xlu0 %v1993, 112
        %v1999 = vpop.permute.xlu0 %1998
        %v2000 = vrot.slane %v1997, 4
        %v2001 = vrot.slane %v1999, 4
        %v2002 = vsel %vm424, %v2000, %v2001
        %v2003 = vsel %vm955, %v1997, %v2002
        %2005 = vst [vmem:[#allocation4 + $0xe0] sm:$0xff] %v2003
        %v2006 = vld [vmem:[%s1496 + $0x8] sm:$0xff]
        %v2007 = vld [vmem:[%s1496 + $0x10] sm:$0xff]
        %v2008 = vld [vmem:[%s1496 + $0x18] sm:$0xff]
        %v2009 = vpack.c.bf16 %v2007, %v2006
        %v2010 = vpack.c.bf16 %v2008, %v2008
        %2013 = vrot.lane.b32.xlu0 %v2009, 112
        %v2014 = vpop.permute.xlu0 %2013
        %2015 = vrot.lane.b32.xlu0 %v2010, 112
        %v2016 = vpop.permute.xlu0 %2015
        %v2017 = vrot.slane %v2014, 4
        %v2018 = vrot.slane %v2016, 4
        %v2019 = vsel %vm424, %v2017, %v2018
        %v2020 = vsel %vm955, %v2014, %v2019
        %2022 = vst [vmem:[#allocation4 + $0xe8] sm:$0xff] %v2020
        %v2023 = vld [vmem:[%s1499 + $0x8] sm:$0xff]
        %v2024 = vld [vmem:[%s1499 + $0x10] sm:$0xff]
        %v2025 = vld [vmem:[%s1499 + $0x18] sm:$0xff]
        %v2026 = vpack.c.bf16 %v2024, %v2023
        %v2027 = vpack.c.bf16 %v2025, %v2025
        %2030 = vrot.lane.b32.xlu0 %v2026, 112
        %v2031 = vpop.permute.xlu0 %2030
        %2032 = vrot.lane.b32.xlu0 %v2027, 112
        %v2033 = vpop.permute.xlu0 %2032
        %v2034 = vrot.slane %v2031, 4
        %v2035 = vrot.slane %v2033, 4
        %v2036 = vsel %vm424, %v2034, %v2035
        %v2037 = vsel %vm955, %v2031, %v2036
        %2039 = vst [vmem:[#allocation4 + $0xf0] sm:$0xff] %v2037
        %v2040 = vld [vmem:[%s1502 + $0x8] sm:$0xff]
        %v2041 = vld [vmem:[%s1502 + $0x10] sm:$0xff]
        %v2042 = vld [vmem:[%s1502 + $0x18] sm:$0xff]
        %v2043 = vpack.c.bf16 %v2041, %v2040
        %v2044 = vpack.c.bf16 %v2042, %v2042
        %2047 = vrot.lane.b32.xlu0 %v2043, 112
        %v2048 = vpop.permute.xlu0 %2047
        %2049 = vrot.lane.b32.xlu0 %v2044, 112
        %v2050 = vpop.permute.xlu0 %2049
        %v2051 = vrot.slane %v2048, 4
        %v2052 = vrot.slane %v2050, 4
        %v2053 = vsel %vm424, %v2051, %v2052
        %v2054 = vsel %vm955, %v2048, %v2053
        %2056 = vst [vmem:[#allocation4 + $0xf8] sm:$0xff] %v2054
        %v2057 = vld [vmem:[#allocation3 + $0x8] sm:$0xff]
        %v2058 = vld [vmem:[#allocation3 + $0x10] sm:$0xff]
        %v2059 = vld [vmem:[#allocation3 + $0x18] sm:$0xff]
        %v2060 = vmul.f32 %v2057, %v1014
        %v2061 = vmul.f32 %v2058, %v1018
        %v2062 = vmul.f32 %v2059, %v1016
        %v2063 = vpack.c.bf16 %v2061, %v2060
        %v2064 = vpack.c.bf16 %v2062, %v2062
        %2067 = vrot.lane.b32.xlu0 %v2063, 111
        %v2068 = vpop.permute.xlu0 %2067
        %2069 = vrot.lane.b32.xlu0 %v2064, 111
        %v2070 = vpop.permute.xlu0 %2069
        %v2071 = vrot.slane %v2068, 4
        %v2072 = vrot.slane %v2070, 4
        %v2073 = vsel %vm424, %v2071, %v2072
        %v2074 = vsel %vm1036, %v2068, %v2073
        %2076 = vst [vmem:[#allocation4 + $0x100] sm:$0xff] %v2074
        %v2077 = vld [vmem:[%s1496 + $0x8] sm:$0xff]
        %v2078 = vld [vmem:[%s1496 + $0x10] sm:$0xff]
        %v2079 = vld [vmem:[%s1496 + $0x18] sm:$0xff]
        %v2080 = vmul.f32 %v2077, %v1014
        %v2081 = vmul.f32 %v2078, %v1018
        %v2082 = vmul.f32 %v2079, %v1016
        %v2083 = vpack.c.bf16 %v2081, %v2080
        %v2084 = vpack.c.bf16 %v2082, %v2082
        %2087 = vrot.lane.b32.xlu0 %v2083, 111
        %v2088 = vpop.permute.xlu0 %2087
        %2089 = vrot.lane.b32.xlu0 %v2084, 111
        %v2090 = vpop.permute.xlu0 %2089
        %v2091 = vrot.slane %v2088, 4
        %v2092 = vrot.slane %v2090, 4
        %v2093 = vsel %vm424, %v2091, %v2092
        %v2094 = vsel %vm1036, %v2088, %v2093
        %2096 = vst [vmem:[#allocation4 + $0x108] sm:$0xff] %v2094
        %v2097 = vld [vmem:[%s1499 + $0x8] sm:$0xff]
        %v2098 = vld [vmem:[%s1499 + $0x10] sm:$0xff]
        %v2099 = vld [vmem:[%s1499 + $0x18] sm:$0xff]
        %v2100 = vmul.f32 %v2097, %v1014
        %v2101 = vmul.f32 %v2098, %v1018
        %v2102 = vmul.f32 %v2099, %v1016
        %v2103 = vpack.c.bf16 %v2101, %v2100
        %v2104 = vpack.c.bf16 %v2102, %v2102
        %2107 = vrot.lane.b32.xlu0 %v2103, 111
        %v2108 = vpop.permute.xlu0 %2107
        %2109 = vrot.lane.b32.xlu0 %v2104, 111
        %v2110 = vpop.permute.xlu0 %2109
        %v2111 = vrot.slane %v2108, 4
        %v2112 = vrot.slane %v2110, 4
        %v2113 = vsel %vm424, %v2111, %v2112
        %v2114 = vsel %vm1036, %v2108, %v2113
        %2116 = vst [vmem:[#allocation4 + $0x110] sm:$0xff] %v2114
        %v2117 = vld [vmem:[%s1502 + $0x8] sm:$0xff]
        %v2118 = vld [vmem:[%s1502 + $0x10] sm:$0xff]
        %v2119 = vld [vmem:[%s1502 + $0x18] sm:$0xff]
        %v2120 = vmul.f32 %v2117, %v1014
        %v2121 = vmul.f32 %v2118, %v1018
        %v2122 = vmul.f32 %v2119, %v1016
        %v2123 = vpack.c.bf16 %v2121, %v2120
        %v2124 = vpack.c.bf16 %v2122, %v2122
        %2127 = vrot.lane.b32.xlu0 %v2123, 111
        %v2128 = vpop.permute.xlu0 %2127
        %2129 = vrot.lane.b32.xlu0 %v2124, 111
        %v2130 = vpop.permute.xlu0 %2129
        %v2131 = vrot.slane %v2128, 4
        %v2132 = vrot.slane %v2130, 4
        %v2133 = vsel %vm424, %v2131, %v2132
        %v2134 = vsel %vm1036, %v2128, %v2133
        %2136 = vst [vmem:[#allocation4 + $0x118] sm:$0xff] %v2134
        %v2137 = vld [vmem:[%s5] sm:$0xf]
        %v2138 = vld [vmem:[#allocation4] sm:$0xff]
        %v2139 = vld [vmem:[#allocation4 + $0x8] sm:$0xff]
        %v2140 = vld [vmem:[#allocation4 + $0x10] sm:$0xff]
        %v2141 = vld [vmem:[#allocation4 + $0x18] sm:$0xff]
        %v2142 = vld [vmem:[#allocation4 + $0x20] sm:$0xff]
        %v2143 = vld [vmem:[#allocation4 + $0x28] sm:$0xff]
        %v2144 = vld [vmem:[#allocation4 + $0x30] sm:$0xff]
        %v2145 = vld [vmem:[#allocation4 + $0x38] sm:$0xff]
        %v2146 = vld [vmem:[#allocation4 + $0x40] sm:$0xff]
        %v2147 = vld [vmem:[#allocation4 + $0x48] sm:$0xff]
        %v2148 = vld [vmem:[#allocation4 + $0x50] sm:$0xff]
        %v2149 = vld [vmem:[#allocation4 + $0x58] sm:$0xff]
        %v2150 = vld [vmem:[#allocation4 + $0x60] sm:$0xff]
        %v2151 = vld [vmem:[#allocation4 + $0x68] sm:$0xff]
        %v2152 = vld [vmem:[#allocation4 + $0x70] sm:$0xff]
        %v2153 = vld [vmem:[#allocation4 + $0x78] sm:$0xff]
        %v2154 = vld [vmem:[#allocation4 + $0x80] sm:$0xff]
        %v2155 = vld [vmem:[#allocation4 + $0x88] sm:$0xff]
        %v2156 = vld [vmem:[#allocation4 + $0x90] sm:$0xff]
        %v2157 = vld [vmem:[#allocation4 + $0x98] sm:$0xff]
        %v2158 = vld [vmem:[#allocation4 + $0xa0] sm:$0xff]
        %v2159 = vld [vmem:[#allocation4 + $0xa8] sm:$0xff]
        %v2160 = vld [vmem:[#allocation4 + $0xb0] sm:$0xff]
        %v2161 = vld [vmem:[#allocation4 + $0xb8] sm:$0xff]
        %v2162 = vld [vmem:[#allocation4 + $0xc0] sm:$0xff]
        %v2163 = vld [vmem:[#allocation4 + $0xc8] sm:$0xff]
        %v2164 = vld [vmem:[#allocation4 + $0xd0] sm:$0xff]
        %v2165 = vld [vmem:[#allocation4 + $0xd8] sm:$0xff]
        %v2166 = vld [vmem:[#allocation4 + $0xe0] sm:$0xff]
        %v2167 = vld [vmem:[#allocation4 + $0xe8] sm:$0xff]
        %v2168 = vld [vmem:[#allocation4 + $0xf0] sm:$0xff]
        %v2169 = vld [vmem:[#allocation4 + $0xf8] sm:$0xff]
        %v2170 = vld [vmem:[#allocation4 + $0x100] sm:$0xff]
        %v2171 = vld [vmem:[#allocation4 + $0x108] sm:$0xff]
        %v2172 = vld [vmem:[#allocation4 + $0x110] sm:$0xff]
        %v2173 = vld [vmem:[#allocation4 + $0x118] sm:$0xff]
        %v2210 = vunpack.c.l.b16 %v2138
        %v2211 = vunpack.c.h.b16 %v2138
        %v2212 = vunpack.c.l.b16 %v2139
        %v2213 = vunpack.c.h.b16 %v2139
        %v2214 = vunpack.c.l.b16 %v2140
        %v2215 = vunpack.c.h.b16 %v2140
        %v2216 = vunpack.c.l.b16 %v2141
        %v2217 = vunpack.c.h.b16 %v2141
        %v2218 = vunpack.c.l.b16 %v2142
        %v2219 = vunpack.c.h.b16 %v2142
        %v2220 = vunpack.c.l.b16 %v2143
        %v2221 = vunpack.c.h.b16 %v2143
        %v2222 = vunpack.c.l.b16 %v2144
        %v2223 = vunpack.c.h.b16 %v2144
        %v2224 = vunpack.c.l.b16 %v2145
        %v2225 = vunpack.c.h.b16 %v2145
        %v2226 = vunpack.c.l.b16 %v2146
        %v2227 = vunpack.c.h.b16 %v2146
        %v2228 = vunpack.c.l.b16 %v2147
        %v2229 = vunpack.c.h.b16 %v2147
        %v2230 = vunpack.c.l.b16 %v2148
        %v2231 = vunpack.c.h.b16 %v2148
        %v2232 = vunpack.c.l.b16 %v2149
        %v2233 = vunpack.c.h.b16 %v2149
        %v2234 = vunpack.c.l.b16 %v2150
        %v2235 = vunpack.c.h.b16 %v2150
        %v2236 = vunpack.c.l.b16 %v2151
        %v2237 = vunpack.c.h.b16 %v2151
        %v2238 = vunpack.c.l.b16 %v2152
        %v2239 = vunpack.c.h.b16 %v2152
        %v2240 = vunpack.c.l.b16 %v2153
        %v2241 = vunpack.c.h.b16 %v2153
        %v2242 = vunpack.c.l.b16 %v2154
        %v2243 = vunpack.c.h.b16 %v2154
        %v2244 = vunpack.c.l.b16 %v2155
        %v2245 = vunpack.c.h.b16 %v2155
        %v2246 = vunpack.c.l.b16 %v2156
        %v2247 = vunpack.c.h.b16 %v2156
        %v2248 = vunpack.c.l.b16 %v2157
        %v2249 = vunpack.c.h.b16 %v2157
        %v2250 = vunpack.c.l.b16 %v2158
        %v2251 = vunpack.c.h.b16 %v2158
        %v2252 = vunpack.c.l.b16 %v2159
        %v2253 = vunpack.c.h.b16 %v2159
        %v2254 = vunpack.c.l.b16 %v2160
        %v2255 = vunpack.c.h.b16 %v2160
        %v2256 = vunpack.c.l.b16 %v2161
        %v2257 = vunpack.c.h.b16 %v2161
        %v2258 = vunpack.c.l.b16 %v2162
        %v2259 = vunpack.c.h.b16 %v2162
        %v2260 = vunpack.c.l.b16 %v2163
        %v2261 = vunpack.c.h.b16 %v2163
        %v2262 = vunpack.c.l.b16 %v2164
        %v2263 = vunpack.c.h.b16 %v2164
        %v2264 = vunpack.c.l.b16 %v2165
        %v2265 = vunpack.c.h.b16 %v2165
        %v2266 = vunpack.c.l.b16 %v2166
        %v2267 = vunpack.c.h.b16 %v2166
        %v2268 = vunpack.c.l.b16 %v2167
        %v2269 = vunpack.c.h.b16 %v2167
        %v2270 = vunpack.c.l.b16 %v2168
        %v2271 = vunpack.c.h.b16 %v2168
        %v2272 = vunpack.c.l.b16 %v2169
        %v2273 = vunpack.c.h.b16 %v2169
        %v2274 = vunpack.c.l.b16 %v2170
        %v2275 = vunpack.c.h.b16 %v2170
        %v2276 = vunpack.c.l.b16 %v2171
        %v2277 = vunpack.c.h.b16 %v2171
        %v2278 = vunpack.c.l.b16 %v2172
        %v2279 = vunpack.c.h.b16 %v2172
        %v2280 = vunpack.c.l.b16 %v2173
        %v2281 = vunpack.c.h.b16 %v2173
        %v2282 = vpack.c.b16 %v2218, %v2210
        %v2283 = vpack.c.b16 %v2219, %v2211
        %v2284 = vpack.c.b16 %v2220, %v2212
        %v2285 = vpack.c.b16 %v2221, %v2213
        %v2286 = vpack.c.b16 %v2222, %v2214
        %v2287 = vpack.c.b16 %v2223, %v2215
        %v2288 = vpack.c.b16 %v2224, %v2216
        %v2289 = vpack.c.b16 %v2225, %v2217
        %v2290 = vpack.c.b16 %v2234, %v2226
        %v2291 = vpack.c.b16 %v2235, %v2227
        %v2292 = vpack.c.b16 %v2236, %v2228
        %v2293 = vpack.c.b16 %v2237, %v2229
        %v2294 = vpack.c.b16 %v2238, %v2230
        %v2295 = vpack.c.b16 %v2239, %v2231
        %v2296 = vpack.c.b16 %v2240, %v2232
        %v2297 = vpack.c.b16 %v2241, %v2233
        %v2298 = vpack.c.b16 %v2250, %v2242
        %v2299 = vpack.c.b16 %v2251, %v2243
        %v2300 = vpack.c.b16 %v2252, %v2244
        %v2301 = vpack.c.b16 %v2253, %v2245
        %v2302 = vpack.c.b16 %v2254, %v2246
        %v2303 = vpack.c.b16 %v2255, %v2247
        %v2304 = vpack.c.b16 %v2256, %v2248
        %v2305 = vpack.c.b16 %v2257, %v2249
        %v2306 = vpack.c.b16 %v2266, %v2258
        %v2307 = vpack.c.b16 %v2267, %v2259
        %v2308 = vpack.c.b16 %v2268, %v2260
        %v2309 = vpack.c.b16 %v2269, %v2261
        %v2310 = vpack.c.b16 %v2270, %v2262
        %v2311 = vpack.c.b16 %v2271, %v2263
        %v2312 = vpack.c.b16 %v2272, %v2264
        %v2313 = vpack.c.b16 %v2273, %v2265
        %v2314 = vpack.c.b16 %v2274, %v2274
        %v2315 = vpack.c.b16 %v2275, %v2275
        %v2316 = vpack.c.b16 %v2276, %v2276
        %v2317 = vpack.c.b16 %v2277, %v2277
        %v2318 = vpack.c.b16 %v2278, %v2278
        %v2319 = vpack.c.b16 %v2279, %v2279
        %v2320 = vpack.c.b16 %v2280, %v2280
        %v2321 = vpack.c.b16 %v2281, %v2281
        %v2355 = vsel %vm1317, %v2137, 0
        %v2358 = vsel %vm1321, %v2314, 0
        %v2361 = vsel %vm1321, %v2315, 0
        %v2364 = vsel %vm1321, %v2316, 0
        %v2367 = vsel %vm1321, %v2317, 0
        %v2370 = vsel %vm1321, %v2318, 0
        %v2373 = vsel %vm1321, %v2319, 0
        %v2376 = vsel %vm1321, %v2320, 0
        %v2379 = vsel %vm1321, %v2321, 0
        %2381 = vmatpush.bf16.msra.mxu0 0
        %2382 = vmatpush.bf16.msra.mxu0 0
        %2383 = vmatpush.bf16.msra.mxu0 0
        %2384 = vmatpush.bf16.msra.mxu0 %v2358
        %2385 = vmatpush.bf16.msra.mxu0 %v2306
        %2386 = vmatpush.bf16.msra.mxu0 %v2298
        %2387 = vmatpush.bf16.msra.mxu0 %v2290
        %2388 = vmatpush.bf16.msra.mxu0 %v2282
        %2389 = vmatmul.bf16.gmra.mxu0 %v2355
        %v2390 = vpop.f32.mrf.mxu0
        %v2391 = vadd.f32 0.0, %v2390
        %v2392 = vpop.f32.mrf.mxu0
        %2393 = vdwg.mxu0
        %2394 = vmatpush.bf16.msra.mxu0 0
        %2395 = vmatpush.bf16.msra.mxu0 0
        %2396 = vmatpush.bf16.msra.mxu0 0
        %2397 = vmatpush.bf16.msra.mxu0 %v2361
        %2398 = vmatpush.bf16.msra.mxu0 %v2307
        %2399 = vmatpush.bf16.msra.mxu0 %v2299
        %2400 = vmatpush.bf16.msra.mxu0 %v2291
        %2401 = vmatpush.bf16.msra.mxu0 %v2283
        %2402 = vmatmul.bf16.gmra.mxu0 %v2355
        %v2403 = vpop.f32.mrf.mxu0
        %v2404 = vadd.f32 0.0, %v2403
        %v2405 = vpop.f32.mrf.mxu0
        %2406 = vdwg.mxu0
        %2407 = vmatpush.bf16.msra.mxu0 0
        %2408 = vmatpush.bf16.msra.mxu0 0
        %2409 = vmatpush.bf16.msra.mxu0 0
        %2410 = vmatpush.bf16.msra.mxu0 %v2364
        %2411 = vmatpush.bf16.msra.mxu0 %v2308
        %2412 = vmatpush.bf16.msra.mxu0 %v2300
        %2413 = vmatpush.bf16.msra.mxu0 %v2292
        %2414 = vmatpush.bf16.msra.mxu0 %v2284
        %2415 = vmatmul.bf16.gmra.mxu0 %v2355
        %v2416 = vpop.f32.mrf.mxu0
        %v2417 = vadd.f32 0.0, %v2416
        %v2418 = vpop.f32.mrf.mxu0
        %2419 = vdwg.mxu0
        %2420 = vmatpush.bf16.msra.mxu0 0
        %2421 = vmatpush.bf16.msra.mxu0 0
        %2422 = vmatpush.bf16.msra.mxu0 0
        %2423 = vmatpush.bf16.msra.mxu0 %v2367
        %2424 = vmatpush.bf16.msra.mxu0 %v2309
        %2425 = vmatpush.bf16.msra.mxu0 %v2301
        %2426 = vmatpush.bf16.msra.mxu0 %v2293
        %2427 = vmatpush.bf16.msra.mxu0 %v2285
        %2428 = vmatmul.bf16.gmra.mxu0 %v2355
        %v2429 = vpop.f32.mrf.mxu0
        %v2430 = vadd.f32 0.0, %v2429
        %v2431 = vpop.f32.mrf.mxu0
        %2432 = vdwg.mxu0
        %2433 = vmatpush.bf16.msra.mxu0 0
        %2434 = vmatpush.bf16.msra.mxu0 0
        %2435 = vmatpush.bf16.msra.mxu0 0
        %2436 = vmatpush.bf16.msra.mxu0 %v2370
        %2437 = vmatpush.bf16.msra.mxu0 %v2310
        %2438 = vmatpush.bf16.msra.mxu0 %v2302
        %2439 = vmatpush.bf16.msra.mxu0 %v2294
        %2440 = vmatpush.bf16.msra.mxu0 %v2286
        %2441 = vmatmul.bf16.gmra.mxu0 %v2355
        %v2442 = vpop.f32.mrf.mxu0
        %v2443 = vadd.f32 0.0, %v2442
        %v2444 = vpop.f32.mrf.mxu0
        %2445 = vdwg.mxu0
        %2446 = vmatpush.bf16.msra.mxu0 0
        %2447 = vmatpush.bf16.msra.mxu0 0
        %2448 = vmatpush.bf16.msra.mxu0 0
        %2449 = vmatpush.bf16.msra.mxu0 %v2373
        %2450 = vmatpush.bf16.msra.mxu0 %v2311
        %2451 = vmatpush.bf16.msra.mxu0 %v2303
        %2452 = vmatpush.bf16.msra.mxu0 %v2295
        %2453 = vmatpush.bf16.msra.mxu0 %v2287
        %2454 = vmatmul.bf16.gmra.mxu0 %v2355
        %v2455 = vpop.f32.mrf.mxu0
        %v2456 = vadd.f32 0.0, %v2455
        %v2457 = vpop.f32.mrf.mxu0
        %2458 = vdwg.mxu0
        %2459 = vmatpush.bf16.msra.mxu0 0
        %2460 = vmatpush.bf16.msra.mxu0 0
        %2461 = vmatpush.bf16.msra.mxu0 0
        %2462 = vmatpush.bf16.msra.mxu0 %v2376
        %2463 = vmatpush.bf16.msra.mxu0 %v2312
        %2464 = vmatpush.bf16.msra.mxu0 %v2304
        %2465 = vmatpush.bf16.msra.mxu0 %v2296
        %2466 = vmatpush.bf16.msra.mxu0 %v2288
        %2467 = vmatmul.bf16.gmra.mxu0 %v2355
        %v2468 = vpop.f32.mrf.mxu0
        %v2469 = vadd.f32 0.0, %v2468
        %v2470 = vpop.f32.mrf.mxu0
        %2471 = vdwg.mxu0
        %2472 = vmatpush.bf16.msra.mxu0 0
        %2473 = vmatpush.bf16.msra.mxu0 0
        %2474 = vmatpush.bf16.msra.mxu0 0
        %2475 = vmatpush.bf16.msra.mxu0 %v2379
        %2476 = vmatpush.bf16.msra.mxu0 %v2313
        %2477 = vmatpush.bf16.msra.mxu0 %v2305
        %2478 = vmatpush.bf16.msra.mxu0 %v2297
        %2479 = vmatpush.bf16.msra.mxu0 %v2289
        %2480 = vmatmul.bf16.gmra.mxu0 %v2355
        %v2481 = vpop.f32.mrf.mxu0
        %v2482 = vadd.f32 0.0, %v2481
        %v2483 = vpop.f32.mrf.mxu0
        %2484 = vdwg.mxu0
        %v2485 = vld [vmem:[%s6] sm:$0xff]
        %2487 = vset.pattern.permute.xlu0 0
        %2488 = vperm.xlu0 %2487, %v2485
        %v2489 = vpop.permute.xlu0 %2488
        %v2491 = vmul.f32 %v2391, %v2489
        %v2492 = vmul.f32 %v2404, %v2489
        %v2493 = vmul.f32 %v2417, %v2489
        %v2494 = vmul.f32 %v2430, %v2489
        %v2495 = vmul.f32 %v2443, %v2489
        %v2496 = vmul.f32 %v2456, %v2489
        %v2497 = vmul.f32 %v2469, %v2489
        %v2498 = vmul.f32 %v2482, %v2489
        %v2499 = vld [vmem:[%s7] sm:$0xff]
        %2501 = vset.pattern.permute.xlu0 0
        %2502 = vperm.xlu0 %2501, %v2499
        %v2503 = vpop.permute.xlu0 %2502
        %v2505 = vadd.f32 %v2491, %v2503
        %v2506 = vadd.f32 %v2492, %v2503
        %v2507 = vadd.f32 %v2493, %v2503
        %v2508 = vadd.f32 %v2494, %v2503
        %v2509 = vadd.f32 %v2495, %v2503
        %v2510 = vadd.f32 %v2496, %v2503
        %v2511 = vadd.f32 %v2497, %v2503
        %v2512 = vadd.f32 %v2498, %v2503
        %v2513 = vmax.f32 %v2505, 0.0
        %v2514 = vmax.f32 %v2506, 0.0
        %v2515 = vmax.f32 %v2507, 0.0
        %v2516 = vmax.f32 %v2508, 0.0
        %v2517 = vmax.f32 %v2509, 0.0
        %v2518 = vmax.f32 %v2510, 0.0
        %v2519 = vmax.f32 %v2511, 0.0
        %v2520 = vmax.f32 %v2512, 0.0
        %2521 = vst [vmem:[%s326] sm:$0xff] %v2513
        %2522 = vst [vmem:[%s326 + $0x8] sm:$0xff] %v2514
        %s2523 = scalar_lea.vmem %s326, 16 [#allocation8]
        %2524 = vst [vmem:[%s2523] sm:$0xff] %v2515
        %2525 = vst [vmem:[%s2523 + $0x8] sm:$0xff] %v2516
        %s2526 = scalar_lea.vmem %s326, 32 [#allocation8]
        %2527 = vst [vmem:[%s2526] sm:$0xff] %v2517
        %2528 = vst [vmem:[%s2526 + $0x8] sm:$0xff] %v2518
        %s2529 = scalar_lea.vmem %s326, 48 [#allocation8]
        %2530 = vst [vmem:[%s2529] sm:$0xff] %v2519
        %2531 = vst [vmem:[%s2529 + $0x8] sm:$0xff] %v2520
        %s2532 = sand.u32 %s206, 1
        %s2533 = scalar_lea.sflag [#allocation7], %s2532
        %s2534 = sand.u32 %s206, 1
        %s2535 = smul.addr %s2534, 64
        %s2536 = scalar_lea.vmem [#allocation8], %s2535
        // Predicated region
        $region57: #{tpu_custom_call.1} parent=51 // pred_check
          %p2537 = pneg %p216
        $region58: #{tpu_custom_call.1} parent=51 // pred_check_branch
          %2539 = sbr.rel (%p2537) target = $region60
        $region59: #{tpu_custom_call.1} parent=51 // pred_region
          %s2540 = smul.u32 4, %s25
          %2542 = vsyncadd %s2533, 0
          %s2543 = smul.addr %s2540, 2
          %s2544 = smul.addr %s2543, 8
          %s2545 = scalar_lea.hbm %s8, %s2544
          %s2546 = sshll.u32 %s2536, 4
          %s2547 = int_to_ptr.vmem [resolvable:$true] %s2546
          %s2548 = sshll.u32 %s2545, 4
          %s2549 = int_to_ptr.hbm [resolvable:$true] %s2548
          %2554 = dma.vmem_to_hbm [thread:$0]  %s2547, 1024, %s2549, %s2533, 256, 256, 16
        $region60: #{tpu_custom_call.1} parent=51 // pred_fallthru
          _
      $region52: #{tpu_custom_call.1} parent=5 // pred_fallthru
        _
      %p2555 = scmp.le.s32.totalorder 2, %s20
      // Predicated region
      $region61: #{tpu_custom_call.1} parent=5 // pred_check
        %p2556 = pneg %p2555
      $region62: #{tpu_custom_call.1} parent=5 // pred_check_branch
        %2558 = sbr.rel (%p2556) target = $region64
      $region63: #{tpu_custom_call.1} parent=5 // pred_region
        %s2559 = ssub.s32 %s20, 2
        // Predicated region
        $region65: #{tpu_custom_call.1} parent=63 // pred_check
          %p2560 = pneg %p222
        $region66: #{tpu_custom_call.1} parent=63 // pred_check_branch
          %2562 = sbr.rel (%p2560) target = $region68
        $region67: #{tpu_custom_call.1} parent=63 // pred_region
          %s2563 = sand.u32 %s207, 1
          %s2564 = scalar_lea.sflag [#allocation7], %s2563
          %s2565 = sand.u32 %s207, 1
          %s2566 = smul.addr %s2565, 64
          %s2567 = scalar_lea.vmem [#allocation8], %s2566
          %2569 = dma.done %s2564, 1024
        $region68: #{tpu_custom_call.1} parent=63 // pred_fallthru
          _
      $region64: #{tpu_custom_call.1} parent=5 // pred_fallthru
        _
    $region6: #{tpu_custom_call.1} parent=1 // loop_footer
      %s24 = sadd.s32 1, %s20
    $region7: #{tpu_custom_call.1} parent=1 // loop_footer_branch
      %19 = sbr.rel target = $region3
    $region8: #{tpu_custom_call.1} parent=1 // loop_exit
      _
    %2570 = vsyncpa [#allocation6], 1
    %s2571 = scalar_lea.sflag [#allocation6], 1
    %2572 = vsyncpa %s2571, 1
    %2573 = vsyncpa [#allocation7], 1
    %s2574 = scalar_lea.sflag [#allocation7], 1
    %2575 = vsyncpa %s2574, 1

</llo_original>
